<compile_context>
chip_gen: v5e
topology: v5e:2x2
jax: 0.10.0
libtpu: 0.0.40
codegen_flags: <defaults>
</compile_context>

<pallas_src>
import math
import functools

import jax
import jax.numpy as jnp
from jax.experimental import pallas as pl
from jax.experimental.pallas import tpu as pltpu

HP = 128          # lane block width used for all padded activations


# ----------------------------- elementwise helpers -------------------------- #
def _gelu(x):
    # tanh-approximation GELU (matches the custom GELU class of the reference)
    c = math.sqrt(2.0 / math.pi)
    return 0.5 * x * (1.0 + jnp.tanh(c * (x + 0.044715 * x * x * x)))


def _sigmoid_fast(x):
    # gate sigmoid: exp on the EUP + approx reciprocal on the EUP (off the VALU path)
    return pl.reciprocal(1.0 + jnp.exp(-x), approx=True)


def _bf(x):
    return x.astype(jnp.bfloat16)


def _full_spec(shape):
    return pl.BlockSpec(shape, lambda i: (0,) * len(shape))


def _round_up(n, m):
    return ((n + m - 1) // m) * m


def _pad_axis1(x, n):
    if x.shape[1] == n:
        return x
    return jnp.pad(x, ((0, 0), (0, n - x.shape[1])))


# --------------- shared: unrolled BiGRU + (residual) + linear + mean --------- #
def _bigru_tail(gi, feat, T, B, D,
                whhf_ref, bhhf_ref, whhb_ref, bhhb_ref,
                wlf_ref, wlb_ref, bl_ref, o_ref, hof_sc, hob_sc, residual):
    """gi: [T*B, 2*GP] (rows time-major t*B+b; cols [0:GP]=fwd gates, [GP:2GP]=bwd).
    Writes the time-mean-pooled gelu(linear(...)) into o_ref ([B, HP])."""
    GP = whhf_ref.shape[1]

    def upd(gix, ghx, h):
        # PyTorch GRU gate order (r, z, n) packed contiguously at D-lane offsets.
        r = _sigmoid_fast(gix[:, 0:D] + ghx[:, 0:D])
        z = _sigmoid_fast(gix[:, D:2 * D] + ghx[:, D:2 * D])
        n = jnp.tanh(gix[:, 2 * D:3 * D] + r * ghx[:, 2 * D:3 * D])
        return (1.0 - z) * n + z * h

    h_f = jnp.zeros((B, D), jnp.float32)
    h_b = jnp.zeros((B, D), jnp.float32)
    for s in range(T):                      # static unroll: state stays in vregs
        if s == 0:
            gh_f = bhhf_ref[...]            # h0 = 0  ->  h @ W_hh == 0
            gh_b = bhhb_ref[...]
        else:
            gh_f = jnp.dot(_bf(h_f), whhf_ref[...],
                           preferred_element_type=jnp.float32) + bhhf_ref[...]
            gh_b = jnp.dot(_bf(h_b), whhb_ref[...],
                           preferred_element_type=jnp.float32) + bhhb_ref[...]
        h_f = upd(gi[s * B:(s + 1) * B, 0:GP], gh_f, h_f)
        h_b = upd(gi[(T - 1 - s) * B:(T - s) * B, GP:2 * GP], gh_b, h_b)
        hof_sc[s * B:(s + 1) * B, :] = h_f              # off the serial chain
        hob_sc[(T - 1 - s) * B:(T - s) * B, :] = h_b

    res_f = hof_sc[...]
    res_b = hob_sc[...]
    if residual:
        res_f = res_f + feat[:, 0:D]
        res_b = res_b + feat[:, D:2 * D]
    # batched epilogue linear over all timesteps + GELU
    y = _gelu(jnp.dot(_bf(res_f), wlf_ref[...], preferred_element_type=jnp.float32)
              + jnp.dot(_bf(res_b), wlb_ref[...], preferred_element_type=jnp.float32)
              + bl_ref[...])                            # [T*B, HP]
    acc = y[0:B, :]
    for t in range(1, T):                               # time mean, static slices
        acc = acc + y[t * B:(t + 1) * B, :]
    o_ref[...] = acc * (1.0 / T)


# ------------- kernel 1: audio (conv1 -> conv2 -> BiGRU -> linear -> mean) --- #
def audio_block(x, L1, L2, B, D, ksize, stride, padding, pp):
    def kernel(x_ref, w1_ref, b1_ref, w2_ref, b2_ref, wih_ref, bih_ref,
               whhf_ref, bhhf_ref, whhb_ref, bhhb_ref,
               wlf_ref, wlb_ref, bl_ref, o_ref,
               p2_sc, hof_sc, hob_sc):
        # conv1 (BN folded) + GELU : [L1*B, Kin] -> [L1*B, HP]
        h1 = _gelu(jnp.dot(_bf(x_ref[...]), w1_ref[...],
                           preferred_element_type=jnp.float32) + b1_ref[...])
        h1 = _bf(h1)
        # build conv2 patches (k taps, stride, zero padding) via static tap slices
        p2_sc[...] = jnp.zeros(p2_sc.shape, p2_sc.dtype)
        for t2 in range(L2):
            for tap in range(ksize):
                t1 = stride * t2 - padding + tap
                if 0 <= t1 < L1:
                    p2_sc[t2 * B:(t2 + 1) * B, tap * HP:(tap + 1) * HP] = \
                        h1[t1 * B:(t1 + 1) * B, :]
        # conv2 (BN folded) + GELU : feat [L2*B, HP] (channels 0:2D at lanes 0:2D)
        feat = _gelu(jnp.dot(p2_sc[...], w2_ref[...],
                             preferred_element_type=jnp.float32) + b2_ref[...])
        # hoisted GRU input projection for both directions in one dot
        gi = jnp.dot(_bf(feat), wih_ref[...],
                     preferred_element_type=jnp.float32) + bih_ref[...]
        _bigru_tail(gi, feat, L2, B, D,
                    whhf_ref, bhhf_ref, whhb_ref, bhhb_ref,
                    wlf_ref, wlb_ref, bl_ref, o_ref, hof_sc, hob_sc, residual=True)

    args = (x, pp["a_w1"], pp["a_b1"], pp["a_w2"], pp["a_b2"],
            pp["a_wih"], pp["a_bih"],
            pp["a_whhf"], pp["a_bhhf"], pp["a_whhb"], pp["a_bhhb"],
            pp["a_wlf"], pp["a_wlb"], pp["a_bl"])
    return pl.pallas_call(
        kernel,
        out_shape=jax.ShapeDtypeStruct((B, HP), jnp.float32),
        grid=(1,),
        in_specs=[_full_spec(a.shape) for a in args],
        out_specs=_full_spec((B, HP)),
        scratch_shapes=[
            pltpu.VMEM((L2 * B, ksize * HP), jnp.bfloat16),   # conv2 patch staging
            pltpu.VMEM((L2 * B, D), jnp.float32),             # forward GRU outputs
            pltpu.VMEM((L2 * B, D), jnp.float32),             # backward GRU outputs
        ],
    )(*args)


# ------------- kernel 2: vision (folded projection -> BiGRU -> linear -> mean) #
def vision_block(x, T, B, D, pp):
    def kernel(x_ref, wih_ref, bih_ref, whhf_ref, bhhf_ref, whhb_ref, bhhb_ref,
               wlf_ref, wlb_ref, bl_ref, o_ref, hof_sc, hob_sc):
        # TODO(synk): resnet18 backbone is a deterministic linear projection; it is
        # folded into the GRU input weights at pack time (exact, since it is linear).
        gi = jnp.dot(_bf(x_ref[...]), wih_ref[...],
                     preferred_element_type=jnp.float32) + bih_ref[...]
        _bigru_tail(gi, None, T, B, D,
                    whhf_ref, bhhf_ref, whhb_ref, bhhb_ref,
                    wlf_ref, wlb_ref, bl_ref, o_ref, hof_sc, hob_sc, residual=False)

    args = (x, pp["v_wih"], pp["v_bih"],
            pp["v_whhf"], pp["v_bhhf"], pp["v_whhb"], pp["v_bhhb"],
            pp["v_wlf"], pp["v_wlb"], pp["v_bl"])
    return pl.pallas_call(
        kernel,
        out_shape=jax.ShapeDtypeStruct((B, HP), jnp.float32),
        grid=(1,),
        in_specs=[_full_spec(a.shape) for a in args],
        out_specs=_full_spec((B, HP)),
        scratch_shapes=[pltpu.VMEM((T * B, D), jnp.float32),
                        pltpu.VMEM((T * B, D), jnp.float32)],
    )(*args)


# ------------- kernel 3: text linear + pool, fused linear, grouped conv, sigmoid #
def fusion_block(emb, a_pooled, v_pooled, Tt, B, pp):
    def kernel(e_ref, a_ref, v_ref, tw_ref, tb_ref, fw_ref, fb_ref,
               cw_ref, cb_ref, o_ref):
        # TODO(synk): BERT backbone replaced by a deterministic embedding lookup (768-d).
        yt = _gelu(jnp.dot(_bf(e_ref[...]), tw_ref[...],
                           preferred_element_type=jnp.float32) + tb_ref[...])
        t_pooled = yt[0:B, :]
        for t in range(1, Tt):
            t_pooled = t_pooled + yt[t * B:(t + 1) * B, :]
        t_pooled = t_pooled * (1.0 / Tt)
        # pooled modalities live at disjoint 32-lane offsets -> concat == add
        s = a_ref[...] + t_pooled + v_ref[...]
        fused = _gelu(jnp.dot(_bf(s), fw_ref[...],
                              preferred_element_type=jnp.float32) + fb_ref[...])
        # grouped 1x1 conv == one block-diagonal matmul
        logits = jnp.dot(_bf(fused), cw_ref[...],
                         preferred_element_type=jnp.float32) + cb_ref[...]
        o_ref[...] = 1.0 / (1.0 + jnp.exp(-logits))

    args = (emb, a_pooled, v_pooled, pp["t_w"], pp["t_b"],
            pp["f_w"], pp["f_b"], pp["c_w"], pp["c_b"])
    return pl.pallas_call(
        kernel,
        out_shape=jax.ShapeDtypeStruct((B, HP), jnp.float32),
        grid=(1,),
        in_specs=[_full_spec(a.shape) for a in args],
        out_specs=_full_spec((B, HP)),
    )(*args)


# ----------------------------- glue: 1-D im2col ----------------------------- #
def _im2col_1d(x, k, stride, padding):
    # x: [B, C, L] -> patches [B, L_out, C*k] (tap index fastest, torch layout)
    B, C, L = x.shape
    xp = jnp.pad(x, ((0, 0), (0, 0), (padding, padding)))
    L_out = (L + 2 * padding - k) // stride + 1
    idx = jnp.arange(L_out)[:, None] * stride + jnp.arange(k)[None, :]
    patches = xp[:, :, idx]                       # [B, C, L_out, k]
    patches = jnp.transpose(patches, (0, 2, 1, 3))
    return patches.reshape(B, L_out, C * k)


# -------------------------------- full model -------------------------------- #
def avg_modal_model(pp, audio_feature, audio_len, vision_feature,
                    text_input_ids, text_attn_mask, fusion_attn_mask,
                    extra_token_ids, *, out_dim, num_labels,
                    kernel_size, stride, padding):
    # audio_len / masks / extra_token_ids are unused in the reference forward.
    del audio_len, text_attn_mask, fusion_attn_mask, extra_token_ids
    D = out_dim
    B = audio_feature.shape[0]

    # ---------------- audio ---------------------------------------------------
    patches1 = _im2col_1d(audio_feature, kernel_size, stride, padding)   # [B,L1,68k]
    L1 = patches1.shape[1]
    L2 = (L1 + 2 * padding - kernel_size) // stride + 1
    x_a = jnp.transpose(patches1, (1, 0, 2)).reshape(L1 * B, -1)         # time-major
    x_a = _pad_axis1(x_a, pp["a_w1"].shape[0])
    audio_pooled = audio_block(x_a, L1, L2, B, D,
                               kernel_size, stride, padding, pp)         # [B, HP]

    # ---------------- vision --------------------------------------------------
    Bv, Tv = vision_feature.shape[:2]
    x_v = jnp.transpose(vision_feature.reshape(Bv, Tv, -1),
                        (1, 0, 2)).reshape(Tv * Bv, -1)                  # time-major
    x_v = _pad_axis1(x_v, pp["v_wih"].shape[0])
    vision_pooled = vision_block(x_v, Tv, Bv, D, pp)                     # [B, HP]

    # ---------------- text + fusion head --------------------------------------
    emb = pp["t_emb"][text_input_ids]                                    # [B,Tt,768]
    Tt = emb.shape[1]
    x_t = jnp.transpose(emb, (1, 0, 2)).reshape(Tt * B, -1)              # time-major
    out = fusion_block(x_t, audio_pooled, vision_pooled, Tt, B, pp)      # [B, HP]
    return out[:, :num_labels]                                           # [B, NL]


# ----------------------- parameter init (torch-like layout) ----------------- #
def init_params(key, out_dim, num_labels, kernel_size, vocab, frame_dim):
    D = out_dim
    keys = iter(jax.random.split(key, 64))

    def nrm(shape, scale=0.05):
        return scale * jax.random.normal(next(keys), shape, dtype=jnp.float32)

    def gru_params(in_dim):
        return (nrm((in_dim, 3 * D)), nrm((D, 3 * D)), nrm((3 * D,)), nrm((3 * D,)))

    p = {}
    C1, C2 = D // 2, D * 2
    p["a_conv1_w"] = nrm((C1, 68, kernel_size)); p["a_conv1_b"] = nrm((C1,))
    p["a_conv2_w"] = nrm((C2, C1, kernel_size)); p["a_conv2_b"] = nrm((C2,))
    p["a_gru_f"] = gru_params(C2); p["a_gru_b"] = gru_params(C2)
    p["a_lin_w"] = nrm((2 * D, D)); p["a_lin_b"] = nrm((D,))
    p["t_emb"] = nrm((vocab, 768))
    p["t_lin_w"] = nrm((768, D)); p["t_lin_b"] = nrm((D,))
    p["v_res_w"] = nrm((frame_dim, 1000)); p["v_res_b"] = nrm((1000,))
    p["v_gru_f"] = gru_params(1000); p["v_gru_b"] = gru_params(1000)
    p["v_lin_w"] = nrm((2 * D, D)); p["v_lin_b"] = nrm((D,))
    p["f_lin_w"] = nrm((3 * D, D * num_labels)); p["f_lin_b"] = nrm((D * num_labels,))
    p["c_w"] = nrm((num_labels, D))               # grouped Conv1d weight [NL, D, 1]
    p["c_b"] = nrm((num_labels,))
    return p


# ---------------- one-time repacking into lane-dense, bf16 kernel layout ------ #
def prepare_params(p, out_dim, num_labels, kernel_size, bn_eps=1e-5):
    D, NL, K = out_dim, num_labels, kernel_size
    C1, C2 = D // 2, 2 * D
    GP = HP                                   # tight gate block: r,z,n at D offsets
    assert 3 * D <= GP and 3 * D == p["a_gru_f"][1].shape[1]
    assert 3 * D <= HP and C2 <= HP
    bn_scale = 1.0 / math.sqrt(1.0 + bn_eps)  # eval-mode BN with init running stats
    a_off, t_off, v_off = 0, D, 2 * D         # pooled-modality lane offsets

    def bf(x):
        return x.astype(jnp.bfloat16)

    def pad_to(w, rows, cols):
        return jnp.pad(w, ((0, rows - w.shape[0]), (0, cols - w.shape[1])))

    def place_cols(w, off, ncols):
        out = jnp.zeros((w.shape[0], ncols), jnp.float32)
        return out.at[:, off:off + w.shape[1]].set(w)

    def row1(v, ncols, off=0):
        return place_cols(v.reshape(1, -1), off, ncols)

    pp = {}
    # ---- audio: conv1 [68K -> C1], conv2 [tap-major HP blocks -> C2], BN folded
    w1 = jnp.transpose(p["a_conv1_w"], (1, 2, 0)).reshape(-1, C1) * bn_scale
    pp["a_w1"] = bf(pad_to(w1, _round_up(w1.shape[0], HP), HP))
    pp["a_b1"] = row1(p["a_conv1_b"] * bn_scale, HP)
    w2 = jnp.transpose(p["a_conv2_w"], (2, 1, 0)) * bn_scale          # [K, C1, C2]
    w2 = jnp.pad(w2, ((0, 0), (0, HP - C1), (0, 0))).reshape(K * HP, C2)
    pp["a_w2"] = bf(pad_to(w2, K * HP, HP))
    pp["a_b2"] = row1(p["a_conv2_b"] * bn_scale, HP)

    def gru_dir(gru, in_pad):
        w_ih, w_hh, b_ih, b_hh = gru
        return (pad_to(w_ih, in_pad, GP), pad_to(w_hh, D, GP),
                row1(b_ih, GP), row1(b_hh, GP))

    aif, aib = gru_dir(p["a_gru_f"], HP), gru_dir(p["a_gru_b"], HP)
    pp["a_wih"] = bf(jnp.concatenate([aif[0], aib[0]], axis=1))       # [HP, 2GP]
    pp["a_bih"] = jnp.concatenate([aif[2], aib[2]], axis=1)           # [1, 2GP]
    pp["a_whhf"], pp["a_bhhf"] = bf(aif[1]), aif[3]
    pp["a_whhb"], pp["a_bhhb"] = bf(aib[1]), aib[3]
    pp["a_wlf"] = bf(place_cols(p["a_lin_w"][0:D, :], a_off, HP))
    pp["a_wlb"] = bf(place_cols(p["a_lin_w"][D:2 * D, :], a_off, HP))
    pp["a_bl"] = row1(p["a_lin_b"], HP, a_off)

    # ---- vision: fold the linear "resnet" projection into the GRU input weights
    def fold_dir(gru):
        w_ih, w_hh, b_ih, b_hh = gru                                  # w_ih [1000,3D]
        w_f = p["v_res_w"] @ w_ih                                     # [frame_dim,3D]
        b_f = p["v_res_b"] @ w_ih + b_ih
        return (pad_to(w_f, _round_up(w_f.shape[0], HP), GP), pad_to(w_hh, D, GP),
                row1(b_f, GP), row1(b_hh, GP))

    vif, vib = fold_dir(p["v_gru_f"]), fold_dir(p["v_gru_b"])
    pp["v_wih"] = bf(jnp.concatenate([vif[0], vib[0]], axis=1))       # [Fd_pad, 2GP]
    pp["v_bih"] = jnp.concatenate([vif[2], vib[2]], axis=1)
    pp["v_whhf"], pp["v_bhhf"] = bf(vif[1]), vif[3]
    pp["v_whhb"], pp["v_bhhb"] = bf(vib[1]), vib[3]
    pp["v_wlf"] = bf(place_cols(p["v_lin_w"][0:D, :], v_off, HP))
    pp["v_wlb"] = bf(place_cols(p["v_lin_w"][D:2 * D, :], v_off, HP))
    pp["v_bl"] = row1(p["v_lin_b"], HP, v_off)

    # ---- text: linear output placed at lanes [D:2D] so fusion concat == add
    pp["t_emb"] = p["t_emb"]
    pp["t_w"] = bf(place_cols(p["t_lin_w"], t_off, HP))
    pp["t_b"] = row1(p["t_lin_b"], HP, t_off)

    # ---- fusion head: natural label-group layout (160 lanes -> 256), block-diag conv
    DF = NL * D
    DFp = _round_up(DF, HP)
    pp["f_w"] = bf(pad_to(p["f_lin_w"], HP, DFp))                     # rows 0:3D used
    pp["f_b"] = row1(p["f_lin_b"], DFp)
    rows = (jnp.arange(NL)[:, None] * D + jnp.arange(D)[None, :]).reshape(-1)
    cols = jnp.repeat(jnp.arange(NL), D)
    c_bd = jnp.zeros((DFp, HP), jnp.float32).at[rows, cols].set(p["c_w"].reshape(-1))
    pp["c_w"] = bf(c_bd)
    pp["c_b"] = row1(p["c_b"], HP)
    return pp


# ------------------------------------ main ----------------------------------- #
if __name__ == "__main__":
    out_dim = 32
    num_labels = 5            # args.interview = False
    kernel_size, stride, padding = 3, 2, 1
    B = 2
    L_audio = 16
    T_text = 8
    T_vision = 4
    img = 8
    vocab = 50
    frame_dim = 3 * img * img

    key = jax.random.PRNGKey(0)
    k_par, k_a, k_v, k_t = jax.random.split(key, 4)
    params = init_params(k_par, out_dim, num_labels, kernel_size, vocab, frame_dim)
    pp = prepare_params(params, out_dim, num_labels, kernel_size)

    audio_feature = jax.random.normal(k_a, (B, 68, L_audio), dtype=jnp.float32)
    audio_len = jnp.full((B,), L_audio, dtype=jnp.int32)
    vision_feature = jax.random.normal(k_v, (B, T_vision, 3, img, img), dtype=jnp.float32)
    text_input_ids = jax.random.randint(k_t, (B, T_text), 0, vocab, dtype=jnp.int32)
    text_attn_mask = jnp.ones((B, T_text), dtype=jnp.int32)
    fusion_attn_mask = jnp.ones((B, T_text), dtype=jnp.int32)
    extra_token_ids = jnp.zeros((B, num_labels), dtype=jnp.int32)

    fwd = jax.jit(functools.partial(avg_modal_model,
                                    out_dim=out_dim, num_labels=num_labels,
                                    kernel_size=kernel_size, stride=stride,
                                    padding=padding))
    logits = fwd(pp, audio_feature, audio_len, vision_feature,
                 text_input_ids, text_attn_mask, fusion_attn_mask, extra_token_ids)
    jax.block_until_ready(logits)
    assert logits.shape == (B, num_labels)
    print("KERNEL_OK")
</pallas_src>

<mosaic_0001>
module attributes {stable_mosaic.version = 11 : i64} {
  func.func @kernel(%arg0: i32, %arg1: memref<16x256xf32, #tpu.memory_space<vmem>>, %arg2: memref<256x128xbf16, #tpu.memory_space<vmem>>, %arg3: memref<1x128xf32, #tpu.memory_space<vmem>>, %arg4: memref<384x128xbf16, #tpu.memory_space<vmem>>, %arg5: memref<1x128xf32, #tpu.memory_space<vmem>>, %arg6: memref<128x256xbf16, #tpu.memory_space<vmem>>, %arg7: memref<1x256xf32, #tpu.memory_space<vmem>>, %arg8: memref<32x128xbf16, #tpu.memory_space<vmem>>, %arg9: memref<1x128xf32, #tpu.memory_space<vmem>>, %arg10: memref<32x128xbf16, #tpu.memory_space<vmem>>, %arg11: memref<1x128xf32, #tpu.memory_space<vmem>>, %arg12: memref<32x128xbf16, #tpu.memory_space<vmem>>, %arg13: memref<32x128xbf16, #tpu.memory_space<vmem>>, %arg14: memref<1x128xf32, #tpu.memory_space<vmem>>, %arg15: memref<2x128xf32, #tpu.memory_space<vmem>>, %arg16: memref<8x384xbf16, #tpu.memory_space<vmem>>, %arg17: memref<8x32xf32, #tpu.memory_space<vmem>>, %arg18: memref<8x32xf32, #tpu.memory_space<vmem>>) attributes {dimension_semantics = [#tpu.dimension_semantics<arbitrary>], iteration_bounds = array<i64: 1>, scalar_prefetch = 0 : i64, scratch_operands = 3 : i64, tpu.core_type = #tpu.core_type<tc>, window_params = [{pipeline_mode = #tpu.pipeline_mode<synchronous>, transform_indices = @transform_0, window_bounds = array<i64: 16, 256>}, {pipeline_mode = #tpu.pipeline_mode<synchronous>, transform_indices = @transform_1, window_bounds = array<i64: 256, 128>}, {pipeline_mode = #tpu.pipeline_mode<synchronous>, transform_indices = @transform_2, window_bounds = array<i64: 1, 128>}, {pipeline_mode = #tpu.pipeline_mode<synchronous>, transform_indices = @transform_3, window_bounds = array<i64: 384, 128>}, {pipeline_mode = #tpu.pipeline_mode<synchronous>, transform_indices = @transform_4, window_bounds = array<i64: 1, 128>}, {pipeline_mode = #tpu.pipeline_mode<synchronous>, transform_indices = @transform_5, window_bounds = array<i64: 128, 256>}, {pipeline_mode = #tpu.pipeline_mode<synchronous>, transform_indices = @transform_6, window_bounds = array<i64: 1, 256>}, {pipeline_mode = #tpu.pipeline_mode<synchronous>, transform_indices = @transform_7, window_bounds = array<i64: 32, 128>}, {pipeline_mode = #tpu.pipeline_mode<synchronous>, transform_indices = @transform_8, window_bounds = array<i64: 1, 128>}, {pipeline_mode = #tpu.pipeline_mode<synchronous>, transform_indices = @transform_9, window_bounds = array<i64: 32, 128>}, {pipeline_mode = #tpu.pipeline_mode<synchronous>, transform_indices = @transform_10, window_bounds = array<i64: 1, 128>}, {pipeline_mode = #tpu.pipeline_mode<synchronous>, transform_indices = @transform_11, window_bounds = array<i64: 32, 128>}, {pipeline_mode = #tpu.pipeline_mode<synchronous>, transform_indices = @transform_12, window_bounds = array<i64: 32, 128>}, {pipeline_mode = #tpu.pipeline_mode<synchronous>, transform_indices = @transform_13, window_bounds = array<i64: 1, 128>}, {pipeline_mode = #tpu.pipeline_mode<synchronous>, transform_indices = @transform_14, window_bounds = array<i64: 2, 128>}]} {
    %c0 = arith.constant 0 : index
    %c0_0 = arith.constant 0 : index
    %0 = vector.load %arg1[%c0, %c0_0] : memref<16x256xf32, #tpu.memory_space<vmem>>, vector<16x256xf32>
    %1 = arith.truncf %0 : vector<16x256xf32> to vector<16x256xbf16>
    %c0_1 = arith.constant 0 : index
    %c0_2 = arith.constant 0 : index
    %2 = vector.load %arg2[%c0_1, %c0_2] : memref<256x128xbf16, #tpu.memory_space<vmem>>, vector<256x128xbf16>
    %cst = arith.constant dense<0.000000e+00> : vector<16x128xf32>
    %3 = tpu.matmul %1, %2, %cst {dimension_numbers = #tpu.dot_dimension_numbers<[1], [0], [0], [1], [0, 0, 1, 1], [], []>} : vector<16x256xbf16>, vector<256x128xbf16>, vector<16x128xf32> -> vector<16x128xf32>
    %c0_3 = arith.constant 0 : index
    %c0_4 = arith.constant 0 : index
    %4 = vector.load %arg3[%c0_3, %c0_4] : memref<1x128xf32, #tpu.memory_space<vmem>>, vector<1x128xf32>
    %5 = vector.broadcast %4 : vector<1x128xf32> to vector<16x128xf32>
    %6 = arith.addf %3, %5 : vector<16x128xf32>
    %cst_5 = arith.constant 5.000000e-01 : f32
    %7 = vector.broadcast %cst_5 : f32 to vector<16x128xf32>
    %8 = arith.mulf %7, %6 : vector<16x128xf32>
    %cst_6 = arith.constant 4.471500e-02 : f32
    %9 = vector.broadcast %cst_6 : f32 to vector<16x128xf32>
    %10 = arith.mulf %9, %6 : vector<16x128xf32>
    %11 = arith.mulf %10, %6 : vector<16x128xf32>
    %12 = arith.mulf %11, %6 : vector<16x128xf32>
    %13 = arith.addf %6, %12 : vector<16x128xf32>
    %cst_7 = arith.constant 0.797884583 : f32
    %14 = vector.broadcast %cst_7 : f32 to vector<16x128xf32>
    %15 = arith.mulf %14, %13 : vector<16x128xf32>
    %16 = math.tanh %15 : vector<16x128xf32>
    %cst_8 = arith.constant 1.000000e+00 : f32
    %17 = vector.broadcast %cst_8 : f32 to vector<16x128xf32>
    %18 = arith.addf %17, %16 : vector<16x128xf32>
    %19 = arith.mulf %8, %18 : vector<16x128xf32>
    %20 = arith.truncf %19 : vector<16x128xf32> to vector<16x128xbf16>
    %cst_9 = arith.constant 0.000000e+00 : bf16
    %21 = vector.broadcast %cst_9 : bf16 to vector<8x384xbf16>
    %c0_10 = arith.constant 0 : index
    %c0_11 = arith.constant 0 : index
    %22 = vector.load %arg16[%c0_10, %c0_11] : memref<8x384xbf16, #tpu.memory_space<vmem>>, vector<8x384xbf16>
    tpu.vector_store %arg16[%c0_10, %c0_11], %21 {strides = array<i32>} : memref<8x384xbf16, #tpu.memory_space<vmem>>, vector<8x384xbf16>,
    %23 = vector.extract_strided_slice %20 {offsets = [0, 0], sizes = [2, 128], strides = [1, 1]} : vector<16x128xbf16> to vector<2x128xbf16>
    %c0_12 = arith.constant 0 : index
    %c128 = arith.constant 128 : index
    %24 = vector.load %arg16[%c0_12, %c128] : memref<8x384xbf16, #tpu.memory_space<vmem>>, vector<2x128xbf16>
    tpu.vector_store %arg16[%c0_12, %c128], %23 {strides = array<i32>} : memref<8x384xbf16, #tpu.memory_space<vmem>>, vector<2x128xbf16>,
    %25 = vector.extract_strided_slice %20 {offsets = [2, 0], sizes = [2, 128], strides = [1, 1]} : vector<16x128xbf16> to vector<2x128xbf16>
    %c0_13 = arith.constant 0 : index
    %c256 = arith.constant 256 : index
    %26 = vector.load %arg16[%c0_13, %c256] : memref<8x384xbf16, #tpu.memory_space<vmem>>, vector<2x128xbf16>
    tpu.vector_store %arg16[%c0_13, %c256], %25 {strides = array<i32>} : memref<8x384xbf16, #tpu.memory_space<vmem>>, vector<2x128xbf16>,
    %27 = vector.extract_strided_slice %20 {offsets = [2, 0], sizes = [2, 128], strides = [1, 1]} : vector<16x128xbf16> to vector<2x128xbf16>
    %c2 = arith.constant 2 : index
    %c0_14 = arith.constant 0 : index
    %28 = vector.load %arg16[%c2, %c0_14] : memref<8x384xbf16, #tpu.memory_space<vmem>>, vector<2x128xbf16>
    tpu.vector_store %arg16[%c2, %c0_14], %27 {strides = array<i32>} : memref<8x384xbf16, #tpu.memory_space<vmem>>, vector<2x128xbf16>,
    %29 = vector.extract_strided_slice %20 {offsets = [4, 0], sizes = [2, 128], strides = [1, 1]} : vector<16x128xbf16> to vector<2x128xbf16>
    %c2_15 = arith.constant 2 : index
    %c128_16 = arith.constant 128 : index
    %30 = vector.load %arg16[%c2_15, %c128_16] : memref<8x384xbf16, #tpu.memory_space<vmem>>, vector<2x128xbf16>
    tpu.vector_store %arg16[%c2_15, %c128_16], %29 {strides = array<i32>} : memref<8x384xbf16, #tpu.memory_space<vmem>>, vector<2x128xbf16>,
    %31 = vector.extract_strided_slice %20 {offsets = [6, 0], sizes = [2, 128], strides = [1, 1]} : vector<16x128xbf16> to vector<2x128xbf16>
    %c2_17 = arith.constant 2 : index
    %c256_18 = arith.constant 256 : index
    %32 = vector.load %arg16[%c2_17, %c256_18] : memref<8x384xbf16, #tpu.memory_space<vmem>>, vector<2x128xbf16>
    tpu.vector_store %arg16[%c2_17, %c256_18], %31 {strides = array<i32>} : memref<8x384xbf16, #tpu.memory_space<vmem>>, vector<2x128xbf16>,
    %33 = vector.extract_strided_slice %20 {offsets = [6, 0], sizes = [2, 128], strides = [1, 1]} : vector<16x128xbf16> to vector<2x128xbf16>
    %c4 = arith.constant 4 : index
    %c0_19 = arith.constant 0 : index
    %34 = vector.load %arg16[%c4, %c0_19] : memref<8x384xbf16, #tpu.memory_space<vmem>>, vector<2x128xbf16>
    tpu.vector_store %arg16[%c4, %c0_19], %33 {strides = array<i32>} : memref<8x384xbf16, #tpu.memory_space<vmem>>, vector<2x128xbf16>,
    %35 = vector.extract_strided_slice %20 {offsets = [8, 0], sizes = [2, 128], strides = [1, 1]} : vector<16x128xbf16> to vector<2x128xbf16>
    %c4_20 = arith.constant 4 : index
    %c128_21 = arith.constant 128 : index
    %36 = vector.load %arg16[%c4_20, %c128_21] : memref<8x384xbf16, #tpu.memory_space<vmem>>, vector<2x128xbf16>
    tpu.vector_store %arg16[%c4_20, %c128_21], %35 {strides = array<i32>} : memref<8x384xbf16, #tpu.memory_space<vmem>>, vector<2x128xbf16>,
    %37 = vector.extract_strided_slice %20 {offsets = [10, 0], sizes = [2, 128], strides = [1, 1]} : vector<16x128xbf16> to vector<2x128xbf16>
    %c4_22 = arith.constant 4 : index
    %c256_23 = arith.constant 256 : index
    %38 = vector.load %arg16[%c4_22, %c256_23] : memref<8x384xbf16, #tpu.memory_space<vmem>>, vector<2x128xbf16>
    tpu.vector_store %arg16[%c4_22, %c256_23], %37 {strides = array<i32>} : memref<8x384xbf16, #tpu.memory_space<vmem>>, vector<2x128xbf16>,
    %39 = vector.extract_strided_slice %20 {offsets = [10, 0], sizes = [2, 128], strides = [1, 1]} : vector<16x128xbf16> to vector<2x128xbf16>
    %c6 = arith.constant 6 : index
    %c0_24 = arith.constant 0 : index
    %40 = vector.load %arg16[%c6, %c0_24] : memref<8x384xbf16, #tpu.memory_space<vmem>>, vector<2x128xbf16>
    tpu.vector_store %arg16[%c6, %c0_24], %39 {strides = array<i32>} : memref<8x384xbf16, #tpu.memory_space<vmem>>, vector<2x128xbf16>,
    %41 = vector.extract_strided_slice %20 {offsets = [12, 0], sizes = [2, 128], strides = [1, 1]} : vector<16x128xbf16> to vector<2x128xbf16>
    %c6_25 = arith.constant 6 : index
    %c128_26 = arith.constant 128 : index
    %42 = vector.load %arg16[%c6_25, %c128_26] : memref<8x384xbf16, #tpu.memory_space<vmem>>, vector<2x128xbf16>
    tpu.vector_store %arg16[%c6_25, %c128_26], %41 {strides = array<i32>} : memref<8x384xbf16, #tpu.memory_space<vmem>>, vector<2x128xbf16>,
    %43 = vector.extract_strided_slice %20 {offsets = [14, 0], sizes = [2, 128], strides = [1, 1]} : vector<16x128xbf16> to vector<2x128xbf16>
    %c6_27 = arith.constant 6 : index
    %c256_28 = arith.constant 256 : index
    %44 = vector.load %arg16[%c6_27, %c256_28] : memref<8x384xbf16, #tpu.memory_space<vmem>>, vector<2x128xbf16>
    tpu.vector_store %arg16[%c6_27, %c256_28], %43 {strides = array<i32>} : memref<8x384xbf16, #tpu.memory_space<vmem>>, vector<2x128xbf16>,
    %c0_29 = arith.constant 0 : index
    %c0_30 = arith.constant 0 : index
    %45 = vector.load %arg16[%c0_29, %c0_30] : memref<8x384xbf16, #tpu.memory_space<vmem>>, vector<8x384xbf16>
    %c0_31 = arith.constant 0 : index
    %c0_32 = arith.constant 0 : index
    %46 = vector.load %arg4[%c0_31, %c0_32] : memref<384x128xbf16, #tpu.memory_space<vmem>>, vector<384x128xbf16>
    %cst_33 = arith.constant dense<0.000000e+00> : vector<8x128xf32>
    %47 = tpu.matmul %45, %46, %cst_33 {dimension_numbers = #tpu.dot_dimension_numbers<[1], [0], [0], [1], [0, 0, 1, 1], [], []>} : vector<8x384xbf16>, vector<384x128xbf16>, vector<8x128xf32> -> vector<8x128xf32>
    %c0_34 = arith.constant 0 : index
    %c0_35 = arith.constant 0 : index
    %48 = vector.load %arg5[%c0_34, %c0_35] : memref<1x128xf32, #tpu.memory_space<vmem>>, vector<1x128xf32>
    %49 = vector.broadcast %48 : vector<1x128xf32> to vector<8x128xf32>
    %50 = arith.addf %47, %49 : vector<8x128xf32>
    %cst_36 = arith.constant 5.000000e-01 : f32
    %51 = vector.broadcast %cst_36 : f32 to vector<8x128xf32>
    %52 = arith.mulf %51, %50 : vector<8x128xf32>
    %cst_37 = arith.constant 4.471500e-02 : f32
    %53 = vector.broadcast %cst_37 : f32 to vector<8x128xf32>
    %54 = arith.mulf %53, %50 : vector<8x128xf32>
    %55 = arith.mulf %54, %50 : vector<8x128xf32>
    %56 = arith.mulf %55, %50 : vector<8x128xf32>
    %57 = arith.addf %50, %56 : vector<8x128xf32>
    %cst_38 = arith.constant 0.797884583 : f32
    %58 = vector.broadcast %cst_38 : f32 to vector<8x128xf32>
    %59 = arith.mulf %58, %57 : vector<8x128xf32>
    %60 = math.tanh %59 : vector<8x128xf32>
    %cst_39 = arith.constant 1.000000e+00 : f32
    %61 = vector.broadcast %cst_39 : f32 to vector<8x128xf32>
    %62 = arith.addf %61, %60 : vector<8x128xf32>
    %63 = arith.mulf %52, %62 : vector<8x128xf32>
    %64 = arith.truncf %63 : vector<8x128xf32> to vector<8x128xbf16>
    %c0_40 = arith.constant 0 : index
    %c0_41 = arith.constant 0 : index
    %65 = vector.load %arg6[%c0_40, %c0_41] : memref<128x256xbf16, #tpu.memory_space<vmem>>, vector<128x256xbf16>
    %cst_42 = arith.constant dense<0.000000e+00> : vector<8x256xf32>
    %66 = tpu.matmul %64, %65, %cst_42 {dimension_numbers = #tpu.dot_dimension_numbers<[1], [0], [0], [1], [0, 0, 1, 1], [], []>} : vector<8x128xbf16>, vector<128x256xbf16>, vector<8x256xf32> -> vector<8x256xf32>
    %c0_43 = arith.constant 0 : index
    %c0_44 = arith.constant 0 : index
    %67 = vector.load %arg7[%c0_43, %c0_44] : memref<1x256xf32, #tpu.memory_space<vmem>>, vector<1x256xf32>
    %68 = vector.broadcast %67 : vector<1x256xf32> to vector<8x256xf32>
    %69 = arith.addf %66, %68 : vector<8x256xf32>
    %cst_45 = arith.constant 0.000000e+00 : f32
    %70 = vector.broadcast %cst_45 : f32 to vector<2x32xf32>
    %cst_46 = arith.constant 0.000000e+00 : f32
    %71 = vector.broadcast %cst_46 : f32 to vector<2x32xf32>
    %c0_47 = arith.constant 0 : index
    %c0_48 = arith.constant 0 : index
    %72 = vector.load %arg9[%c0_47, %c0_48] : memref<1x128xf32, #tpu.memory_space<vmem>>, vector<1x128xf32>
    %c0_49 = arith.constant 0 : index
    %c0_50 = arith.constant 0 : index
    %73 = vector.load %arg11[%c0_49, %c0_50] : memref<1x128xf32, #tpu.memory_space<vmem>>, vector<1x128xf32>
    %74 = vector.extract_strided_slice %69 {offsets = [0, 0], sizes = [2, 128], strides = [1, 1]} : vector<8x256xf32> to vector<2x128xf32>
    %75 = vector.extract_strided_slice %74 {offsets = [0, 0], sizes = [2, 32], strides = [1, 1]} : vector<2x128xf32> to vector<2x32xf32>
    %76 = vector.extract_strided_slice %72 {offsets = [0, 0], sizes = [1, 32], strides = [1, 1]} : vector<1x128xf32> to vector<1x32xf32>
    %77 = vector.broadcast %76 : vector<1x32xf32> to vector<2x32xf32>
    %78 = arith.addf %75, %77 : vector<2x32xf32>
    %cst_51 = arith.constant 0.000000e+00 : f32
    %79 = vector.broadcast %cst_51 : f32 to vector<2x32xf32>
    %80 = arith.subf %79, %78 : vector<2x32xf32>
    %81 = math.exp %80 : vector<2x32xf32>
    %cst_52 = arith.constant 1.000000e+00 : f32
    %82 = vector.broadcast %cst_52 : f32 to vector<2x32xf32>
    %83 = arith.addf %82, %81 : vector<2x32xf32>
    %84 = tpu.reciprocal %83 {approx = true} : vector<2x32xf32> -> vector<2x32xf32>
    %85 = vector.extract_strided_slice %74 {offsets = [0, 32], sizes = [2, 32], strides = [1, 1]} : vector<2x128xf32> to vector<2x32xf32>
    %86 = vector.extract_strided_slice %72 {offsets = [0, 32], sizes = [1, 32], strides = [1, 1]} : vector<1x128xf32> to vector<1x32xf32>
    %87 = vector.broadcast %86 : vector<1x32xf32> to vector<2x32xf32>
    %88 = arith.addf %85, %87 : vector<2x32xf32>
    %cst_53 = arith.constant 0.000000e+00 : f32
    %89 = vector.broadcast %cst_53 : f32 to vector<2x32xf32>
    %90 = arith.subf %89, %88 : vector<2x32xf32>
    %91 = math.exp %90 : vector<2x32xf32>
    %cst_54 = arith.constant 1.000000e+00 : f32
    %92 = vector.broadcast %cst_54 : f32 to vector<2x32xf32>
    %93 = arith.addf %92, %91 : vector<2x32xf32>
    %94 = tpu.reciprocal %93 {approx = true} : vector<2x32xf32> -> vector<2x32xf32>
    %95 = vector.extract_strided_slice %74 {offsets = [0, 64], sizes = [2, 32], strides = [1, 1]} : vector<2x128xf32> to vector<2x32xf32>
    %96 = vector.extract_strided_slice %72 {offsets = [0, 64], sizes = [1, 32], strides = [1, 1]} : vector<1x128xf32> to vector<1x32xf32>
    %97 = vector.broadcast %96 : vector<1x32xf32> to vector<2x32xf32>
    %98 = arith.mulf %84, %97 : vector<2x32xf32>
    %99 = arith.addf %95, %98 : vector<2x32xf32>
    %100 = math.tanh %99 : vector<2x32xf32>
    %cst_55 = arith.constant 1.000000e+00 : f32
    %101 = vector.broadcast %cst_55 : f32 to vector<2x32xf32>
    %102 = arith.subf %101, %94 : vector<2x32xf32>
    %103 = arith.mulf %102, %100 : vector<2x32xf32>
    %104 = arith.mulf %94, %70 : vector<2x32xf32>
    %105 = arith.addf %103, %104 : vector<2x32xf32>
    %106 = vector.extract_strided_slice %69 {offsets = [6, 128], sizes = [2, 128], strides = [1, 1]} : vector<8x256xf32> to vector<2x128xf32>
    %107 = vector.extract_strided_slice %106 {offsets = [0, 0], sizes = [2, 32], strides = [1, 1]} : vector<2x128xf32> to vector<2x32xf32>
    %108 = vector.extract_strided_slice %73 {offsets = [0, 0], sizes = [1, 32], strides = [1, 1]} : vector<1x128xf32> to vector<1x32xf32>
    %109 = vector.broadcast %108 : vector<1x32xf32> to vector<2x32xf32>
    %110 = arith.addf %107, %109 : vector<2x32xf32>
    %cst_56 = arith.constant 0.000000e+00 : f32
    %111 = vector.broadcast %cst_56 : f32 to vector<2x32xf32>
    %112 = arith.subf %111, %110 : vector<2x32xf32>
    %113 = math.exp %112 : vector<2x32xf32>
    %cst_57 = arith.constant 1.000000e+00 : f32
    %114 = vector.broadcast %cst_57 : f32 to vector<2x32xf32>
    %115 = arith.addf %114, %113 : vector<2x32xf32>
    %116 = tpu.reciprocal %115 {approx = true} : vector<2x32xf32> -> vector<2x32xf32>
    %117 = vector.extract_strided_slice %106 {offsets = [0, 32], sizes = [2, 32], strides = [1, 1]} : vector<2x128xf32> to vector<2x32xf32>
    %118 = vector.extract_strided_slice %73 {offsets = [0, 32], sizes = [1, 32], strides = [1, 1]} : vector<1x128xf32> to vector<1x32xf32>
    %119 = vector.broadcast %118 : vector<1x32xf32> to vector<2x32xf32>
    %120 = arith.addf %117, %119 : vector<2x32xf32>
    %cst_58 = arith.constant 0.000000e+00 : f32
    %121 = vector.broadcast %cst_58 : f32 to vector<2x32xf32>
    %122 = arith.subf %121, %120 : vector<2x32xf32>
    %123 = math.exp %122 : vector<2x32xf32>
    %cst_59 = arith.constant 1.000000e+00 : f32
    %124 = vector.broadcast %cst_59 : f32 to vector<2x32xf32>
    %125 = arith.addf %124, %123 : vector<2x32xf32>
    %126 = tpu.reciprocal %125 {approx = true} : vector<2x32xf32> -> vector<2x32xf32>
    %127 = vector.extract_strided_slice %106 {offsets = [0, 64], sizes = [2, 32], strides = [1, 1]} : vector<2x128xf32> to vector<2x32xf32>
    %128 = vector.extract_strided_slice %73 {offsets = [0, 64], sizes = [1, 32], strides = [1, 1]} : vector<1x128xf32> to vector<1x32xf32>
    %129 = vector.broadcast %128 : vector<1x32xf32> to vector<2x32xf32>
    %130 = arith.mulf %116, %129 : vector<2x32xf32>
    %131 = arith.addf %127, %130 : vector<2x32xf32>
    %132 = math.tanh %131 : vector<2x32xf32>
    %cst_60 = arith.constant 1.000000e+00 : f32
    %133 = vector.broadcast %cst_60 : f32 to vector<2x32xf32>
    %134 = arith.subf %133, %126 : vector<2x32xf32>
    %135 = arith.mulf %134, %132 : vector<2x32xf32>
    %136 = arith.mulf %126, %71 : vector<2x32xf32>
    %137 = arith.addf %135, %136 : vector<2x32xf32>
    %c0_61 = arith.constant 0 : index
    %c0_62 = arith.constant 0 : index
    %138 = vector.load %arg17[%c0_61, %c0_62] : memref<8x32xf32, #tpu.memory_space<vmem>>, vector<2x32xf32>
    tpu.vector_store %arg17[%c0_61, %c0_62], %105 {strides = array<i32>} : memref<8x32xf32, #tpu.memory_space<vmem>>, vector<2x32xf32>,
    %c6_63 = arith.constant 6 : index
    %c0_64 = arith.constant 0 : index
    %139 = vector.load %arg18[%c6_63, %c0_64] : memref<8x32xf32, #tpu.memory_space<vmem>>, vector<2x32xf32>
    tpu.vector_store %arg18[%c6_63, %c0_64], %137 {strides = array<i32>} : memref<8x32xf32, #tpu.memory_space<vmem>>, vector<2x32xf32>,
    %140 = arith.truncf %105 : vector<2x32xf32> to vector<2x32xbf16>
    %c0_65 = arith.constant 0 : index
    %c0_66 = arith.constant 0 : index
    %141 = vector.load %arg8[%c0_65, %c0_66] : memref<32x128xbf16, #tpu.memory_space<vmem>>, vector<32x128xbf16>
    %cst_67 = arith.constant dense<0.000000e+00> : vector<2x128xf32>
    %142 = tpu.matmul %140, %141, %cst_67 {dimension_numbers = #tpu.dot_dimension_numbers<[1], [0], [0], [1], [0, 0, 1, 1], [], []>} : vector<2x32xbf16>, vector<32x128xbf16>, vector<2x128xf32> -> vector<2x128xf32>
    %c0_68 = arith.constant 0 : index
    %c0_69 = arith.constant 0 : index
    %143 = vector.load %arg9[%c0_68, %c0_69] : memref<1x128xf32, #tpu.memory_space<vmem>>, vector<1x128xf32>
    %144 = vector.broadcast %143 : vector<1x128xf32> to vector<2x128xf32>
    %145 = arith.addf %142, %144 : vector<2x128xf32>
    %146 = arith.truncf %137 : vector<2x32xf32> to vector<2x32xbf16>
    %c0_70 = arith.constant 0 : index
    %c0_71 = arith.constant 0 : index
    %147 = vector.load %arg10[%c0_70, %c0_71] : memref<32x128xbf16, #tpu.memory_space<vmem>>, vector<32x128xbf16>
    %cst_72 = arith.constant dense<0.000000e+00> : vector<2x128xf32>
    %148 = tpu.matmul %146, %147, %cst_72 {dimension_numbers = #tpu.dot_dimension_numbers<[1], [0], [0], [1], [0, 0, 1, 1], [], []>} : vector<2x32xbf16>, vector<32x128xbf16>, vector<2x128xf32> -> vector<2x128xf32>
    %c0_73 = arith.constant 0 : index
    %c0_74 = arith.constant 0 : index
    %149 = vector.load %arg11[%c0_73, %c0_74] : memref<1x128xf32, #tpu.memory_space<vmem>>, vector<1x128xf32>
    %150 = vector.broadcast %149 : vector<1x128xf32> to vector<2x128xf32>
    %151 = arith.addf %148, %150 : vector<2x128xf32>
    %152 = vector.extract_strided_slice %69 {offsets = [2, 0], sizes = [2, 128], strides = [1, 1]} : vector<8x256xf32> to vector<2x128xf32>
    %153 = vector.extract_strided_slice %152 {offsets = [0, 0], sizes = [2, 32], strides = [1, 1]} : vector<2x128xf32> to vector<2x32xf32>
    %154 = vector.extract_strided_slice %145 {offsets = [0, 0], sizes = [2, 32], strides = [1, 1]} : vector<2x128xf32> to vector<2x32xf32>
    %155 = arith.addf %153, %154 : vector<2x32xf32>
    %cst_75 = arith.constant 0.000000e+00 : f32
    %156 = vector.broadcast %cst_75 : f32 to vector<2x32xf32>
    %157 = arith.subf %156, %155 : vector<2x32xf32>
    %158 = math.exp %157 : vector<2x32xf32>
    %cst_76 = arith.constant 1.000000e+00 : f32
    %159 = vector.broadcast %cst_76 : f32 to vector<2x32xf32>
    %160 = arith.addf %159, %158 : vector<2x32xf32>
    %161 = tpu.reciprocal %160 {approx = true} : vector<2x32xf32> -> vector<2x32xf32>
    %162 = vector.extract_strided_slice %152 {offsets = [0, 32], sizes = [2, 32], strides = [1, 1]} : vector<2x128xf32> to vector<2x32xf32>
    %163 = vector.extract_strided_slice %145 {offsets = [0, 32], sizes = [2, 32], strides = [1, 1]} : vector<2x128xf32> to vector<2x32xf32>
    %164 = arith.addf %162, %163 : vector<2x32xf32>
    %cst_77 = arith.constant 0.000000e+00 : f32
    %165 = vector.broadcast %cst_77 : f32 to vector<2x32xf32>
    %166 = arith.subf %165, %164 : vector<2x32xf32>
    %167 = math.exp %166 : vector<2x32xf32>
    %cst_78 = arith.constant 1.000000e+00 : f32
    %168 = vector.broadcast %cst_78 : f32 to vector<2x32xf32>
    %169 = arith.addf %168, %167 : vector<2x32xf32>
    %170 = tpu.reciprocal %169 {approx = true} : vector<2x32xf32> -> vector<2x32xf32>
    %171 = vector.extract_strided_slice %152 {offsets = [0, 64], sizes = [2, 32], strides = [1, 1]} : vector<2x128xf32> to vector<2x32xf32>
    %172 = vector.extract_strided_slice %145 {offsets = [0, 64], sizes = [2, 32], strides = [1, 1]} : vector<2x128xf32> to vector<2x32xf32>
    %173 = arith.mulf %161, %172 : vector<2x32xf32>
    %174 = arith.addf %171, %173 : vector<2x32xf32>
    %175 = math.tanh %174 : vector<2x32xf32>
    %cst_79 = arith.constant 1.000000e+00 : f32
    %176 = vector.broadcast %cst_79 : f32 to vector<2x32xf32>
    %177 = arith.subf %176, %170 : vector<2x32xf32>
    %178 = arith.mulf %177, %175 : vector<2x32xf32>
    %179 = arith.mulf %170, %105 : vector<2x32xf32>
    %180 = arith.addf %178, %179 : vector<2x32xf32>
    %181 = vector.extract_strided_slice %69 {offsets = [4, 128], sizes = [2, 128], strides = [1, 1]} : vector<8x256xf32> to vector<2x128xf32>
    %182 = vector.extract_strided_slice %181 {offsets = [0, 0], sizes = [2, 32], strides = [1, 1]} : vector<2x128xf32> to vector<2x32xf32>
    %183 = vector.extract_strided_slice %151 {offsets = [0, 0], sizes = [2, 32], strides = [1, 1]} : vector<2x128xf32> to vector<2x32xf32>
    %184 = arith.addf %182, %183 : vector<2x32xf32>
    %cst_80 = arith.constant 0.000000e+00 : f32
    %185 = vector.broadcast %cst_80 : f32 to vector<2x32xf32>
    %186 = arith.subf %185, %184 : vector<2x32xf32>
    %187 = math.exp %186 : vector<2x32xf32>
    %cst_81 = arith.constant 1.000000e+00 : f32
    %188 = vector.broadcast %cst_81 : f32 to vector<2x32xf32>
    %189 = arith.addf %188, %187 : vector<2x32xf32>
    %190 = tpu.reciprocal %189 {approx = true} : vector<2x32xf32> -> vector<2x32xf32>
    %191 = vector.extract_strided_slice %181 {offsets = [0, 32], sizes = [2, 32], strides = [1, 1]} : vector<2x128xf32> to vector<2x32xf32>
    %192 = vector.extract_strided_slice %151 {offsets = [0, 32], sizes = [2, 32], strides = [1, 1]} : vector<2x128xf32> to vector<2x32xf32>
    %193 = arith.addf %191, %192 : vector<2x32xf32>
    %cst_82 = arith.constant 0.000000e+00 : f32
    %194 = vector.broadcast %cst_82 : f32 to vector<2x32xf32>
    %195 = arith.subf %194, %193 : vector<2x32xf32>
    %196 = math.exp %195 : vector<2x32xf32>
    %cst_83 = arith.constant 1.000000e+00 : f32
    %197 = vector.broadcast %cst_83 : f32 to vector<2x32xf32>
    %198 = arith.addf %197, %196 : vector<2x32xf32>
    %199 = tpu.reciprocal %198 {approx = true} : vector<2x32xf32> -> vector<2x32xf32>
    %200 = vector.extract_strided_slice %181 {offsets = [0, 64], sizes = [2, 32], strides = [1, 1]} : vector<2x128xf32> to vector<2x32xf32>
    %201 = vector.extract_strided_slice %151 {offsets = [0, 64], sizes = [2, 32], strides = [1, 1]} : vector<2x128xf32> to vector<2x32xf32>
    %202 = arith.mulf %190, %201 : vector<2x32xf32>
    %203 = arith.addf %200, %202 : vector<2x32xf32>
    %204 = math.tanh %203 : vector<2x32xf32>
    %cst_84 = arith.constant 1.000000e+00 : f32
    %205 = vector.broadcast %cst_84 : f32 to vector<2x32xf32>
    %206 = arith.subf %205, %199 : vector<2x32xf32>
    %207 = arith.mulf %206, %204 : vector<2x32xf32>
    %208 = arith.mulf %199, %137 : vector<2x32xf32>
    %209 = arith.addf %207, %208 : vector<2x32xf32>
    %c2_85 = arith.constant 2 : index
    %c0_86 = arith.constant 0 : index
    %210 = vector.load %arg17[%c2_85, %c0_86] : memref<8x32xf32, #tpu.memory_space<vmem>>, vector<2x32xf32>
    tpu.vector_store %arg17[%c2_85, %c0_86], %180 {strides = array<i32>} : memref<8x32xf32, #tpu.memory_space<vmem>>, vector<2x32xf32>,
    %c4_87 = arith.constant 4 : index
    %c0_88 = arith.constant 0 : index
    %211 = vector.load %arg18[%c4_87, %c0_88] : memref<8x32xf32, #tpu.memory_space<vmem>>, vector<2x32xf32>
    tpu.vector_store %arg18[%c4_87, %c0_88], %209 {strides = array<i32>} : memref<8x32xf32, #tpu.memory_space<vmem>>, vector<2x32xf32>,
    %212 = arith.truncf %180 : vector<2x32xf32> to vector<2x32xbf16>
    %c0_89 = arith.constant 0 : index
    %c0_90 = arith.constant 0 : index
    %213 = vector.load %arg8[%c0_89, %c0_90] : memref<32x128xbf16, #tpu.memory_space<vmem>>, vector<32x128xbf16>
    %cst_91 = arith.constant dense<0.000000e+00> : vector<2x128xf32>
    %214 = tpu.matmul %212, %213, %cst_91 {dimension_numbers = #tpu.dot_dimension_numbers<[1], [0], [0], [1], [0, 0, 1, 1], [], []>} : vector<2x32xbf16>, vector<32x128xbf16>, vector<2x128xf32> -> vector<2x128xf32>
    %c0_92 = arith.constant 0 : index
    %c0_93 = arith.constant 0 : index
    %215 = vector.load %arg9[%c0_92, %c0_93] : memref<1x128xf32, #tpu.memory_space<vmem>>, vector<1x128xf32>
    %216 = vector.broadcast %215 : vector<1x128xf32> to vector<2x128xf32>
    %217 = arith.addf %214, %216 : vector<2x128xf32>
    %218 = arith.truncf %209 : vector<2x32xf32> to vector<2x32xbf16>
    %c0_94 = arith.constant 0 : index
    %c0_95 = arith.constant 0 : index
    %219 = vector.load %arg10[%c0_94, %c0_95] : memref<32x128xbf16, #tpu.memory_space<vmem>>, vector<32x128xbf16>
    %cst_96 = arith.constant dense<0.000000e+00> : vector<2x128xf32>
    %220 = tpu.matmul %218, %219, %cst_96 {dimension_numbers = #tpu.dot_dimension_numbers<[1], [0], [0], [1], [0, 0, 1, 1], [], []>} : vector<2x32xbf16>, vector<32x128xbf16>, vector<2x128xf32> -> vector<2x128xf32>
    %c0_97 = arith.constant 0 : index
    %c0_98 = arith.constant 0 : index
    %221 = vector.load %arg11[%c0_97, %c0_98] : memref<1x128xf32, #tpu.memory_space<vmem>>, vector<1x128xf32>
    %222 = vector.broadcast %221 : vector<1x128xf32> to vector<2x128xf32>
    %223 = arith.addf %220, %222 : vector<2x128xf32>
    %224 = vector.extract_strided_slice %69 {offsets = [4, 0], sizes = [2, 128], strides = [1, 1]} : vector<8x256xf32> to vector<2x128xf32>
    %225 = vector.extract_strided_slice %224 {offsets = [0, 0], sizes = [2, 32], strides = [1, 1]} : vector<2x128xf32> to vector<2x32xf32>
    %226 = vector.extract_strided_slice %217 {offsets = [0, 0], sizes = [2, 32], strides = [1, 1]} : vector<2x128xf32> to vector<2x32xf32>
    %227 = arith.addf %225, %226 : vector<2x32xf32>
    %cst_99 = arith.constant 0.000000e+00 : f32
    %228 = vector.broadcast %cst_99 : f32 to vector<2x32xf32>
    %229 = arith.subf %228, %227 : vector<2x32xf32>
    %230 = math.exp %229 : vector<2x32xf32>
    %cst_100 = arith.constant 1.000000e+00 : f32
    %231 = vector.broadcast %cst_100 : f32 to vector<2x32xf32>
    %232 = arith.addf %231, %230 : vector<2x32xf32>
    %233 = tpu.reciprocal %232 {approx = true} : vector<2x32xf32> -> vector<2x32xf32>
    %234 = vector.extract_strided_slice %224 {offsets = [0, 32], sizes = [2, 32], strides = [1, 1]} : vector<2x128xf32> to vector<2x32xf32>
    %235 = vector.extract_strided_slice %217 {offsets = [0, 32], sizes = [2, 32], strides = [1, 1]} : vector<2x128xf32> to vector<2x32xf32>
    %236 = arith.addf %234, %235 : vector<2x32xf32>
    %cst_101 = arith.constant 0.000000e+00 : f32
    %237 = vector.broadcast %cst_101 : f32 to vector<2x32xf32>
    %238 = arith.subf %237, %236 : vector<2x32xf32>
    %239 = math.exp %238 : vector<2x32xf32>
    %cst_102 = arith.constant 1.000000e+00 : f32
    %240 = vector.broadcast %cst_102 : f32 to vector<2x32xf32>
    %241 = arith.addf %240, %239 : vector<2x32xf32>
    %242 = tpu.reciprocal %241 {approx = true} : vector<2x32xf32> -> vector<2x32xf32>
    %243 = vector.extract_strided_slice %224 {offsets = [0, 64], sizes = [2, 32], strides = [1, 1]} : vector<2x128xf32> to vector<2x32xf32>
    %244 = vector.extract_strided_slice %217 {offsets = [0, 64], sizes = [2, 32], strides = [1, 1]} : vector<2x128xf32> to vector<2x32xf32>
    %245 = arith.mulf %233, %244 : vector<2x32xf32>
    %246 = arith.addf %243, %245 : vector<2x32xf32>
    %247 = math.tanh %246 : vector<2x32xf32>
    %cst_103 = arith.constant 1.000000e+00 : f32
    %248 = vector.broadcast %cst_103 : f32 to vector<2x32xf32>
    %249 = arith.subf %248, %242 : vector<2x32xf32>
    %250 = arith.mulf %249, %247 : vector<2x32xf32>
    %251 = arith.mulf %242, %180 : vector<2x32xf32>
    %252 = arith.addf %250, %251 : vector<2x32xf32>
    %253 = vector.extract_strided_slice %69 {offsets = [2, 128], sizes = [2, 128], strides = [1, 1]} : vector<8x256xf32> to vector<2x128xf32>
    %254 = vector.extract_strided_slice %253 {offsets = [0, 0], sizes = [2, 32], strides = [1, 1]} : vector<2x128xf32> to vector<2x32xf32>
    %255 = vector.extract_strided_slice %223 {offsets = [0, 0], sizes = [2, 32], strides = [1, 1]} : vector<2x128xf32> to vector<2x32xf32>
    %256 = arith.addf %254, %255 : vector<2x32xf32>
    %cst_104 = arith.constant 0.000000e+00 : f32
    %257 = vector.broadcast %cst_104 : f32 to vector<2x32xf32>
    %258 = arith.subf %257, %256 : vector<2x32xf32>
    %259 = math.exp %258 : vector<2x32xf32>
    %cst_105 = arith.constant 1.000000e+00 : f32
    %260 = vector.broadcast %cst_105 : f32 to vector<2x32xf32>
    %261 = arith.addf %260, %259 : vector<2x32xf32>
    %262 = tpu.reciprocal %261 {approx = true} : vector<2x32xf32> -> vector<2x32xf32>
    %263 = vector.extract_strided_slice %253 {offsets = [0, 32], sizes = [2, 32], strides = [1, 1]} : vector<2x128xf32> to vector<2x32xf32>
    %264 = vector.extract_strided_slice %223 {offsets = [0, 32], sizes = [2, 32], strides = [1, 1]} : vector<2x128xf32> to vector<2x32xf32>
    %265 = arith.addf %263, %264 : vector<2x32xf32>
    %cst_106 = arith.constant 0.000000e+00 : f32
    %266 = vector.broadcast %cst_106 : f32 to vector<2x32xf32>
    %267 = arith.subf %266, %265 : vector<2x32xf32>
    %268 = math.exp %267 : vector<2x32xf32>
    %cst_107 = arith.constant 1.000000e+00 : f32
    %269 = vector.broadcast %cst_107 : f32 to vector<2x32xf32>
    %270 = arith.addf %269, %268 : vector<2x32xf32>
    %271 = tpu.reciprocal %270 {approx = true} : vector<2x32xf32> -> vector<2x32xf32>
    %272 = vector.extract_strided_slice %253 {offsets = [0, 64], sizes = [2, 32], strides = [1, 1]} : vector<2x128xf32> to vector<2x32xf32>
    %273 = vector.extract_strided_slice %223 {offsets = [0, 64], sizes = [2, 32], strides = [1, 1]} : vector<2x128xf32> to vector<2x32xf32>
    %274 = arith.mulf %262, %273 : vector<2x32xf32>
    %275 = arith.addf %272, %274 : vector<2x32xf32>
    %276 = math.tanh %275 : vector<2x32xf32>
    %cst_108 = arith.constant 1.000000e+00 : f32
    %277 = vector.broadcast %cst_108 : f32 to vector<2x32xf32>
    %278 = arith.subf %277, %271 : vector<2x32xf32>
    %279 = arith.mulf %278, %276 : vector<2x32xf32>
    %280 = arith.mulf %271, %209 : vector<2x32xf32>
    %281 = arith.addf %279, %280 : vector<2x32xf32>
    %c4_109 = arith.constant 4 : index
    %c0_110 = arith.constant 0 : index
    %282 = vector.load %arg17[%c4_109, %c0_110] : memref<8x32xf32, #tpu.memory_space<vmem>>, vector<2x32xf32>
    tpu.vector_store %arg17[%c4_109, %c0_110], %252 {strides = array<i32>} : memref<8x32xf32, #tpu.memory_space<vmem>>, vector<2x32xf32>,
    %c2_111 = arith.constant 2 : index
    %c0_112 = arith.constant 0 : index
    %283 = vector.load %arg18[%c2_111, %c0_112] : memref<8x32xf32, #tpu.memory_space<vmem>>, vector<2x32xf32>
    tpu.vector_store %arg18[%c2_111, %c0_112], %281 {strides = array<i32>} : memref<8x32xf32, #tpu.memory_space<vmem>>, vector<2x32xf32>,
    %284 = arith.truncf %252 : vector<2x32xf32> to vector<2x32xbf16>
    %c0_113 = arith.constant 0 : index
    %c0_114 = arith.constant 0 : index
    %285 = vector.load %arg8[%c0_113, %c0_114] : memref<32x128xbf16, #tpu.memory_space<vmem>>, vector<32x128xbf16>
    %cst_115 = arith.constant dense<0.000000e+00> : vector<2x128xf32>
    %286 = tpu.matmul %284, %285, %cst_115 {dimension_numbers = #tpu.dot_dimension_numbers<[1], [0], [0], [1], [0, 0, 1, 1], [], []>} : vector<2x32xbf16>, vector<32x128xbf16>, vector<2x128xf32> -> vector<2x128xf32>
    %c0_116 = arith.constant 0 : index
    %c0_117 = arith.constant 0 : index
    %287 = vector.load %arg9[%c0_116, %c0_117] : memref<1x128xf32, #tpu.memory_space<vmem>>, vector<1x128xf32>
    %288 = vector.broadcast %287 : vector<1x128xf32> to vector<2x128xf32>
    %289 = arith.addf %286, %288 : vector<2x128xf32>
    %290 = arith.truncf %281 : vector<2x32xf32> to vector<2x32xbf16>
    %c0_118 = arith.constant 0 : index
    %c0_119 = arith.constant 0 : index
    %291 = vector.load %arg10[%c0_118, %c0_119] : memref<32x128xbf16, #tpu.memory_space<vmem>>, vector<32x128xbf16>
    %cst_120 = arith.constant dense<0.000000e+00> : vector<2x128xf32>
    %292 = tpu.matmul %290, %291, %cst_120 {dimension_numbers = #tpu.dot_dimension_numbers<[1], [0], [0], [1], [0, 0, 1, 1], [], []>} : vector<2x32xbf16>, vector<32x128xbf16>, vector<2x128xf32> -> vector<2x128xf32>
    %c0_121 = arith.constant 0 : index
    %c0_122 = arith.constant 0 : index
    %293 = vector.load %arg11[%c0_121, %c0_122] : memref<1x128xf32, #tpu.memory_space<vmem>>, vector<1x128xf32>
    %294 = vector.broadcast %293 : vector<1x128xf32> to vector<2x128xf32>
    %295 = arith.addf %292, %294 : vector<2x128xf32>
    %296 = vector.extract_strided_slice %69 {offsets = [6, 0], sizes = [2, 128], strides = [1, 1]} : vector<8x256xf32> to vector<2x128xf32>
    %297 = vector.extract_strided_slice %296 {offsets = [0, 0], sizes = [2, 32], strides = [1, 1]} : vector<2x128xf32> to vector<2x32xf32>
    %298 = vector.extract_strided_slice %289 {offsets = [0, 0], sizes = [2, 32], strides = [1, 1]} : vector<2x128xf32> to vector<2x32xf32>
    %299 = arith.addf %297, %298 : vector<2x32xf32>
    %cst_123 = arith.constant 0.000000e+00 : f32
    %300 = vector.broadcast %cst_123 : f32 to vector<2x32xf32>
    %301 = arith.subf %300, %299 : vector<2x32xf32>
    %302 = math.exp %301 : vector<2x32xf32>
    %cst_124 = arith.constant 1.000000e+00 : f32
    %303 = vector.broadcast %cst_124 : f32 to vector<2x32xf32>
    %304 = arith.addf %303, %302 : vector<2x32xf32>
    %305 = tpu.reciprocal %304 {approx = true} : vector<2x32xf32> -> vector<2x32xf32>
    %306 = vector.extract_strided_slice %296 {offsets = [0, 32], sizes = [2, 32], strides = [1, 1]} : vector<2x128xf32> to vector<2x32xf32>
    %307 = vector.extract_strided_slice %289 {offsets = [0, 32], sizes = [2, 32], strides = [1, 1]} : vector<2x128xf32> to vector<2x32xf32>
    %308 = arith.addf %306, %307 : vector<2x32xf32>
    %cst_125 = arith.constant 0.000000e+00 : f32
    %309 = vector.broadcast %cst_125 : f32 to vector<2x32xf32>
    %310 = arith.subf %309, %308 : vector<2x32xf32>
    %311 = math.exp %310 : vector<2x32xf32>
    %cst_126 = arith.constant 1.000000e+00 : f32
    %312 = vector.broadcast %cst_126 : f32 to vector<2x32xf32>
    %313 = arith.addf %312, %311 : vector<2x32xf32>
    %314 = tpu.reciprocal %313 {approx = true} : vector<2x32xf32> -> vector<2x32xf32>
    %315 = vector.extract_strided_slice %296 {offsets = [0, 64], sizes = [2, 32], strides = [1, 1]} : vector<2x128xf32> to vector<2x32xf32>
    %316 = vector.extract_strided_slice %289 {offsets = [0, 64], sizes = [2, 32], strides = [1, 1]} : vector<2x128xf32> to vector<2x32xf32>
    %317 = arith.mulf %305, %316 : vector<2x32xf32>
    %318 = arith.addf %315, %317 : vector<2x32xf32>
    %319 = math.tanh %318 : vector<2x32xf32>
    %cst_127 = arith.constant 1.000000e+00 : f32
    %320 = vector.broadcast %cst_127 : f32 to vector<2x32xf32>
    %321 = arith.subf %320, %314 : vector<2x32xf32>
    %322 = arith.mulf %321, %319 : vector<2x32xf32>
    %323 = arith.mulf %314, %252 : vector<2x32xf32>
    %324 = arith.addf %322, %323 : vector<2x32xf32>
    %325 = vector.extract_strided_slice %69 {offsets = [0, 128], sizes = [2, 128], strides = [1, 1]} : vector<8x256xf32> to vector<2x128xf32>
    %326 = vector.extract_strided_slice %325 {offsets = [0, 0], sizes = [2, 32], strides = [1, 1]} : vector<2x128xf32> to vector<2x32xf32>
    %327 = vector.extract_strided_slice %295 {offsets = [0, 0], sizes = [2, 32], strides = [1, 1]} : vector<2x128xf32> to vector<2x32xf32>
    %328 = arith.addf %326, %327 : vector<2x32xf32>
    %cst_128 = arith.constant 0.000000e+00 : f32
    %329 = vector.broadcast %cst_128 : f32 to vector<2x32xf32>
    %330 = arith.subf %329, %328 : vector<2x32xf32>
    %331 = math.exp %330 : vector<2x32xf32>
    %cst_129 = arith.constant 1.000000e+00 : f32
    %332 = vector.broadcast %cst_129 : f32 to vector<2x32xf32>
    %333 = arith.addf %332, %331 : vector<2x32xf32>
    %334 = tpu.reciprocal %333 {approx = true} : vector<2x32xf32> -> vector<2x32xf32>
    %335 = vector.extract_strided_slice %325 {offsets = [0, 32], sizes = [2, 32], strides = [1, 1]} : vector<2x128xf32> to vector<2x32xf32>
    %336 = vector.extract_strided_slice %295 {offsets = [0, 32], sizes = [2, 32], strides = [1, 1]} : vector<2x128xf32> to vector<2x32xf32>
    %337 = arith.addf %335, %336 : vector<2x32xf32>
    %cst_130 = arith.constant 0.000000e+00 : f32
    %338 = vector.broadcast %cst_130 : f32 to vector<2x32xf32>
    %339 = arith.subf %338, %337 : vector<2x32xf32>
    %340 = math.exp %339 : vector<2x32xf32>
    %cst_131 = arith.constant 1.000000e+00 : f32
    %341 = vector.broadcast %cst_131 : f32 to vector<2x32xf32>
    %342 = arith.addf %341, %340 : vector<2x32xf32>
    %343 = tpu.reciprocal %342 {approx = true} : vector<2x32xf32> -> vector<2x32xf32>
    %344 = vector.extract_strided_slice %325 {offsets = [0, 64], sizes = [2, 32], strides = [1, 1]} : vector<2x128xf32> to vector<2x32xf32>
    %345 = vector.extract_strided_slice %295 {offsets = [0, 64], sizes = [2, 32], strides = [1, 1]} : vector<2x128xf32> to vector<2x32xf32>
    %346 = arith.mulf %334, %345 : vector<2x32xf32>
    %347 = arith.addf %344, %346 : vector<2x32xf32>
    %348 = math.tanh %347 : vector<2x32xf32>
    %cst_132 = arith.constant 1.000000e+00 : f32
    %349 = vector.broadcast %cst_132 : f32 to vector<2x32xf32>
    %350 = arith.subf %349, %343 : vector<2x32xf32>
    %351 = arith.mulf %350, %348 : vector<2x32xf32>
    %352 = arith.mulf %343, %281 : vector<2x32xf32>
    %353 = arith.addf %351, %352 : vector<2x32xf32>
    %c6_133 = arith.constant 6 : index
    %c0_134 = arith.constant 0 : index
    %354 = vector.load %arg17[%c6_133, %c0_134] : memref<8x32xf32, #tpu.memory_space<vmem>>, vector<2x32xf32>
    tpu.vector_store %arg17[%c6_133, %c0_134], %324 {strides = array<i32>} : memref<8x32xf32, #tpu.memory_space<vmem>>, vector<2x32xf32>,
    %c0_135 = arith.constant 0 : index
    %c0_136 = arith.constant 0 : index
    %355 = vector.load %arg18[%c0_135, %c0_136] : memref<8x32xf32, #tpu.memory_space<vmem>>, vector<2x32xf32>
    tpu.vector_store %arg18[%c0_135, %c0_136], %353 {strides = array<i32>} : memref<8x32xf32, #tpu.memory_space<vmem>>, vector<2x32xf32>,
    %c0_137 = arith.constant 0 : index
    %c0_138 = arith.constant 0 : index
    %356 = vector.load %arg17[%c0_137, %c0_138] : memref<8x32xf32, #tpu.memory_space<vmem>>, vector<8x32xf32>
    %c0_139 = arith.constant 0 : index
    %c0_140 = arith.constant 0 : index
    %357 = vector.load %arg18[%c0_139, %c0_140] : memref<8x32xf32, #tpu.memory_space<vmem>>, vector<8x32xf32>
    %358 = vector.extract_strided_slice %63 {offsets = [0, 0], sizes = [8, 32], strides = [1, 1]} : vector<8x128xf32> to vector<8x32xf32>
    %359 = arith.addf %356, %358 : vector<8x32xf32>
    %360 = vector.extract_strided_slice %63 {offsets = [0, 32], sizes = [8, 32], strides = [1, 1]} : vector<8x128xf32> to vector<8x32xf32>
    %361 = arith.addf %357, %360 : vector<8x32xf32>
    %362 = arith.truncf %359 : vector<8x32xf32> to vector<8x32xbf16>
    %c0_141 = arith.constant 0 : index
    %c0_142 = arith.constant 0 : index
    %363 = vector.load %arg12[%c0_141, %c0_142] : memref<32x128xbf16, #tpu.memory_space<vmem>>, vector<32x128xbf16>
    %cst_143 = arith.constant dense<0.000000e+00> : vector<8x128xf32>
    %364 = tpu.matmul %362, %363, %cst_143 {dimension_numbers = #tpu.dot_dimension_numbers<[1], [0], [0], [1], [0, 0, 1, 1], [], []>} : vector<8x32xbf16>, vector<32x128xbf16>, vector<8x128xf32> -> vector<8x128xf32>
    %365 = arith.truncf %361 : vector<8x32xf32> to vector<8x32xbf16>
    %c0_144 = arith.constant 0 : index
    %c0_145 = arith.constant 0 : index
    %366 = vector.load %arg13[%c0_144, %c0_145] : memref<32x128xbf16, #tpu.memory_space<vmem>>, vector<32x128xbf16>
    %cst_146 = arith.constant dense<0.000000e+00> : vector<8x128xf32>
    %367 = tpu.matmul %365, %366, %cst_146 {dimension_numbers = #tpu.dot_dimension_numbers<[1], [0], [0], [1], [0, 0, 1, 1], [], []>} : vector<8x32xbf16>, vector<32x128xbf16>, vector<8x128xf32> -> vector<8x128xf32>
    %368 = arith.addf %364, %367 : vector<8x128xf32>
    %c0_147 = arith.constant 0 : index
    %c0_148 = arith.constant 0 : index
    %369 = vector.load %arg14[%c0_147, %c0_148] : memref<1x128xf32, #tpu.memory_space<vmem>>, vector<1x128xf32>
    %370 = vector.broadcast %369 : vector<1x128xf32> to vector<8x128xf32>
    %371 = arith.addf %368, %370 : vector<8x128xf32>
    %cst_149 = arith.constant 5.000000e-01 : f32
    %372 = vector.broadcast %cst_149 : f32 to vector<8x128xf32>
    %373 = arith.mulf %372, %371 : vector<8x128xf32>
    %cst_150 = arith.constant 4.471500e-02 : f32
    %374 = vector.broadcast %cst_150 : f32 to vector<8x128xf32>
    %375 = arith.mulf %374, %371 : vector<8x128xf32>
    %376 = arith.mulf %375, %371 : vector<8x128xf32>
    %377 = arith.mulf %376, %371 : vector<8x128xf32>
    %378 = arith.addf %371, %377 : vector<8x128xf32>
    %cst_151 = arith.constant 0.797884583 : f32
    %379 = vector.broadcast %cst_151 : f32 to vector<8x128xf32>
    %380 = arith.mulf %379, %378 : vector<8x128xf32>
    %381 = math.tanh %380 : vector<8x128xf32>
    %cst_152 = arith.constant 1.000000e+00 : f32
    %382 = vector.broadcast %cst_152 : f32 to vector<8x128xf32>
    %383 = arith.addf %382, %381 : vector<8x128xf32>
    %384 = arith.mulf %373, %383 : vector<8x128xf32>
    %385 = vector.extract_strided_slice %384 {offsets = [0, 0], sizes = [2, 128], strides = [1, 1]} : vector<8x128xf32> to vector<2x128xf32>
    %386 = vector.extract_strided_slice %384 {offsets = [2, 0], sizes = [2, 128], strides = [1, 1]} : vector<8x128xf32> to vector<2x128xf32>
    %387 = arith.addf %385, %386 : vector<2x128xf32>
    %388 = vector.extract_strided_slice %384 {offsets = [4, 0], sizes = [2, 128], strides = [1, 1]} : vector<8x128xf32> to vector<2x128xf32>
    %389 = arith.addf %387, %388 : vector<2x128xf32>
    %390 = vector.extract_strided_slice %384 {offsets = [6, 0], sizes = [2, 128], strides = [1, 1]} : vector<8x128xf32> to vector<2x128xf32>
    %391 = arith.addf %389, %390 : vector<2x128xf32>
    %cst_153 = arith.constant 2.500000e-01 : f32
    %392 = vector.broadcast %cst_153 : f32 to vector<2x128xf32>
    %393 = arith.mulf %391, %392 : vector<2x128xf32>
    %c0_154 = arith.constant 0 : index
    %c0_155 = arith.constant 0 : index
    %394 = vector.load %arg15[%c0_154, %c0_155] : memref<2x128xf32, #tpu.memory_space<vmem>>, vector<2x128xf32>
    tpu.vector_store %arg15[%c0_154, %c0_155], %393 {strides = array<i32>} : memref<2x128xf32, #tpu.memory_space<vmem>>, vector<2x128xf32>,
    return
  }
  func.func @transform_0(%arg0: i32) -> (i32, i32) {
    %c0_i32 = arith.constant 0 : i32
    %c0_i32_0 = arith.constant 0 : i32
    %c0_i32_1 = arith.constant 0 : i32
    return %c0_i32, %c0_i32_0 : i32, i32
  }
  func.func @transform_1(%arg0: i32) -> (i32, i32) {
    %c0_i32 = arith.constant 0 : i32
    %c0_i32_0 = arith.constant 0 : i32
    %c0_i32_1 = arith.constant 0 : i32
    return %c0_i32, %c0_i32_0 : i32, i32
  }
  func.func @transform_2(%arg0: i32) -> (i32, i32) {
    %c0_i32 = arith.constant 0 : i32
    %c0_i32_0 = arith.constant 0 : i32
    %c0_i32_1 = arith.constant 0 : i32
    return %c0_i32, %c0_i32_0 : i32, i32
  }
  func.func @transform_3(%arg0: i32) -> (i32, i32) {
    %c0_i32 = arith.constant 0 : i32
    %c0_i32_0 = arith.constant 0 : i32
    %c0_i32_1 = arith.constant 0 : i32
    return %c0_i32, %c0_i32_0 : i32, i32
  }
  func.func @transform_4(%arg0: i32) -> (i32, i32) {
    %c0_i32 = arith.constant 0 : i32
    %c0_i32_0 = arith.constant 0 : i32
    %c0_i32_1 = arith.constant 0 : i32
    return %c0_i32, %c0_i32_0 : i32, i32
  }
  func.func @transform_5(%arg0: i32) -> (i32, i32) {
    %c0_i32 = arith.constant 0 : i32
    %c0_i32_0 = arith.constant 0 : i32
    %c0_i32_1 = arith.constant 0 : i32
    return %c0_i32, %c0_i32_0 : i32, i32
  }
  func.func @transform_6(%arg0: i32) -> (i32, i32) {
    %c0_i32 = arith.constant 0 : i32
    %c0_i32_0 = arith.constant 0 : i32
    %c0_i32_1 = arith.constant 0 : i32
    return %c0_i32, %c0_i32_0 : i32, i32
  }
  func.func @transform_7(%arg0: i32) -> (i32, i32) {
    %c0_i32 = arith.constant 0 : i32
    %c0_i32_0 = arith.constant 0 : i32
    %c0_i32_1 = arith.constant 0 : i32
    return %c0_i32, %c0_i32_0 : i32, i32
  }
  func.func @transform_8(%arg0: i32) -> (i32, i32) {
    %c0_i32 = arith.constant 0 : i32
    %c0_i32_0 = arith.constant 0 : i32
    %c0_i32_1 = arith.constant 0 : i32
    return %c0_i32, %c0_i32_0 : i32, i32
  }
  func.func @transform_9(%arg0: i32) -> (i32, i32) {
    %c0_i32 = arith.constant 0 : i32
    %c0_i32_0 = arith.constant 0 : i32
    %c0_i32_1 = arith.constant 0 : i32
    return %c0_i32, %c0_i32_0 : i32, i32
  }
  func.func @transform_10(%arg0: i32) -> (i32, i32) {
    %c0_i32 = arith.constant 0 : i32
    %c0_i32_0 = arith.constant 0 : i32
    %c0_i32_1 = arith.constant 0 : i32
    return %c0_i32, %c0_i32_0 : i32, i32
  }
  func.func @transform_11(%arg0: i32) -> (i32, i32) {
    %c0_i32 = arith.constant 0 : i32
    %c0_i32_0 = arith.constant 0 : i32
    %c0_i32_1 = arith.constant 0 : i32
    return %c0_i32, %c0_i32_0 : i32, i32
  }
  func.func @transform_12(%arg0: i32) -> (i32, i32) {
    %c0_i32 = arith.constant 0 : i32
    %c0_i32_0 = arith.constant 0 : i32
    %c0_i32_1 = arith.constant 0 : i32
    return %c0_i32, %c0_i32_0 : i32, i32
  }
  func.func @transform_13(%arg0: i32) -> (i32, i32) {
    %c0_i32 = arith.constant 0 : i32
    %c0_i32_0 = arith.constant 0 : i32
    %c0_i32_1 = arith.constant 0 : i32
    return %c0_i32, %c0_i32_0 : i32, i32
  }
  func.func @transform_14(%arg0: i32) -> (i32, i32) {
    %c0_i32 = arith.constant 0 : i32
    %c0_i32_0 = arith.constant 0 : i32
    %c0_i32_1 = arith.constant 0 : i32
    return %c0_i32, %c0_i32_0 : i32, i32
  }
}

module attributes {stable_mosaic.version = 11 : i64} {
  func.func @kernel(%arg0: i32, %arg1: memref<16x768xf32, #tpu.memory_space<vmem>>, %arg2: memref<2x128xf32, #tpu.memory_space<vmem>>, %arg3: memref<2x128xf32, #tpu.memory_space<vmem>>, %arg4: memref<768x128xbf16, #tpu.memory_space<vmem>>, %arg5: memref<1x128xf32, #tpu.memory_space<vmem>>, %arg6: memref<128x256xbf16, #tpu.memory_space<vmem>>, %arg7: memref<1x256xf32, #tpu.memory_space<vmem>>, %arg8: memref<256x128xbf16, #tpu.memory_space<vmem>>, %arg9: memref<1x128xf32, #tpu.memory_space<vmem>>, %arg10: memref<2x128xf32, #tpu.memory_space<vmem>>) attributes {dimension_semantics = [#tpu.dimension_semantics<arbitrary>], iteration_bounds = array<i64: 1>, scalar_prefetch = 0 : i64, scratch_operands = 0 : i64, tpu.core_type = #tpu.core_type<tc>, window_params = [{pipeline_mode = #tpu.pipeline_mode<synchronous>, transform_indices = @transform_0, window_bounds = array<i64: 16, 768>}, {pipeline_mode = #tpu.pipeline_mode<synchronous>, transform_indices = @transform_1, window_bounds = array<i64: 2, 128>}, {pipeline_mode = #tpu.pipeline_mode<synchronous>, transform_indices = @transform_2, window_bounds = array<i64: 2, 128>}, {pipeline_mode = #tpu.pipeline_mode<synchronous>, transform_indices = @transform_3, window_bounds = array<i64: 768, 128>}, {pipeline_mode = #tpu.pipeline_mode<synchronous>, transform_indices = @transform_4, window_bounds = array<i64: 1, 128>}, {pipeline_mode = #tpu.pipeline_mode<synchronous>, transform_indices = @transform_5, window_bounds = array<i64: 128, 256>}, {pipeline_mode = #tpu.pipeline_mode<synchronous>, transform_indices = @transform_6, window_bounds = array<i64: 1, 256>}, {pipeline_mode = #tpu.pipeline_mode<synchronous>, transform_indices = @transform_7, window_bounds = array<i64: 256, 128>}, {pipeline_mode = #tpu.pipeline_mode<synchronous>, transform_indices = @transform_8, window_bounds = array<i64: 1, 128>}, {pipeline_mode = #tpu.pipeline_mode<synchronous>, transform_indices = @transform_9, window_bounds = array<i64: 2, 128>}]} {
    %c0 = arith.constant 0 : index
    %c0_0 = arith.constant 0 : index
    %0 = vector.load %arg1[%c0, %c0_0] : memref<16x768xf32, #tpu.memory_space<vmem>>, vector<16x768xf32>
    %1 = arith.truncf %0 : vector<16x768xf32> to vector<16x768xbf16>
    %c0_1 = arith.constant 0 : index
    %c0_2 = arith.constant 0 : index
    %2 = vector.load %arg4[%c0_1, %c0_2] : memref<768x128xbf16, #tpu.memory_space<vmem>>, vector<768x128xbf16>
    %cst = arith.constant dense<0.000000e+00> : vector<16x128xf32>
    %3 = tpu.matmul %1, %2, %cst {dimension_numbers = #tpu.dot_dimension_numbers<[1], [0], [0], [1], [0, 0, 1, 1], [], []>} : vector<16x768xbf16>, vector<768x128xbf16>, vector<16x128xf32> -> vector<16x128xf32>
    %c0_3 = arith.constant 0 : index
    %c0_4 = arith.constant 0 : index
    %4 = vector.load %arg5[%c0_3, %c0_4] : memref<1x128xf32, #tpu.memory_space<vmem>>, vector<1x128xf32>
    %5 = vector.broadcast %4 : vector<1x128xf32> to vector<16x128xf32>
    %6 = arith.addf %3, %5 : vector<16x128xf32>
    %cst_5 = arith.constant 5.000000e-01 : f32
    %7 = vector.broadcast %cst_5 : f32 to vector<16x128xf32>
    %8 = arith.mulf %7, %6 : vector<16x128xf32>
    %cst_6 = arith.constant 4.471500e-02 : f32
    %9 = vector.broadcast %cst_6 : f32 to vector<16x128xf32>
    %10 = arith.mulf %9, %6 : vector<16x128xf32>
    %11 = arith.mulf %10, %6 : vector<16x128xf32>
    %12 = arith.mulf %11, %6 : vector<16x128xf32>
    %13 = arith.addf %6, %12 : vector<16x128xf32>
    %cst_7 = arith.constant 0.797884583 : f32
    %14 = vector.broadcast %cst_7 : f32 to vector<16x128xf32>
    %15 = arith.mulf %14, %13 : vector<16x128xf32>
    %16 = math.tanh %15 : vector<16x128xf32>
    %cst_8 = arith.constant 1.000000e+00 : f32
    %17 = vector.broadcast %cst_8 : f32 to vector<16x128xf32>
    %18 = arith.addf %17, %16 : vector<16x128xf32>
    %19 = arith.mulf %8, %18 : vector<16x128xf32>
    %20 = vector.extract_strided_slice %19 {offsets = [0, 0], sizes = [2, 128], strides = [1, 1]} : vector<16x128xf32> to vector<2x128xf32>
    %21 = vector.extract_strided_slice %19 {offsets = [2, 0], sizes = [2, 128], strides = [1, 1]} : vector<16x128xf32> to vector<2x128xf32>
    %22 = arith.addf %20, %21 : vector<2x128xf32>
    %23 = vector.extract_strided_slice %19 {offsets = [4, 0], sizes = [2, 128], strides = [1, 1]} : vector<16x128xf32> to vector<2x128xf32>
    %24 = arith.addf %22, %23 : vector<2x128xf32>
    %25 = vector.extract_strided_slice %19 {offsets = [6, 0], sizes = [2, 128], strides = [1, 1]} : vector<16x128xf32> to vector<2x128xf32>
    %26 = arith.addf %24, %25 : vector<2x128xf32>
    %27 = vector.extract_strided_slice %19 {offsets = [8, 0], sizes = [2, 128], strides = [1, 1]} : vector<16x128xf32> to vector<2x128xf32>
    %28 = arith.addf %26, %27 : vector<2x128xf32>
    %29 = vector.extract_strided_slice %19 {offsets = [10, 0], sizes = [2, 128], strides = [1, 1]} : vector<16x128xf32> to vector<2x128xf32>
    %30 = arith.addf %28, %29 : vector<2x128xf32>
    %31 = vector.extract_strided_slice %19 {offsets = [12, 0], sizes = [2, 128], strides = [1, 1]} : vector<16x128xf32> to vector<2x128xf32>
    %32 = arith.addf %30, %31 : vector<2x128xf32>
    %33 = vector.extract_strided_slice %19 {offsets = [14, 0], sizes = [2, 128], strides = [1, 1]} : vector<16x128xf32> to vector<2x128xf32>
    %34 = arith.addf %32, %33 : vector<2x128xf32>
    %cst_9 = arith.constant 1.250000e-01 : f32
    %35 = vector.broadcast %cst_9 : f32 to vector<2x128xf32>
    %36 = arith.mulf %34, %35 : vector<2x128xf32>
    %c0_10 = arith.constant 0 : index
    %c0_11 = arith.constant 0 : index
    %37 = vector.load %arg2[%c0_10, %c0_11] : memref<2x128xf32, #tpu.memory_space<vmem>>, vector<2x128xf32>
    %38 = arith.addf %37, %36 : vector<2x128xf32>
    %c0_12 = arith.constant 0 : index
    %c0_13 = arith.constant 0 : index
    %39 = vector.load %arg3[%c0_12, %c0_13] : memref<2x128xf32, #tpu.memory_space<vmem>>, vector<2x128xf32>
    %40 = arith.addf %38, %39 : vector<2x128xf32>
    %41 = arith.truncf %40 : vector<2x128xf32> to vector<2x128xbf16>
    %c0_14 = arith.constant 0 : index
    %c0_15 = arith.constant 0 : index
    %42 = vector.load %arg6[%c0_14, %c0_15] : memref<128x256xbf16, #tpu.memory_space<vmem>>, vector<128x256xbf16>
    %cst_16 = arith.constant dense<0.000000e+00> : vector<2x256xf32>
    %43 = tpu.matmul %41, %42, %cst_16 {dimension_numbers = #tpu.dot_dimension_numbers<[1], [0], [0], [1], [0, 0, 1, 1], [], []>} : vector<2x128xbf16>, vector<128x256xbf16>, vector<2x256xf32> -> vector<2x256xf32>
    %c0_17 = arith.constant 0 : index
    %c0_18 = arith.constant 0 : index
    %44 = vector.load %arg7[%c0_17, %c0_18] : memref<1x256xf32, #tpu.memory_space<vmem>>, vector<1x256xf32>
    %45 = vector.broadcast %44 : vector<1x256xf32> to vector<2x256xf32>
    %46 = arith.addf %43, %45 : vector<2x256xf32>
    %cst_19 = arith.constant 5.000000e-01 : f32
    %47 = vector.broadcast %cst_19 : f32 to vector<2x256xf32>
    %48 = arith.mulf %47, %46 : vector<2x256xf32>
    %cst_20 = arith.constant 4.471500e-02 : f32
    %49 = vector.broadcast %cst_20 : f32 to vector<2x256xf32>
    %50 = arith.mulf %49, %46 : vector<2x256xf32>
    %51 = arith.mulf %50, %46 : vector<2x256xf32>
    %52 = arith.mulf %51, %46 : vector<2x256xf32>
    %53 = arith.addf %46, %52 : vector<2x256xf32>
    %cst_21 = arith.constant 0.797884583 : f32
    %54 = vector.broadcast %cst_21 : f32 to vector<2x256xf32>
    %55 = arith.mulf %54, %53 : vector<2x256xf32>
    %56 = math.tanh %55 : vector<2x256xf32>
    %cst_22 = arith.constant 1.000000e+00 : f32
    %57 = vector.broadcast %cst_22 : f32 to vector<2x256xf32>
    %58 = arith.addf %57, %56 : vector<2x256xf32>
    %59 = arith.mulf %48, %58 : vector<2x256xf32>
    %60 = arith.truncf %59 : vector<2x256xf32> to vector<2x256xbf16>
    %c0_23 = arith.constant 0 : index
    %c0_24 = arith.constant 0 : index
    %61 = vector.load %arg8[%c0_23, %c0_24] : memref<256x128xbf16, #tpu.memory_space<vmem>>, vector<256x128xbf16>
    %cst_25 = arith.constant dense<0.000000e+00> : vector<2x128xf32>
    %62 = tpu.matmul %60, %61, %cst_25 {dimension_numbers = #tpu.dot_dimension_numbers<[1], [0], [0], [1], [0, 0, 1, 1], [], []>} : vector<2x256xbf16>, vector<256x128xbf16>, vector<2x128xf32> -> vector<2x128xf32>
    %c0_26 = arith.constant 0 : index
    %c0_27 = arith.constant 0 : index
    %63 = vector.load %arg9[%c0_26, %c0_27] : memref<1x128xf32, #tpu.memory_space<vmem>>, vector<1x128xf32>
    %64 = vector.broadcast %63 : vector<1x128xf32> to vector<2x128xf32>
    %65 = arith.addf %62, %64 : vector<2x128xf32>
    %cst_28 = arith.constant 0.000000e+00 : f32
    %66 = vector.broadcast %cst_28 : f32 to vector<2x128xf32>
    %67 = arith.subf %66, %65 : vector<2x128xf32>
    %68 = math.exp %67 : vector<2x128xf32>
    %cst_29 = arith.constant 1.000000e+00 : f32
    %69 = vector.broadcast %cst_29 : f32 to vector<2x128xf32>
    %70 = arith.addf %69, %68 : vector<2x128xf32>
    %cst_30 = arith.constant 1.000000e+00 : f32
    %71 = vector.broadcast %cst_30 : f32 to vector<2x128xf32>
    %72 = arith.divf %71, %70 : vector<2x128xf32>
    %c0_31 = arith.constant 0 : index
    %c0_32 = arith.constant 0 : index
    %73 = vector.load %arg10[%c0_31, %c0_32] : memref<2x128xf32, #tpu.memory_space<vmem>>, vector<2x128xf32>
    tpu.vector_store %arg10[%c0_31, %c0_32], %72 {strides = array<i32>} : memref<2x128xf32, #tpu.memory_space<vmem>>, vector<2x128xf32>,
    return
  }
  func.func @transform_0(%arg0: i32) -> (i32, i32) {
    %c0_i32 = arith.constant 0 : i32
    %c0_i32_0 = arith.constant 0 : i32
    %c0_i32_1 = arith.constant 0 : i32
    return %c0_i32, %c0_i32_0 : i32, i32
  }
  func.func @transform_1(%arg0: i32) -> (i32, i32) {
    %c0_i32 = arith.constant 0 : i32
    %c0_i32_0 = arith.constant 0 : i32
    %c0_i32_1 = arith.constant 0 : i32
    return %c0_i32, %c0_i32_0 : i32, i32
  }
  func.func @transform_2(%arg0: i32) -> (i32, i32) {
    %c0_i32 = arith.constant 0 : i32
    %c0_i32_0 = arith.constant 0 : i32
    %c0_i32_1 = arith.constant 0 : i32
    return %c0_i32, %c0_i32_0 : i32, i32
  }
  func.func @transform_3(%arg0: i32) -> (i32, i32) {
    %c0_i32 = arith.constant 0 : i32
    %c0_i32_0 = arith.constant 0 : i32
    %c0_i32_1 = arith.constant 0 : i32
    return %c0_i32, %c0_i32_0 : i32, i32
  }
  func.func @transform_4(%arg0: i32) -> (i32, i32) {
    %c0_i32 = arith.constant 0 : i32
    %c0_i32_0 = arith.constant 0 : i32
    %c0_i32_1 = arith.constant 0 : i32
    return %c0_i32, %c0_i32_0 : i32, i32
  }
  func.func @transform_5(%arg0: i32) -> (i32, i32) {
    %c0_i32 = arith.constant 0 : i32
    %c0_i32_0 = arith.constant 0 : i32
    %c0_i32_1 = arith.constant 0 : i32
    return %c0_i32, %c0_i32_0 : i32, i32
  }
  func.func @transform_6(%arg0: i32) -> (i32, i32) {
    %c0_i32 = arith.constant 0 : i32
    %c0_i32_0 = arith.constant 0 : i32
    %c0_i32_1 = arith.constant 0 : i32
    return %c0_i32, %c0_i32_0 : i32, i32
  }
  func.func @transform_7(%arg0: i32) -> (i32, i32) {
    %c0_i32 = arith.constant 0 : i32
    %c0_i32_0 = arith.constant 0 : i32
    %c0_i32_1 = arith.constant 0 : i32
    return %c0_i32, %c0_i32_0 : i32, i32
  }
  func.func @transform_8(%arg0: i32) -> (i32, i32) {
    %c0_i32 = arith.constant 0 : i32
    %c0_i32_0 = arith.constant 0 : i32
    %c0_i32_1 = arith.constant 0 : i32
    return %c0_i32, %c0_i32_0 : i32, i32
  }
  func.func @transform_9(%arg0: i32) -> (i32, i32) {
    %c0_i32 = arith.constant 0 : i32
    %c0_i32_0 = arith.constant 0 : i32
    %c0_i32_1 = arith.constant 0 : i32
    return %c0_i32, %c0_i32_0 : i32, i32
  }
}

module attributes {stable_mosaic.version = 11 : i64} {
  func.func @kernel(%arg0: i32, %arg1: memref<8x256xf32, #tpu.memory_space<vmem>>, %arg2: memref<256x256xbf16, #tpu.memory_space<vmem>>, %arg3: memref<1x256xf32, #tpu.memory_space<vmem>>, %arg4: memref<32x128xbf16, #tpu.memory_space<vmem>>, %arg5: memref<1x128xf32, #tpu.memory_space<vmem>>, %arg6: memref<32x128xbf16, #tpu.memory_space<vmem>>, %arg7: memref<1x128xf32, #tpu.memory_space<vmem>>, %arg8: memref<32x128xbf16, #tpu.memory_space<vmem>>, %arg9: memref<32x128xbf16, #tpu.memory_space<vmem>>, %arg10: memref<1x128xf32, #tpu.memory_space<vmem>>, %arg11: memref<2x128xf32, #tpu.memory_space<vmem>>, %arg12: memref<8x32xf32, #tpu.memory_space<vmem>>, %arg13: memref<8x32xf32, #tpu.memory_space<vmem>>) attributes {dimension_semantics = [#tpu.dimension_semantics<arbitrary>], iteration_bounds = array<i64: 1>, scalar_prefetch = 0 : i64, scratch_operands = 2 : i64, tpu.core_type = #tpu.core_type<tc>, window_params = [{pipeline_mode = #tpu.pipeline_mode<synchronous>, transform_indices = @transform_0, window_bounds = array<i64: 8, 256>}, {pipeline_mode = #tpu.pipeline_mode<synchronous>, transform_indices = @transform_1, window_bounds = array<i64: 256, 256>}, {pipeline_mode = #tpu.pipeline_mode<synchronous>, transform_indices = @transform_2, window_bounds = array<i64: 1, 256>}, {pipeline_mode = #tpu.pipeline_mode<synchronous>, transform_indices = @transform_3, window_bounds = array<i64: 32, 128>}, {pipeline_mode = #tpu.pipeline_mode<synchronous>, transform_indices = @transform_4, window_bounds = array<i64: 1, 128>}, {pipeline_mode = #tpu.pipeline_mode<synchronous>, transform_indices = @transform_5, window_bounds = array<i64: 32, 128>}, {pipeline_mode = #tpu.pipeline_mode<synchronous>, transform_indices = @transform_6, window_bounds = array<i64: 1, 128>}, {pipeline_mode = #tpu.pipeline_mode<synchronous>, transform_indices = @transform_7, window_bounds = array<i64: 32, 128>}, {pipeline_mode = #tpu.pipeline_mode<synchronous>, transform_indices = @transform_8, window_bounds = array<i64: 32, 128>}, {pipeline_mode = #tpu.pipeline_mode<synchronous>, transform_indices = @transform_9, window_bounds = array<i64: 1, 128>}, {pipeline_mode = #tpu.pipeline_mode<synchronous>, transform_indices = @transform_10, window_bounds = array<i64: 2, 128>}]} {
    %c0 = arith.constant 0 : index
    %c0_0 = arith.constant 0 : index
    %0 = vector.load %arg1[%c0, %c0_0] : memref<8x256xf32, #tpu.memory_space<vmem>>, vector<8x256xf32>
    %1 = arith.truncf %0 : vector<8x256xf32> to vector<8x256xbf16>
    %c0_1 = arith.constant 0 : index
    %c0_2 = arith.constant 0 : index
    %2 = vector.load %arg2[%c0_1, %c0_2] : memref<256x256xbf16, #tpu.memory_space<vmem>>, vector<256x256xbf16>
    %cst = arith.constant dense<0.000000e+00> : vector<8x256xf32>
    %3 = tpu.matmul %1, %2, %cst {dimension_numbers = #tpu.dot_dimension_numbers<[1], [0], [0], [1], [0, 0, 1, 1], [], []>} : vector<8x256xbf16>, vector<256x256xbf16>, vector<8x256xf32> -> vector<8x256xf32>
    %c0_3 = arith.constant 0 : index
    %c0_4 = arith.constant 0 : index
    %4 = vector.load %arg3[%c0_3, %c0_4] : memref<1x256xf32, #tpu.memory_space<vmem>>, vector<1x256xf32>
    %5 = vector.broadcast %4 : vector<1x256xf32> to vector<8x256xf32>
    %6 = arith.addf %3, %5 : vector<8x256xf32>
    %cst_5 = arith.constant 0.000000e+00 : f32
    %7 = vector.broadcast %cst_5 : f32 to vector<2x32xf32>
    %cst_6 = arith.constant 0.000000e+00 : f32
    %8 = vector.broadcast %cst_6 : f32 to vector<2x32xf32>
    %c0_7 = arith.constant 0 : index
    %c0_8 = arith.constant 0 : index
    %9 = vector.load %arg5[%c0_7, %c0_8] : memref<1x128xf32, #tpu.memory_space<vmem>>, vector<1x128xf32>
    %c0_9 = arith.constant 0 : index
    %c0_10 = arith.constant 0 : index
    %10 = vector.load %arg7[%c0_9, %c0_10] : memref<1x128xf32, #tpu.memory_space<vmem>>, vector<1x128xf32>
    %11 = vector.extract_strided_slice %6 {offsets = [0, 0], sizes = [2, 128], strides = [1, 1]} : vector<8x256xf32> to vector<2x128xf32>
    %12 = vector.extract_strided_slice %11 {offsets = [0, 0], sizes = [2, 32], strides = [1, 1]} : vector<2x128xf32> to vector<2x32xf32>
    %13 = vector.extract_strided_slice %9 {offsets = [0, 0], sizes = [1, 32], strides = [1, 1]} : vector<1x128xf32> to vector<1x32xf32>
    %14 = vector.broadcast %13 : vector<1x32xf32> to vector<2x32xf32>
    %15 = arith.addf %12, %14 : vector<2x32xf32>
    %cst_11 = arith.constant 0.000000e+00 : f32
    %16 = vector.broadcast %cst_11 : f32 to vector<2x32xf32>
    %17 = arith.subf %16, %15 : vector<2x32xf32>
    %18 = math.exp %17 : vector<2x32xf32>
    %cst_12 = arith.constant 1.000000e+00 : f32
    %19 = vector.broadcast %cst_12 : f32 to vector<2x32xf32>
    %20 = arith.addf %19, %18 : vector<2x32xf32>
    %21 = tpu.reciprocal %20 {approx = true} : vector<2x32xf32> -> vector<2x32xf32>
    %22 = vector.extract_strided_slice %11 {offsets = [0, 32], sizes = [2, 32], strides = [1, 1]} : vector<2x128xf32> to vector<2x32xf32>
    %23 = vector.extract_strided_slice %9 {offsets = [0, 32], sizes = [1, 32], strides = [1, 1]} : vector<1x128xf32> to vector<1x32xf32>
    %24 = vector.broadcast %23 : vector<1x32xf32> to vector<2x32xf32>
    %25 = arith.addf %22, %24 : vector<2x32xf32>
    %cst_13 = arith.constant 0.000000e+00 : f32
    %26 = vector.broadcast %cst_13 : f32 to vector<2x32xf32>
    %27 = arith.subf %26, %25 : vector<2x32xf32>
    %28 = math.exp %27 : vector<2x32xf32>
    %cst_14 = arith.constant 1.000000e+00 : f32
    %29 = vector.broadcast %cst_14 : f32 to vector<2x32xf32>
    %30 = arith.addf %29, %28 : vector<2x32xf32>
    %31 = tpu.reciprocal %30 {approx = true} : vector<2x32xf32> -> vector<2x32xf32>
    %32 = vector.extract_strided_slice %11 {offsets = [0, 64], sizes = [2, 32], strides = [1, 1]} : vector<2x128xf32> to vector<2x32xf32>
    %33 = vector.extract_strided_slice %9 {offsets = [0, 64], sizes = [1, 32], strides = [1, 1]} : vector<1x128xf32> to vector<1x32xf32>
    %34 = vector.broadcast %33 : vector<1x32xf32> to vector<2x32xf32>
    %35 = arith.mulf %21, %34 : vector<2x32xf32>
    %36 = arith.addf %32, %35 : vector<2x32xf32>
    %37 = math.tanh %36 : vector<2x32xf32>
    %cst_15 = arith.constant 1.000000e+00 : f32
    %38 = vector.broadcast %cst_15 : f32 to vector<2x32xf32>
    %39 = arith.subf %38, %31 : vector<2x32xf32>
    %40 = arith.mulf %39, %37 : vector<2x32xf32>
    %41 = arith.mulf %31, %7 : vector<2x32xf32>
    %42 = arith.addf %40, %41 : vector<2x32xf32>
    %43 = vector.extract_strided_slice %6 {offsets = [6, 128], sizes = [2, 128], strides = [1, 1]} : vector<8x256xf32> to vector<2x128xf32>
    %44 = vector.extract_strided_slice %43 {offsets = [0, 0], sizes = [2, 32], strides = [1, 1]} : vector<2x128xf32> to vector<2x32xf32>
    %45 = vector.extract_strided_slice %10 {offsets = [0, 0], sizes = [1, 32], strides = [1, 1]} : vector<1x128xf32> to vector<1x32xf32>
    %46 = vector.broadcast %45 : vector<1x32xf32> to vector<2x32xf32>
    %47 = arith.addf %44, %46 : vector<2x32xf32>
    %cst_16 = arith.constant 0.000000e+00 : f32
    %48 = vector.broadcast %cst_16 : f32 to vector<2x32xf32>
    %49 = arith.subf %48, %47 : vector<2x32xf32>
    %50 = math.exp %49 : vector<2x32xf32>
    %cst_17 = arith.constant 1.000000e+00 : f32
    %51 = vector.broadcast %cst_17 : f32 to vector<2x32xf32>
    %52 = arith.addf %51, %50 : vector<2x32xf32>
    %53 = tpu.reciprocal %52 {approx = true} : vector<2x32xf32> -> vector<2x32xf32>
    %54 = vector.extract_strided_slice %43 {offsets = [0, 32], sizes = [2, 32], strides = [1, 1]} : vector<2x128xf32> to vector<2x32xf32>
    %55 = vector.extract_strided_slice %10 {offsets = [0, 32], sizes = [1, 32], strides = [1, 1]} : vector<1x128xf32> to vector<1x32xf32>
    %56 = vector.broadcast %55 : vector<1x32xf32> to vector<2x32xf32>
    %57 = arith.addf %54, %56 : vector<2x32xf32>
    %cst_18 = arith.constant 0.000000e+00 : f32
    %58 = vector.broadcast %cst_18 : f32 to vector<2x32xf32>
    %59 = arith.subf %58, %57 : vector<2x32xf32>
    %60 = math.exp %59 : vector<2x32xf32>
    %cst_19 = arith.constant 1.000000e+00 : f32
    %61 = vector.broadcast %cst_19 : f32 to vector<2x32xf32>
    %62 = arith.addf %61, %60 : vector<2x32xf32>
    %63 = tpu.reciprocal %62 {approx = true} : vector<2x32xf32> -> vector<2x32xf32>
    %64 = vector.extract_strided_slice %43 {offsets = [0, 64], sizes = [2, 32], strides = [1, 1]} : vector<2x128xf32> to vector<2x32xf32>
    %65 = vector.extract_strided_slice %10 {offsets = [0, 64], sizes = [1, 32], strides = [1, 1]} : vector<1x128xf32> to vector<1x32xf32>
    %66 = vector.broadcast %65 : vector<1x32xf32> to vector<2x32xf32>
    %67 = arith.mulf %53, %66 : vector<2x32xf32>
    %68 = arith.addf %64, %67 : vector<2x32xf32>
    %69 = math.tanh %68 : vector<2x32xf32>
    %cst_20 = arith.constant 1.000000e+00 : f32
    %70 = vector.broadcast %cst_20 : f32 to vector<2x32xf32>
    %71 = arith.subf %70, %63 : vector<2x32xf32>
    %72 = arith.mulf %71, %69 : vector<2x32xf32>
    %73 = arith.mulf %63, %8 : vector<2x32xf32>
    %74 = arith.addf %72, %73 : vector<2x32xf32>
    %c0_21 = arith.constant 0 : index
    %c0_22 = arith.constant 0 : index
    %75 = vector.load %arg12[%c0_21, %c0_22] : memref<8x32xf32, #tpu.memory_space<vmem>>, vector<2x32xf32>
    tpu.vector_store %arg12[%c0_21, %c0_22], %42 {strides = array<i32>} : memref<8x32xf32, #tpu.memory_space<vmem>>, vector<2x32xf32>,
    %c6 = arith.constant 6 : index
    %c0_23 = arith.constant 0 : index
    %76 = vector.load %arg13[%c6, %c0_23] : memref<8x32xf32, #tpu.memory_space<vmem>>, vector<2x32xf32>
    tpu.vector_store %arg13[%c6, %c0_23], %74 {strides = array<i32>} : memref<8x32xf32, #tpu.memory_space<vmem>>, vector<2x32xf32>,
    %77 = arith.truncf %42 : vector<2x32xf32> to vector<2x32xbf16>
    %c0_24 = arith.constant 0 : index
    %c0_25 = arith.constant 0 : index
    %78 = vector.load %arg4[%c0_24, %c0_25] : memref<32x128xbf16, #tpu.memory_space<vmem>>, vector<32x128xbf16>
    %cst_26 = arith.constant dense<0.000000e+00> : vector<2x128xf32>
    %79 = tpu.matmul %77, %78, %cst_26 {dimension_numbers = #tpu.dot_dimension_numbers<[1], [0], [0], [1], [0, 0, 1, 1], [], []>} : vector<2x32xbf16>, vector<32x128xbf16>, vector<2x128xf32> -> vector<2x128xf32>
    %c0_27 = arith.constant 0 : index
    %c0_28 = arith.constant 0 : index
    %80 = vector.load %arg5[%c0_27, %c0_28] : memref<1x128xf32, #tpu.memory_space<vmem>>, vector<1x128xf32>
    %81 = vector.broadcast %80 : vector<1x128xf32> to vector<2x128xf32>
    %82 = arith.addf %79, %81 : vector<2x128xf32>
    %83 = arith.truncf %74 : vector<2x32xf32> to vector<2x32xbf16>
    %c0_29 = arith.constant 0 : index
    %c0_30 = arith.constant 0 : index
    %84 = vector.load %arg6[%c0_29, %c0_30] : memref<32x128xbf16, #tpu.memory_space<vmem>>, vector<32x128xbf16>
    %cst_31 = arith.constant dense<0.000000e+00> : vector<2x128xf32>
    %85 = tpu.matmul %83, %84, %cst_31 {dimension_numbers = #tpu.dot_dimension_numbers<[1], [0], [0], [1], [0, 0, 1, 1], [], []>} : vector<2x32xbf16>, vector<32x128xbf16>, vector<2x128xf32> -> vector<2x128xf32>
    %c0_32 = arith.constant 0 : index
    %c0_33 = arith.constant 0 : index
    %86 = vector.load %arg7[%c0_32, %c0_33] : memref<1x128xf32, #tpu.memory_space<vmem>>, vector<1x128xf32>
    %87 = vector.broadcast %86 : vector<1x128xf32> to vector<2x128xf32>
    %88 = arith.addf %85, %87 : vector<2x128xf32>
    %89 = vector.extract_strided_slice %6 {offsets = [2, 0], sizes = [2, 128], strides = [1, 1]} : vector<8x256xf32> to vector<2x128xf32>
    %90 = vector.extract_strided_slice %89 {offsets = [0, 0], sizes = [2, 32], strides = [1, 1]} : vector<2x128xf32> to vector<2x32xf32>
    %91 = vector.extract_strided_slice %82 {offsets = [0, 0], sizes = [2, 32], strides = [1, 1]} : vector<2x128xf32> to vector<2x32xf32>
    %92 = arith.addf %90, %91 : vector<2x32xf32>
    %cst_34 = arith.constant 0.000000e+00 : f32
    %93 = vector.broadcast %cst_34 : f32 to vector<2x32xf32>
    %94 = arith.subf %93, %92 : vector<2x32xf32>
    %95 = math.exp %94 : vector<2x32xf32>
    %cst_35 = arith.constant 1.000000e+00 : f32
    %96 = vector.broadcast %cst_35 : f32 to vector<2x32xf32>
    %97 = arith.addf %96, %95 : vector<2x32xf32>
    %98 = tpu.reciprocal %97 {approx = true} : vector<2x32xf32> -> vector<2x32xf32>
    %99 = vector.extract_strided_slice %89 {offsets = [0, 32], sizes = [2, 32], strides = [1, 1]} : vector<2x128xf32> to vector<2x32xf32>
    %100 = vector.extract_strided_slice %82 {offsets = [0, 32], sizes = [2, 32], strides = [1, 1]} : vector<2x128xf32> to vector<2x32xf32>
    %101 = arith.addf %99, %100 : vector<2x32xf32>
    %cst_36 = arith.constant 0.000000e+00 : f32
    %102 = vector.broadcast %cst_36 : f32 to vector<2x32xf32>
    %103 = arith.subf %102, %101 : vector<2x32xf32>
    %104 = math.exp %103 : vector<2x32xf32>
    %cst_37 = arith.constant 1.000000e+00 : f32
    %105 = vector.broadcast %cst_37 : f32 to vector<2x32xf32>
    %106 = arith.addf %105, %104 : vector<2x32xf32>
    %107 = tpu.reciprocal %106 {approx = true} : vector<2x32xf32> -> vector<2x32xf32>
    %108 = vector.extract_strided_slice %89 {offsets = [0, 64], sizes = [2, 32], strides = [1, 1]} : vector<2x128xf32> to vector<2x32xf32>
    %109 = vector.extract_strided_slice %82 {offsets = [0, 64], sizes = [2, 32], strides = [1, 1]} : vector<2x128xf32> to vector<2x32xf32>
    %110 = arith.mulf %98, %109 : vector<2x32xf32>
    %111 = arith.addf %108, %110 : vector<2x32xf32>
    %112 = math.tanh %111 : vector<2x32xf32>
    %cst_38 = arith.constant 1.000000e+00 : f32
    %113 = vector.broadcast %cst_38 : f32 to vector<2x32xf32>
    %114 = arith.subf %113, %107 : vector<2x32xf32>
    %115 = arith.mulf %114, %112 : vector<2x32xf32>
    %116 = arith.mulf %107, %42 : vector<2x32xf32>
    %117 = arith.addf %115, %116 : vector<2x32xf32>
    %118 = vector.extract_strided_slice %6 {offsets = [4, 128], sizes = [2, 128], strides = [1, 1]} : vector<8x256xf32> to vector<2x128xf32>
    %119 = vector.extract_strided_slice %118 {offsets = [0, 0], sizes = [2, 32], strides = [1, 1]} : vector<2x128xf32> to vector<2x32xf32>
    %120 = vector.extract_strided_slice %88 {offsets = [0, 0], sizes = [2, 32], strides = [1, 1]} : vector<2x128xf32> to vector<2x32xf32>
    %121 = arith.addf %119, %120 : vector<2x32xf32>
    %cst_39 = arith.constant 0.000000e+00 : f32
    %122 = vector.broadcast %cst_39 : f32 to vector<2x32xf32>
    %123 = arith.subf %122, %121 : vector<2x32xf32>
    %124 = math.exp %123 : vector<2x32xf32>
    %cst_40 = arith.constant 1.000000e+00 : f32
    %125 = vector.broadcast %cst_40 : f32 to vector<2x32xf32>
    %126 = arith.addf %125, %124 : vector<2x32xf32>
    %127 = tpu.reciprocal %126 {approx = true} : vector<2x32xf32> -> vector<2x32xf32>
    %128 = vector.extract_strided_slice %118 {offsets = [0, 32], sizes = [2, 32], strides = [1, 1]} : vector<2x128xf32> to vector<2x32xf32>
    %129 = vector.extract_strided_slice %88 {offsets = [0, 32], sizes = [2, 32], strides = [1, 1]} : vector<2x128xf32> to vector<2x32xf32>
    %130 = arith.addf %128, %129 : vector<2x32xf32>
    %cst_41 = arith.constant 0.000000e+00 : f32
    %131 = vector.broadcast %cst_41 : f32 to vector<2x32xf32>
    %132 = arith.subf %131, %130 : vector<2x32xf32>
    %133 = math.exp %132 : vector<2x32xf32>
    %cst_42 = arith.constant 1.000000e+00 : f32
    %134 = vector.broadcast %cst_42 : f32 to vector<2x32xf32>
    %135 = arith.addf %134, %133 : vector<2x32xf32>
    %136 = tpu.reciprocal %135 {approx = true} : vector<2x32xf32> -> vector<2x32xf32>
    %137 = vector.extract_strided_slice %118 {offsets = [0, 64], sizes = [2, 32], strides = [1, 1]} : vector<2x128xf32> to vector<2x32xf32>
    %138 = vector.extract_strided_slice %88 {offsets = [0, 64], sizes = [2, 32], strides = [1, 1]} : vector<2x128xf32> to vector<2x32xf32>
    %139 = arith.mulf %127, %138 : vector<2x32xf32>
    %140 = arith.addf %137, %139 : vector<2x32xf32>
    %141 = math.tanh %140 : vector<2x32xf32>
    %cst_43 = arith.constant 1.000000e+00 : f32
    %142 = vector.broadcast %cst_43 : f32 to vector<2x32xf32>
    %143 = arith.subf %142, %136 : vector<2x32xf32>
    %144 = arith.mulf %143, %141 : vector<2x32xf32>
    %145 = arith.mulf %136, %74 : vector<2x32xf32>
    %146 = arith.addf %144, %145 : vector<2x32xf32>
    %c2 = arith.constant 2 : index
    %c0_44 = arith.constant 0 : index
    %147 = vector.load %arg12[%c2, %c0_44] : memref<8x32xf32, #tpu.memory_space<vmem>>, vector<2x32xf32>
    tpu.vector_store %arg12[%c2, %c0_44], %117 {strides = array<i32>} : memref<8x32xf32, #tpu.memory_space<vmem>>, vector<2x32xf32>,
    %c4 = arith.constant 4 : index
    %c0_45 = arith.constant 0 : index
    %148 = vector.load %arg13[%c4, %c0_45] : memref<8x32xf32, #tpu.memory_space<vmem>>, vector<2x32xf32>
    tpu.vector_store %arg13[%c4, %c0_45], %146 {strides = array<i32>} : memref<8x32xf32, #tpu.memory_space<vmem>>, vector<2x32xf32>,
    %149 = arith.truncf %117 : vector<2x32xf32> to vector<2x32xbf16>
    %c0_46 = arith.constant 0 : index
    %c0_47 = arith.constant 0 : index
    %150 = vector.load %arg4[%c0_46, %c0_47] : memref<32x128xbf16, #tpu.memory_space<vmem>>, vector<32x128xbf16>
    %cst_48 = arith.constant dense<0.000000e+00> : vector<2x128xf32>
    %151 = tpu.matmul %149, %150, %cst_48 {dimension_numbers = #tpu.dot_dimension_numbers<[1], [0], [0], [1], [0, 0, 1, 1], [], []>} : vector<2x32xbf16>, vector<32x128xbf16>, vector<2x128xf32> -> vector<2x128xf32>
    %c0_49 = arith.constant 0 : index
    %c0_50 = arith.constant 0 : index
    %152 = vector.load %arg5[%c0_49, %c0_50] : memref<1x128xf32, #tpu.memory_space<vmem>>, vector<1x128xf32>
    %153 = vector.broadcast %152 : vector<1x128xf32> to vector<2x128xf32>
    %154 = arith.addf %151, %153 : vector<2x128xf32>
    %155 = arith.truncf %146 : vector<2x32xf32> to vector<2x32xbf16>
    %c0_51 = arith.constant 0 : index
    %c0_52 = arith.constant 0 : index
    %156 = vector.load %arg6[%c0_51, %c0_52] : memref<32x128xbf16, #tpu.memory_space<vmem>>, vector<32x128xbf16>
    %cst_53 = arith.constant dense<0.000000e+00> : vector<2x128xf32>
    %157 = tpu.matmul %155, %156, %cst_53 {dimension_numbers = #tpu.dot_dimension_numbers<[1], [0], [0], [1], [0, 0, 1, 1], [], []>} : vector<2x32xbf16>, vector<32x128xbf16>, vector<2x128xf32> -> vector<2x128xf32>
    %c0_54 = arith.constant 0 : index
    %c0_55 = arith.constant 0 : index
    %158 = vector.load %arg7[%c0_54, %c0_55] : memref<1x128xf32, #tpu.memory_space<vmem>>, vector<1x128xf32>
    %159 = vector.broadcast %158 : vector<1x128xf32> to vector<2x128xf32>
    %160 = arith.addf %157, %159 : vector<2x128xf32>
    %161 = vector.extract_strided_slice %6 {offsets = [4, 0], sizes = [2, 128], strides = [1, 1]} : vector<8x256xf32> to vector<2x128xf32>
    %162 = vector.extract_strided_slice %161 {offsets = [0, 0], sizes = [2, 32], strides = [1, 1]} : vector<2x128xf32> to vector<2x32xf32>
    %163 = vector.extract_strided_slice %154 {offsets = [0, 0], sizes = [2, 32], strides = [1, 1]} : vector<2x128xf32> to vector<2x32xf32>
    %164 = arith.addf %162, %163 : vector<2x32xf32>
    %cst_56 = arith.constant 0.000000e+00 : f32
    %165 = vector.broadcast %cst_56 : f32 to vector<2x32xf32>
    %166 = arith.subf %165, %164 : vector<2x32xf32>
    %167 = math.exp %166 : vector<2x32xf32>
    %cst_57 = arith.constant 1.000000e+00 : f32
    %168 = vector.broadcast %cst_57 : f32 to vector<2x32xf32>
    %169 = arith.addf %168, %167 : vector<2x32xf32>
    %170 = tpu.reciprocal %169 {approx = true} : vector<2x32xf32> -> vector<2x32xf32>
    %171 = vector.extract_strided_slice %161 {offsets = [0, 32], sizes = [2, 32], strides = [1, 1]} : vector<2x128xf32> to vector<2x32xf32>
    %172 = vector.extract_strided_slice %154 {offsets = [0, 32], sizes = [2, 32], strides = [1, 1]} : vector<2x128xf32> to vector<2x32xf32>
    %173 = arith.addf %171, %172 : vector<2x32xf32>
    %cst_58 = arith.constant 0.000000e+00 : f32
    %174 = vector.broadcast %cst_58 : f32 to vector<2x32xf32>
    %175 = arith.subf %174, %173 : vector<2x32xf32>
    %176 = math.exp %175 : vector<2x32xf32>
    %cst_59 = arith.constant 1.000000e+00 : f32
    %177 = vector.broadcast %cst_59 : f32 to vector<2x32xf32>
    %178 = arith.addf %177, %176 : vector<2x32xf32>
    %179 = tpu.reciprocal %178 {approx = true} : vector<2x32xf32> -> vector<2x32xf32>
    %180 = vector.extract_strided_slice %161 {offsets = [0, 64], sizes = [2, 32], strides = [1, 1]} : vector<2x128xf32> to vector<2x32xf32>
    %181 = vector.extract_strided_slice %154 {offsets = [0, 64], sizes = [2, 32], strides = [1, 1]} : vector<2x128xf32> to vector<2x32xf32>
    %182 = arith.mulf %170, %181 : vector<2x32xf32>
    %183 = arith.addf %180, %182 : vector<2x32xf32>
    %184 = math.tanh %183 : vector<2x32xf32>
    %cst_60 = arith.constant 1.000000e+00 : f32
    %185 = vector.broadcast %cst_60 : f32 to vector<2x32xf32>
    %186 = arith.subf %185, %179 : vector<2x32xf32>
    %187 = arith.mulf %186, %184 : vector<2x32xf32>
    %188 = arith.mulf %179, %117 : vector<2x32xf32>
    %189 = arith.addf %187, %188 : vector<2x32xf32>
    %190 = vector.extract_strided_slice %6 {offsets = [2, 128], sizes = [2, 128], strides = [1, 1]} : vector<8x256xf32> to vector<2x128xf32>
    %191 = vector.extract_strided_slice %190 {offsets = [0, 0], sizes = [2, 32], strides = [1, 1]} : vector<2x128xf32> to vector<2x32xf32>
    %192 = vector.extract_strided_slice %160 {offsets = [0, 0], sizes = [2, 32], strides = [1, 1]} : vector<2x128xf32> to vector<2x32xf32>
    %193 = arith.addf %191, %192 : vector<2x32xf32>
    %cst_61 = arith.constant 0.000000e+00 : f32
    %194 = vector.broadcast %cst_61 : f32 to vector<2x32xf32>
    %195 = arith.subf %194, %193 : vector<2x32xf32>
    %196 = math.exp %195 : vector<2x32xf32>
    %cst_62 = arith.constant 1.000000e+00 : f32
    %197 = vector.broadcast %cst_62 : f32 to vector<2x32xf32>
    %198 = arith.addf %197, %196 : vector<2x32xf32>
    %199 = tpu.reciprocal %198 {approx = true} : vector<2x32xf32> -> vector<2x32xf32>
    %200 = vector.extract_strided_slice %190 {offsets = [0, 32], sizes = [2, 32], strides = [1, 1]} : vector<2x128xf32> to vector<2x32xf32>
    %201 = vector.extract_strided_slice %160 {offsets = [0, 32], sizes = [2, 32], strides = [1, 1]} : vector<2x128xf32> to vector<2x32xf32>
    %202 = arith.addf %200, %201 : vector<2x32xf32>
    %cst_63 = arith.constant 0.000000e+00 : f32
    %203 = vector.broadcast %cst_63 : f32 to vector<2x32xf32>
    %204 = arith.subf %203, %202 : vector<2x32xf32>
    %205 = math.exp %204 : vector<2x32xf32>
    %cst_64 = arith.constant 1.000000e+00 : f32
    %206 = vector.broadcast %cst_64 : f32 to vector<2x32xf32>
    %207 = arith.addf %206, %205 : vector<2x32xf32>
    %208 = tpu.reciprocal %207 {approx = true} : vector<2x32xf32> -> vector<2x32xf32>
    %209 = vector.extract_strided_slice %190 {offsets = [0, 64], sizes = [2, 32], strides = [1, 1]} : vector<2x128xf32> to vector<2x32xf32>
    %210 = vector.extract_strided_slice %160 {offsets = [0, 64], sizes = [2, 32], strides = [1, 1]} : vector<2x128xf32> to vector<2x32xf32>
    %211 = arith.mulf %199, %210 : vector<2x32xf32>
    %212 = arith.addf %209, %211 : vector<2x32xf32>
    %213 = math.tanh %212 : vector<2x32xf32>
    %cst_65 = arith.constant 1.000000e+00 : f32
    %214 = vector.broadcast %cst_65 : f32 to vector<2x32xf32>
    %215 = arith.subf %214, %208 : vector<2x32xf32>
    %216 = arith.mulf %215, %213 : vector<2x32xf32>
    %217 = arith.mulf %208, %146 : vector<2x32xf32>
    %218 = arith.addf %216, %217 : vector<2x32xf32>
    %c4_66 = arith.constant 4 : index
    %c0_67 = arith.constant 0 : index
    %219 = vector.load %arg12[%c4_66, %c0_67] : memref<8x32xf32, #tpu.memory_space<vmem>>, vector<2x32xf32>
    tpu.vector_store %arg12[%c4_66, %c0_67], %189 {strides = array<i32>} : memref<8x32xf32, #tpu.memory_space<vmem>>, vector<2x32xf32>,
    %c2_68 = arith.constant 2 : index
    %c0_69 = arith.constant 0 : index
    %220 = vector.load %arg13[%c2_68, %c0_69] : memref<8x32xf32, #tpu.memory_space<vmem>>, vector<2x32xf32>
    tpu.vector_store %arg13[%c2_68, %c0_69], %218 {strides = array<i32>} : memref<8x32xf32, #tpu.memory_space<vmem>>, vector<2x32xf32>,
    %221 = arith.truncf %189 : vector<2x32xf32> to vector<2x32xbf16>
    %c0_70 = arith.constant 0 : index
    %c0_71 = arith.constant 0 : index
    %222 = vector.load %arg4[%c0_70, %c0_71] : memref<32x128xbf16, #tpu.memory_space<vmem>>, vector<32x128xbf16>
    %cst_72 = arith.constant dense<0.000000e+00> : vector<2x128xf32>
    %223 = tpu.matmul %221, %222, %cst_72 {dimension_numbers = #tpu.dot_dimension_numbers<[1], [0], [0], [1], [0, 0, 1, 1], [], []>} : vector<2x32xbf16>, vector<32x128xbf16>, vector<2x128xf32> -> vector<2x128xf32>
    %c0_73 = arith.constant 0 : index
    %c0_74 = arith.constant 0 : index
    %224 = vector.load %arg5[%c0_73, %c0_74] : memref<1x128xf32, #tpu.memory_space<vmem>>, vector<1x128xf32>
    %225 = vector.broadcast %224 : vector<1x128xf32> to vector<2x128xf32>
    %226 = arith.addf %223, %225 : vector<2x128xf32>
    %227 = arith.truncf %218 : vector<2x32xf32> to vector<2x32xbf16>
    %c0_75 = arith.constant 0 : index
    %c0_76 = arith.constant 0 : index
    %228 = vector.load %arg6[%c0_75, %c0_76] : memref<32x128xbf16, #tpu.memory_space<vmem>>, vector<32x128xbf16>
    %cst_77 = arith.constant dense<0.000000e+00> : vector<2x128xf32>
    %229 = tpu.matmul %227, %228, %cst_77 {dimension_numbers = #tpu.dot_dimension_numbers<[1], [0], [0], [1], [0, 0, 1, 1], [], []>} : vector<2x32xbf16>, vector<32x128xbf16>, vector<2x128xf32> -> vector<2x128xf32>
    %c0_78 = arith.constant 0 : index
    %c0_79 = arith.constant 0 : index
    %230 = vector.load %arg7[%c0_78, %c0_79] : memref<1x128xf32, #tpu.memory_space<vmem>>, vector<1x128xf32>
    %231 = vector.broadcast %230 : vector<1x128xf32> to vector<2x128xf32>
    %232 = arith.addf %229, %231 : vector<2x128xf32>
    %233 = vector.extract_strided_slice %6 {offsets = [6, 0], sizes = [2, 128], strides = [1, 1]} : vector<8x256xf32> to vector<2x128xf32>
    %234 = vector.extract_strided_slice %233 {offsets = [0, 0], sizes = [2, 32], strides = [1, 1]} : vector<2x128xf32> to vector<2x32xf32>
    %235 = vector.extract_strided_slice %226 {offsets = [0, 0], sizes = [2, 32], strides = [1, 1]} : vector<2x128xf32> to vector<2x32xf32>
    %236 = arith.addf %234, %235 : vector<2x32xf32>
    %cst_80 = arith.constant 0.000000e+00 : f32
    %237 = vector.broadcast %cst_80 : f32 to vector<2x32xf32>
    %238 = arith.subf %237, %236 : vector<2x32xf32>
    %239 = math.exp %238 : vector<2x32xf32>
    %cst_81 = arith.constant 1.000000e+00 : f32
    %240 = vector.broadcast %cst_81 : f32 to vector<2x32xf32>
    %241 = arith.addf %240, %239 : vector<2x32xf32>
    %242 = tpu.reciprocal %241 {approx = true} : vector<2x32xf32> -> vector<2x32xf32>
    %243 = vector.extract_strided_slice %233 {offsets = [0, 32], sizes = [2, 32], strides = [1, 1]} : vector<2x128xf32> to vector<2x32xf32>
    %244 = vector.extract_strided_slice %226 {offsets = [0, 32], sizes = [2, 32], strides = [1, 1]} : vector<2x128xf32> to vector<2x32xf32>
    %245 = arith.addf %243, %244 : vector<2x32xf32>
    %cst_82 = arith.constant 0.000000e+00 : f32
    %246 = vector.broadcast %cst_82 : f32 to vector<2x32xf32>
    %247 = arith.subf %246, %245 : vector<2x32xf32>
    %248 = math.exp %247 : vector<2x32xf32>
    %cst_83 = arith.constant 1.000000e+00 : f32
    %249 = vector.broadcast %cst_83 : f32 to vector<2x32xf32>
    %250 = arith.addf %249, %248 : vector<2x32xf32>
    %251 = tpu.reciprocal %250 {approx = true} : vector<2x32xf32> -> vector<2x32xf32>
    %252 = vector.extract_strided_slice %233 {offsets = [0, 64], sizes = [2, 32], strides = [1, 1]} : vector<2x128xf32> to vector<2x32xf32>
    %253 = vector.extract_strided_slice %226 {offsets = [0, 64], sizes = [2, 32], strides = [1, 1]} : vector<2x128xf32> to vector<2x32xf32>
    %254 = arith.mulf %242, %253 : vector<2x32xf32>
    %255 = arith.addf %252, %254 : vector<2x32xf32>
    %256 = math.tanh %255 : vector<2x32xf32>
    %cst_84 = arith.constant 1.000000e+00 : f32
    %257 = vector.broadcast %cst_84 : f32 to vector<2x32xf32>
    %258 = arith.subf %257, %251 : vector<2x32xf32>
    %259 = arith.mulf %258, %256 : vector<2x32xf32>
    %260 = arith.mulf %251, %189 : vector<2x32xf32>
    %261 = arith.addf %259, %260 : vector<2x32xf32>
    %262 = vector.extract_strided_slice %6 {offsets = [0, 128], sizes = [2, 128], strides = [1, 1]} : vector<8x256xf32> to vector<2x128xf32>
    %263 = vector.extract_strided_slice %262 {offsets = [0, 0], sizes = [2, 32], strides = [1, 1]} : vector<2x128xf32> to vector<2x32xf32>
    %264 = vector.extract_strided_slice %232 {offsets = [0, 0], sizes = [2, 32], strides = [1, 1]} : vector<2x128xf32> to vector<2x32xf32>
    %265 = arith.addf %263, %264 : vector<2x32xf32>
    %cst_85 = arith.constant 0.000000e+00 : f32
    %266 = vector.broadcast %cst_85 : f32 to vector<2x32xf32>
    %267 = arith.subf %266, %265 : vector<2x32xf32>
    %268 = math.exp %267 : vector<2x32xf32>
    %cst_86 = arith.constant 1.000000e+00 : f32
    %269 = vector.broadcast %cst_86 : f32 to vector<2x32xf32>
    %270 = arith.addf %269, %268 : vector<2x32xf32>
    %271 = tpu.reciprocal %270 {approx = true} : vector<2x32xf32> -> vector<2x32xf32>
    %272 = vector.extract_strided_slice %262 {offsets = [0, 32], sizes = [2, 32], strides = [1, 1]} : vector<2x128xf32> to vector<2x32xf32>
    %273 = vector.extract_strided_slice %232 {offsets = [0, 32], sizes = [2, 32], strides = [1, 1]} : vector<2x128xf32> to vector<2x32xf32>
    %274 = arith.addf %272, %273 : vector<2x32xf32>
    %cst_87 = arith.constant 0.000000e+00 : f32
    %275 = vector.broadcast %cst_87 : f32 to vector<2x32xf32>
    %276 = arith.subf %275, %274 : vector<2x32xf32>
    %277 = math.exp %276 : vector<2x32xf32>
    %cst_88 = arith.constant 1.000000e+00 : f32
    %278 = vector.broadcast %cst_88 : f32 to vector<2x32xf32>
    %279 = arith.addf %278, %277 : vector<2x32xf32>
    %280 = tpu.reciprocal %279 {approx = true} : vector<2x32xf32> -> vector<2x32xf32>
    %281 = vector.extract_strided_slice %262 {offsets = [0, 64], sizes = [2, 32], strides = [1, 1]} : vector<2x128xf32> to vector<2x32xf32>
    %282 = vector.extract_strided_slice %232 {offsets = [0, 64], sizes = [2, 32], strides = [1, 1]} : vector<2x128xf32> to vector<2x32xf32>
    %283 = arith.mulf %271, %282 : vector<2x32xf32>
    %284 = arith.addf %281, %283 : vector<2x32xf32>
    %285 = math.tanh %284 : vector<2x32xf32>
    %cst_89 = arith.constant 1.000000e+00 : f32
    %286 = vector.broadcast %cst_89 : f32 to vector<2x32xf32>
    %287 = arith.subf %286, %280 : vector<2x32xf32>
    %288 = arith.mulf %287, %285 : vector<2x32xf32>
    %289 = arith.mulf %280, %218 : vector<2x32xf32>
    %290 = arith.addf %288, %289 : vector<2x32xf32>
    %c6_90 = arith.constant 6 : index
    %c0_91 = arith.constant 0 : index
    %291 = vector.load %arg12[%c6_90, %c0_91] : memref<8x32xf32, #tpu.memory_space<vmem>>, vector<2x32xf32>
    tpu.vector_store %arg12[%c6_90, %c0_91], %261 {strides = array<i32>} : memref<8x32xf32, #tpu.memory_space<vmem>>, vector<2x32xf32>,
    %c0_92 = arith.constant 0 : index
    %c0_93 = arith.constant 0 : index
    %292 = vector.load %arg13[%c0_92, %c0_93] : memref<8x32xf32, #tpu.memory_space<vmem>>, vector<2x32xf32>
    tpu.vector_store %arg13[%c0_92, %c0_93], %290 {strides = array<i32>} : memref<8x32xf32, #tpu.memory_space<vmem>>, vector<2x32xf32>,
    %c0_94 = arith.constant 0 : index
    %c0_95 = arith.constant 0 : index
    %293 = vector.load %arg12[%c0_94, %c0_95] : memref<8x32xf32, #tpu.memory_space<vmem>>, vector<8x32xf32>
    %c0_96 = arith.constant 0 : index
    %c0_97 = arith.constant 0 : index
    %294 = vector.load %arg13[%c0_96, %c0_97] : memref<8x32xf32, #tpu.memory_space<vmem>>, vector<8x32xf32>
    %295 = arith.truncf %293 : vector<8x32xf32> to vector<8x32xbf16>
    %c0_98 = arith.constant 0 : index
    %c0_99 = arith.constant 0 : index
    %296 = vector.load %arg8[%c0_98, %c0_99] : memref<32x128xbf16, #tpu.memory_space<vmem>>, vector<32x128xbf16>
    %cst_100 = arith.constant dense<0.000000e+00> : vector<8x128xf32>
    %297 = tpu.matmul %295, %296, %cst_100 {dimension_numbers = #tpu.dot_dimension_numbers<[1], [0], [0], [1], [0, 0, 1, 1], [], []>} : vector<8x32xbf16>, vector<32x128xbf16>, vector<8x128xf32> -> vector<8x128xf32>
    %298 = arith.truncf %294 : vector<8x32xf32> to vector<8x32xbf16>
    %c0_101 = arith.constant 0 : index
    %c0_102 = arith.constant 0 : index
    %299 = vector.load %arg9[%c0_101, %c0_102] : memref<32x128xbf16, #tpu.memory_space<vmem>>, vector<32x128xbf16>
    %cst_103 = arith.constant dense<0.000000e+00> : vector<8x128xf32>
    %300 = tpu.matmul %298, %299, %cst_103 {dimension_numbers = #tpu.dot_dimension_numbers<[1], [0], [0], [1], [0, 0, 1, 1], [], []>} : vector<8x32xbf16>, vector<32x128xbf16>, vector<8x128xf32> -> vector<8x128xf32>
    %301 = arith.addf %297, %300 : vector<8x128xf32>
    %c0_104 = arith.constant 0 : index
    %c0_105 = arith.constant 0 : index
    %302 = vector.load %arg10[%c0_104, %c0_105] : memref<1x128xf32, #tpu.memory_space<vmem>>, vector<1x128xf32>
    %303 = vector.broadcast %302 : vector<1x128xf32> to vector<8x128xf32>
    %304 = arith.addf %301, %303 : vector<8x128xf32>
    %cst_106 = arith.constant 5.000000e-01 : f32
    %305 = vector.broadcast %cst_106 : f32 to vector<8x128xf32>
    %306 = arith.mulf %305, %304 : vector<8x128xf32>
    %cst_107 = arith.constant 4.471500e-02 : f32
    %307 = vector.broadcast %cst_107 : f32 to vector<8x128xf32>
    %308 = arith.mulf %307, %304 : vector<8x128xf32>
    %309 = arith.mulf %308, %304 : vector<8x128xf32>
    %310 = arith.mulf %309, %304 : vector<8x128xf32>
    %311 = arith.addf %304, %310 : vector<8x128xf32>
    %cst_108 = arith.constant 0.797884583 : f32
    %312 = vector.broadcast %cst_108 : f32 to vector<8x128xf32>
    %313 = arith.mulf %312, %311 : vector<8x128xf32>
    %314 = math.tanh %313 : vector<8x128xf32>
    %cst_109 = arith.constant 1.000000e+00 : f32
    %315 = vector.broadcast %cst_109 : f32 to vector<8x128xf32>
    %316 = arith.addf %315, %314 : vector<8x128xf32>
    %317 = arith.mulf %306, %316 : vector<8x128xf32>
    %318 = vector.extract_strided_slice %317 {offsets = [0, 0], sizes = [2, 128], strides = [1, 1]} : vector<8x128xf32> to vector<2x128xf32>
    %319 = vector.extract_strided_slice %317 {offsets = [2, 0], sizes = [2, 128], strides = [1, 1]} : vector<8x128xf32> to vector<2x128xf32>
    %320 = arith.addf %318, %319 : vector<2x128xf32>
    %321 = vector.extract_strided_slice %317 {offsets = [4, 0], sizes = [2, 128], strides = [1, 1]} : vector<8x128xf32> to vector<2x128xf32>
    %322 = arith.addf %320, %321 : vector<2x128xf32>
    %323 = vector.extract_strided_slice %317 {offsets = [6, 0], sizes = [2, 128], strides = [1, 1]} : vector<8x128xf32> to vector<2x128xf32>
    %324 = arith.addf %322, %323 : vector<2x128xf32>
    %cst_110 = arith.constant 2.500000e-01 : f32
    %325 = vector.broadcast %cst_110 : f32 to vector<2x128xf32>
    %326 = arith.mulf %324, %325 : vector<2x128xf32>
    %c0_111 = arith.constant 0 : index
    %c0_112 = arith.constant 0 : index
    %327 = vector.load %arg11[%c0_111, %c0_112] : memref<2x128xf32, #tpu.memory_space<vmem>>, vector<2x128xf32>
    tpu.vector_store %arg11[%c0_111, %c0_112], %326 {strides = array<i32>} : memref<2x128xf32, #tpu.memory_space<vmem>>, vector<2x128xf32>,
    return
  }
  func.func @transform_0(%arg0: i32) -> (i32, i32) {
    %c0_i32 = arith.constant 0 : i32
    %c0_i32_0 = arith.constant 0 : i32
    %c0_i32_1 = arith.constant 0 : i32
    return %c0_i32, %c0_i32_0 : i32, i32
  }
  func.func @transform_1(%arg0: i32) -> (i32, i32) {
    %c0_i32 = arith.constant 0 : i32
    %c0_i32_0 = arith.constant 0 : i32
    %c0_i32_1 = arith.constant 0 : i32
    return %c0_i32, %c0_i32_0 : i32, i32
  }
  func.func @transform_2(%arg0: i32) -> (i32, i32) {
    %c0_i32 = arith.constant 0 : i32
    %c0_i32_0 = arith.constant 0 : i32
    %c0_i32_1 = arith.constant 0 : i32
    return %c0_i32, %c0_i32_0 : i32, i32
  }
  func.func @transform_3(%arg0: i32) -> (i32, i32) {
    %c0_i32 = arith.constant 0 : i32
    %c0_i32_0 = arith.constant 0 : i32
    %c0_i32_1 = arith.constant 0 : i32
    return %c0_i32, %c0_i32_0 : i32, i32
  }
  func.func @transform_4(%arg0: i32) -> (i32, i32) {
    %c0_i32 = arith.constant 0 : i32
    %c0_i32_0 = arith.constant 0 : i32
    %c0_i32_1 = arith.constant 0 : i32
    return %c0_i32, %c0_i32_0 : i32, i32
  }
  func.func @transform_5(%arg0: i32) -> (i32, i32) {
    %c0_i32 = arith.constant 0 : i32
    %c0_i32_0 = arith.constant 0 : i32
    %c0_i32_1 = arith.constant 0 : i32
    return %c0_i32, %c0_i32_0 : i32, i32
  }
  func.func @transform_6(%arg0: i32) -> (i32, i32) {
    %c0_i32 = arith.constant 0 : i32
    %c0_i32_0 = arith.constant 0 : i32
    %c0_i32_1 = arith.constant 0 : i32
    return %c0_i32, %c0_i32_0 : i32, i32
  }
  func.func @transform_7(%arg0: i32) -> (i32, i32) {
    %c0_i32 = arith.constant 0 : i32
    %c0_i32_0 = arith.constant 0 : i32
    %c0_i32_1 = arith.constant 0 : i32
    return %c0_i32, %c0_i32_0 : i32, i32
  }
  func.func @transform_8(%arg0: i32) -> (i32, i32) {
    %c0_i32 = arith.constant 0 : i32
    %c0_i32_0 = arith.constant 0 : i32
    %c0_i32_1 = arith.constant 0 : i32
    return %c0_i32, %c0_i32_0 : i32, i32
  }
  func.func @transform_9(%arg0: i32) -> (i32, i32) {
    %c0_i32 = arith.constant 0 : i32
    %c0_i32_0 = arith.constant 0 : i32
    %c0_i32_1 = arith.constant 0 : i32
    return %c0_i32, %c0_i32_0 : i32, i32
  }
  func.func @transform_10(%arg0: i32) -> (i32, i32) {
    %c0_i32 = arith.constant 0 : i32
    %c0_i32_0 = arith.constant 0 : i32
    %c0_i32_1 = arith.constant 0 : i32
    return %c0_i32, %c0_i32_0 : i32, i32
  }
}

</mosaic_0001>

<llo_original>
// kernel: avg_modal_model.5
$region0: #{avg_modal_model.5}
  #allocation0 [shape = 'u32[]', space=smem, size = 0x4, offset = 0x4, fixed_abs, tag = 'smem constant byte address 0x4 - core index']
  #allocation1 [shape = 'u32[72,128]{1,0:T(1,128)}', space=vmem, size = 0x9000, scoped, tag = 'internal scratch']
  %s0 = inlined_call_operand.vmem [shape: f32[16,768], index: 0, kind: input, shape index: {}]
  %s1 = inlined_call_operand.vmem [shape: f32[2,128], index: 1, kind: input, shape index: {}]
  %s2 = inlined_call_operand.vmem [shape: f32[2,128], index: 2, kind: input, shape index: {}]
  %s3 = inlined_call_operand.vmem [shape: bf16[768,128], index: 3, kind: input, shape index: {}]
  %s4 = inlined_call_operand.vmem [shape: f32[1,128], index: 4, kind: input, shape index: {}]
  %s5 = inlined_call_operand.vmem [shape: bf16[128,256], index: 5, kind: input, shape index: {}]
  %s6 = inlined_call_operand.vmem [shape: f32[1,256], index: 6, kind: input, shape index: {}]
  %s7 = inlined_call_operand.vmem [shape: bf16[256,128], index: 7, kind: input, shape index: {}]
  %s8 = inlined_call_operand.vmem [shape: f32[1,128], index: 8, kind: input, shape index: {}]
  %s9 = inlined_call_operand.hbm [shape: f32[2,128], index: 9, kind: output, shape index: {}]
  %s10 = sld [smem:[#allocation0]]
  $region46: #{avg_modal_model.5} parent=0
    _
  %s12 = ssub.s32 1, %s10
  %s13 = scalar_select 0, %s12, %s10
  $region1: #{avg_modal_model.5} parent=0
    #allocation2 [shape = 'u8[1024]{0}', space=vmem, size = 0x400, scoped, tag = 'output window, operand 0, single buffered']
    #allocation3 [shape = 's32[1]{0}', space=sflag, size = 0x4, scoped, tag = 'scoped memory for avg_modal_model.5']
    %14 = vsyncpa [#allocation3], 0
    // Predicated region
    $region2: #{avg_modal_model.5} parent=1 // pred_check
      _
    $region3: #{avg_modal_model.5} parent=1 // pred_check_branch
      %16 = sbr.rel (0) target = $region5
    $region4: #{avg_modal_model.5} parent=1 // pred_region
      _
    $region5: #{avg_modal_model.5} parent=1 // pred_fallthru
      _
    // Predicated region
    $region6: #{avg_modal_model.5} parent=1 // pred_check
      _
    $region7: #{avg_modal_model.5} parent=1 // pred_check_branch
      %18 = sbr.rel (0) target = $region9
    $region8: #{avg_modal_model.5} parent=1 // pred_region
      _
    $region9: #{avg_modal_model.5} parent=1 // pred_fallthru
      _
    // Predicated region
    $region10: #{avg_modal_model.5} parent=1 // pred_check
      _
    $region11: #{avg_modal_model.5} parent=1 // pred_check_branch
      %20 = sbr.rel (0) target = $region13
    $region12: #{avg_modal_model.5} parent=1 // pred_region
      _
    $region13: #{avg_modal_model.5} parent=1 // pred_fallthru
      _
    // Predicated region
    $region14: #{avg_modal_model.5} parent=1 // pred_check
      _
    $region15: #{avg_modal_model.5} parent=1 // pred_check_branch
      %22 = sbr.rel (0) target = $region17
    $region16: #{avg_modal_model.5} parent=1 // pred_region
      _
    $region17: #{avg_modal_model.5} parent=1 // pred_fallthru
      _
    // Predicated region
    $region18: #{avg_modal_model.5} parent=1 // pred_check
      _
    $region19: #{avg_modal_model.5} parent=1 // pred_check_branch
      %24 = sbr.rel (0) target = $region21
    $region20: #{avg_modal_model.5} parent=1 // pred_region
      _
    $region21: #{avg_modal_model.5} parent=1 // pred_fallthru
      _
    // Predicated region
    $region22: #{avg_modal_model.5} parent=1 // pred_check
      _
    $region23: #{avg_modal_model.5} parent=1 // pred_check_branch
      %26 = sbr.rel (0) target = $region25
    $region24: #{avg_modal_model.5} parent=1 // pred_region
      _
    $region25: #{avg_modal_model.5} parent=1 // pred_fallthru
      _
    // Predicated region
    $region26: #{avg_modal_model.5} parent=1 // pred_check
      _
    $region27: #{avg_modal_model.5} parent=1 // pred_check_branch
      %28 = sbr.rel (0) target = $region29
    $region28: #{avg_modal_model.5} parent=1 // pred_region
      _
    $region29: #{avg_modal_model.5} parent=1 // pred_fallthru
      _
    // Predicated region
    $region30: #{avg_modal_model.5} parent=1 // pred_check
      _
    $region31: #{avg_modal_model.5} parent=1 // pred_check_branch
      %30 = sbr.rel (0) target = $region33
    $region32: #{avg_modal_model.5} parent=1 // pred_region
      _
    $region33: #{avg_modal_model.5} parent=1 // pred_fallthru
      _
    // Predicated region
    $region34: #{avg_modal_model.5} parent=1 // pred_check
      _
    $region35: #{avg_modal_model.5} parent=1 // pred_check_branch
      %32 = sbr.rel (0) target = $region37
    $region36: #{avg_modal_model.5} parent=1 // pred_region
      _
    $region37: #{avg_modal_model.5} parent=1 // pred_fallthru
      _
    %v33 = vld [vmem:[%s0] sm:$0xff]
    %v34 = vld [vmem:[%s0 + $0x8] sm:$0xff]
    %v35 = vld [vmem:[%s0 + $0x10] sm:$0xff]
    %v36 = vld [vmem:[%s0 + $0x18] sm:$0xff]
    %v37 = vld [vmem:[%s0 + $0x20] sm:$0xff]
    %v38 = vld [vmem:[%s0 + $0x28] sm:$0xff]
    %v39 = vld [vmem:[%s0 + $0x30] sm:$0xff]
    %v40 = vld [vmem:[%s0 + $0x38] sm:$0xff]
    %v41 = vld [vmem:[%s0 + $0x40] sm:$0xff]
    %v42 = vld [vmem:[%s0 + $0x48] sm:$0xff]
    %v43 = vld [vmem:[%s0 + $0x50] sm:$0xff]
    %v44 = vld [vmem:[%s0 + $0x58] sm:$0xff]
    %v45 = vpack.c.bf16 %v39, %v33
    %v46 = vpack.c.bf16 %v40, %v34
    %v47 = vpack.c.bf16 %v41, %v35
    %v48 = vpack.c.bf16 %v42, %v36
    %v49 = vpack.c.bf16 %v43, %v37
    %v50 = vpack.c.bf16 %v44, %v38
    %v51 = vld [vmem:[%s3] sm:$0xf]
    %v52 = vld [vmem:[%s3 + $0x4] sm:$0xf]
    %v53 = vld [vmem:[%s3 + $0x8] sm:$0xf]
    %v54 = vld [vmem:[%s3 + $0xc] sm:$0xf]
    %v55 = vld [vmem:[%s3 + $0x10] sm:$0xf]
    %v56 = vld [vmem:[%s3 + $0x14] sm:$0xf]
    %v57 = vld [vmem:[%s3 + $0x18] sm:$0xf]
    %v58 = vld [vmem:[%s3 + $0x1c] sm:$0xf]
    %v59 = vld [vmem:[%s3 + $0x20] sm:$0xf]
    %v60 = vld [vmem:[%s3 + $0x24] sm:$0xf]
    %v61 = vld [vmem:[%s3 + $0x28] sm:$0xf]
    %v62 = vld [vmem:[%s3 + $0x2c] sm:$0xf]
    %v63 = vld [vmem:[%s3 + $0x30] sm:$0xf]
    %v64 = vld [vmem:[%s3 + $0x34] sm:$0xf]
    %v65 = vld [vmem:[%s3 + $0x38] sm:$0xf]
    %v66 = vld [vmem:[%s3 + $0x3c] sm:$0xf]
    %v67 = vld [vmem:[%s3 + $0x40] sm:$0xf]
    %v68 = vld [vmem:[%s3 + $0x44] sm:$0xf]
    %v69 = vld [vmem:[%s3 + $0x48] sm:$0xf]
    %v70 = vld [vmem:[%s3 + $0x4c] sm:$0xf]
    %v71 = vld [vmem:[%s3 + $0x50] sm:$0xf]
    %v72 = vld [vmem:[%s3 + $0x54] sm:$0xf]
    %v73 = vld [vmem:[%s3 + $0x58] sm:$0xf]
    %v74 = vld [vmem:[%s3 + $0x5c] sm:$0xf]
    %v75 = vld [vmem:[%s3 + $0x60] sm:$0xf]
    %v76 = vld [vmem:[%s3 + $0x64] sm:$0xf]
    %v77 = vld [vmem:[%s3 + $0x68] sm:$0xf]
    %v78 = vld [vmem:[%s3 + $0x6c] sm:$0xf]
    %v79 = vld [vmem:[%s3 + $0x70] sm:$0xf]
    %v80 = vld [vmem:[%s3 + $0x74] sm:$0xf]
    %v81 = vld [vmem:[%s3 + $0x78] sm:$0xf]
    %v82 = vld [vmem:[%s3 + $0x7c] sm:$0xf]
    %v83 = vld [vmem:[%s3 + $0x80] sm:$0xf]
    %v84 = vld [vmem:[%s3 + $0x84] sm:$0xf]
    %v85 = vld [vmem:[%s3 + $0x88] sm:$0xf]
    %v86 = vld [vmem:[%s3 + $0x8c] sm:$0xf]
    %v87 = vld [vmem:[%s3 + $0x90] sm:$0xf]
    %v88 = vld [vmem:[%s3 + $0x94] sm:$0xf]
    %v89 = vld [vmem:[%s3 + $0x98] sm:$0xf]
    %v90 = vld [vmem:[%s3 + $0x9c] sm:$0xf]
    %v91 = vld [vmem:[%s3 + $0xa0] sm:$0xf]
    %v92 = vld [vmem:[%s3 + $0xa4] sm:$0xf]
    %v93 = vld [vmem:[%s3 + $0xa8] sm:$0xf]
    %v94 = vld [vmem:[%s3 + $0xac] sm:$0xf]
    %v95 = vld [vmem:[%s3 + $0xb0] sm:$0xf]
    %v96 = vld [vmem:[%s3 + $0xb4] sm:$0xf]
    %v97 = vld [vmem:[%s3 + $0xb8] sm:$0xf]
    %v98 = vld [vmem:[%s3 + $0xbc] sm:$0xf]
    %v99 = vld [vmem:[%s3 + $0xc0] sm:$0xf]
    %v100 = vld [vmem:[%s3 + $0xc4] sm:$0xf]
    %v101 = vld [vmem:[%s3 + $0xc8] sm:$0xf]
    %v102 = vld [vmem:[%s3 + $0xcc] sm:$0xf]
    %v103 = vld [vmem:[%s3 + $0xd0] sm:$0xf]
    %v104 = vld [vmem:[%s3 + $0xd4] sm:$0xf]
    %v105 = vld [vmem:[%s3 + $0xd8] sm:$0xf]
    %v106 = vld [vmem:[%s3 + $0xdc] sm:$0xf]
    %v107 = vld [vmem:[%s3 + $0xe0] sm:$0xf]
    %v108 = vld [vmem:[%s3 + $0xe4] sm:$0xf]
    %v109 = vld [vmem:[%s3 + $0xe8] sm:$0xf]
    %v110 = vld [vmem:[%s3 + $0xec] sm:$0xf]
    %v111 = vld [vmem:[%s3 + $0xf0] sm:$0xf]
    %v112 = vld [vmem:[%s3 + $0xf4] sm:$0xf]
    %v113 = vld [vmem:[%s3 + $0xf8] sm:$0xf]
    %v114 = vld [vmem:[%s3 + $0xfc] sm:$0xf]
    %v115 = vld [vmem:[%s3 + $0x100] sm:$0xf]
    %v116 = vld [vmem:[%s3 + $0x104] sm:$0xf]
    %v117 = vld [vmem:[%s3 + $0x108] sm:$0xf]
    %v118 = vld [vmem:[%s3 + $0x10c] sm:$0xf]
    %v119 = vld [vmem:[%s3 + $0x110] sm:$0xf]
    %v120 = vld [vmem:[%s3 + $0x114] sm:$0xf]
    %v121 = vld [vmem:[%s3 + $0x118] sm:$0xf]
    %v122 = vld [vmem:[%s3 + $0x11c] sm:$0xf]
    %v123 = vld [vmem:[%s3 + $0x120] sm:$0xf]
    %v124 = vld [vmem:[%s3 + $0x124] sm:$0xf]
    %v125 = vld [vmem:[%s3 + $0x128] sm:$0xf]
    %v126 = vld [vmem:[%s3 + $0x12c] sm:$0xf]
    %v127 = vld [vmem:[%s3 + $0x130] sm:$0xf]
    %v128 = vld [vmem:[%s3 + $0x134] sm:$0xf]
    %v129 = vld [vmem:[%s3 + $0x138] sm:$0xf]
    %v130 = vld [vmem:[%s3 + $0x13c] sm:$0xf]
    %v131 = vld [vmem:[%s3 + $0x140] sm:$0xf]
    %v132 = vld [vmem:[%s3 + $0x144] sm:$0xf]
    %v133 = vld [vmem:[%s3 + $0x148] sm:$0xf]
    %v134 = vld [vmem:[%s3 + $0x14c] sm:$0xf]
    %v135 = vld [vmem:[%s3 + $0x150] sm:$0xf]
    %v136 = vld [vmem:[%s3 + $0x154] sm:$0xf]
    %v137 = vld [vmem:[%s3 + $0x158] sm:$0xf]
    %v138 = vld [vmem:[%s3 + $0x15c] sm:$0xf]
    %v139 = vld [vmem:[%s3 + $0x160] sm:$0xf]
    %v140 = vld [vmem:[%s3 + $0x164] sm:$0xf]
    %v141 = vld [vmem:[%s3 + $0x168] sm:$0xf]
    %v142 = vld [vmem:[%s3 + $0x16c] sm:$0xf]
    %v143 = vld [vmem:[%s3 + $0x170] sm:$0xf]
    %v144 = vld [vmem:[%s3 + $0x174] sm:$0xf]
    %v145 = vld [vmem:[%s3 + $0x178] sm:$0xf]
    %v146 = vld [vmem:[%s3 + $0x17c] sm:$0xf]
    %v147 = vld [vmem:[%s4] sm:$0x1]
    %v149 = vperm.slane %v147, 0
    %v247 = vunpack.c.l.b16 %v51
    %v248 = vunpack.c.l.b16 %v52
    %v249 = vunpack.c.l.b16 %v53
    %v250 = vunpack.c.l.b16 %v54
    %v251 = vunpack.c.l.b16 %v55
    %v252 = vunpack.c.l.b16 %v56
    %v253 = vunpack.c.l.b16 %v57
    %v254 = vunpack.c.l.b16 %v58
    %v255 = vunpack.c.l.b16 %v59
    %v256 = vunpack.c.l.b16 %v60
    %v257 = vunpack.c.l.b16 %v61
    %v258 = vunpack.c.l.b16 %v62
    %v259 = vunpack.c.l.b16 %v63
    %v260 = vunpack.c.l.b16 %v64
    %v261 = vunpack.c.l.b16 %v65
    %v262 = vunpack.c.l.b16 %v66
    %v263 = vunpack.c.l.b16 %v67
    %v264 = vunpack.c.l.b16 %v68
    %v265 = vunpack.c.l.b16 %v69
    %v266 = vunpack.c.l.b16 %v70
    %v267 = vunpack.c.l.b16 %v71
    %v268 = vunpack.c.l.b16 %v72
    %v269 = vunpack.c.l.b16 %v73
    %v270 = vunpack.c.l.b16 %v74
    %v271 = vunpack.c.l.b16 %v75
    %v272 = vunpack.c.l.b16 %v76
    %v273 = vunpack.c.l.b16 %v77
    %v274 = vunpack.c.l.b16 %v78
    %v275 = vunpack.c.l.b16 %v79
    %v276 = vunpack.c.l.b16 %v80
    %v277 = vunpack.c.l.b16 %v81
    %v278 = vunpack.c.l.b16 %v82
    %v279 = vunpack.c.l.b16 %v83
    %v280 = vunpack.c.l.b16 %v84
    %v281 = vunpack.c.l.b16 %v85
    %v282 = vunpack.c.l.b16 %v86
    %v283 = vunpack.c.l.b16 %v87
    %v284 = vunpack.c.l.b16 %v88
    %v285 = vunpack.c.l.b16 %v89
    %v286 = vunpack.c.l.b16 %v90
    %v287 = vunpack.c.l.b16 %v91
    %v288 = vunpack.c.l.b16 %v92
    %v289 = vunpack.c.l.b16 %v93
    %v290 = vunpack.c.l.b16 %v94
    %v291 = vunpack.c.l.b16 %v95
    %v292 = vunpack.c.l.b16 %v96
    %v293 = vunpack.c.l.b16 %v97
    %v294 = vunpack.c.l.b16 %v98
    %v295 = vunpack.c.l.b16 %v99
    %v296 = vunpack.c.l.b16 %v100
    %v297 = vunpack.c.l.b16 %v101
    %v298 = vunpack.c.l.b16 %v102
    %v299 = vunpack.c.l.b16 %v103
    %v300 = vunpack.c.l.b16 %v104
    %v301 = vunpack.c.l.b16 %v105
    %v302 = vunpack.c.l.b16 %v106
    %v303 = vunpack.c.l.b16 %v107
    %v304 = vunpack.c.l.b16 %v108
    %v305 = vunpack.c.l.b16 %v109
    %v306 = vunpack.c.l.b16 %v110
    %v307 = vunpack.c.l.b16 %v111
    %v308 = vunpack.c.l.b16 %v112
    %v309 = vunpack.c.l.b16 %v113
    %v310 = vunpack.c.l.b16 %v114
    %v311 = vunpack.c.l.b16 %v115
    %v312 = vunpack.c.l.b16 %v116
    %v313 = vunpack.c.l.b16 %v117
    %v314 = vunpack.c.l.b16 %v118
    %v315 = vunpack.c.l.b16 %v119
    %v316 = vunpack.c.l.b16 %v120
    %v317 = vunpack.c.l.b16 %v121
    %v318 = vunpack.c.l.b16 %v122
    %v319 = vunpack.c.l.b16 %v123
    %v320 = vunpack.c.l.b16 %v124
    %v321 = vunpack.c.l.b16 %v125
    %v322 = vunpack.c.l.b16 %v126
    %v323 = vunpack.c.l.b16 %v127
    %v324 = vunpack.c.l.b16 %v128
    %v325 = vunpack.c.l.b16 %v129
    %v326 = vunpack.c.l.b16 %v130
    %v327 = vunpack.c.l.b16 %v131
    %v328 = vunpack.c.l.b16 %v132
    %v329 = vunpack.c.l.b16 %v133
    %v330 = vunpack.c.l.b16 %v134
    %v331 = vunpack.c.l.b16 %v135
    %v332 = vunpack.c.l.b16 %v136
    %v333 = vunpack.c.l.b16 %v137
    %v334 = vunpack.c.l.b16 %v138
    %v335 = vunpack.c.l.b16 %v139
    %v336 = vunpack.c.l.b16 %v140
    %v337 = vunpack.c.l.b16 %v141
    %v338 = vunpack.c.l.b16 %v142
    %v339 = vunpack.c.l.b16 %v143
    %v340 = vunpack.c.l.b16 %v144
    %v341 = vunpack.c.l.b16 %v145
    %v342 = vunpack.c.l.b16 %v146
    %v343 = vpack.c.b16 %v248, %v247
    %v344 = vpack.c.b16 %v250, %v249
    %v345 = vpack.c.b16 %v252, %v251
    %v346 = vpack.c.b16 %v254, %v253
    %v347 = vpack.c.b16 %v256, %v255
    %v348 = vpack.c.b16 %v258, %v257
    %v349 = vpack.c.b16 %v260, %v259
    %v350 = vpack.c.b16 %v262, %v261
    %v351 = vpack.c.b16 %v264, %v263
    %v352 = vpack.c.b16 %v266, %v265
    %v353 = vpack.c.b16 %v268, %v267
    %v354 = vpack.c.b16 %v270, %v269
    %v355 = vpack.c.b16 %v272, %v271
    %v356 = vpack.c.b16 %v274, %v273
    %v357 = vpack.c.b16 %v276, %v275
    %v358 = vpack.c.b16 %v278, %v277
    %v359 = vpack.c.b16 %v280, %v279
    %v360 = vpack.c.b16 %v282, %v281
    %v361 = vpack.c.b16 %v284, %v283
    %v362 = vpack.c.b16 %v286, %v285
    %v363 = vpack.c.b16 %v288, %v287
    %v364 = vpack.c.b16 %v290, %v289
    %v365 = vpack.c.b16 %v292, %v291
    %v366 = vpack.c.b16 %v294, %v293
    %v367 = vpack.c.b16 %v296, %v295
    %v368 = vpack.c.b16 %v298, %v297
    %v369 = vpack.c.b16 %v300, %v299
    %v370 = vpack.c.b16 %v302, %v301
    %v371 = vpack.c.b16 %v304, %v303
    %v372 = vpack.c.b16 %v306, %v305
    %v373 = vpack.c.b16 %v308, %v307
    %v374 = vpack.c.b16 %v310, %v309
    %v375 = vpack.c.b16 %v312, %v311
    %v376 = vpack.c.b16 %v314, %v313
    %v377 = vpack.c.b16 %v316, %v315
    %v378 = vpack.c.b16 %v318, %v317
    %v379 = vpack.c.b16 %v320, %v319
    %v380 = vpack.c.b16 %v322, %v321
    %v381 = vpack.c.b16 %v324, %v323
    %v382 = vpack.c.b16 %v326, %v325
    %v383 = vpack.c.b16 %v328, %v327
    %v384 = vpack.c.b16 %v330, %v329
    %v385 = vpack.c.b16 %v332, %v331
    %v386 = vpack.c.b16 %v334, %v333
    %v387 = vpack.c.b16 %v336, %v335
    %v388 = vpack.c.b16 %v338, %v337
    %v389 = vpack.c.b16 %v340, %v339
    %v390 = vpack.c.b16 %v342, %v341
    %439 = vmatpush.bf16.msra.mxu0 %v350
    %440 = vmatpush.bf16.msra.mxu0 %v349
    %441 = vmatpush.bf16.msra.mxu0 %v348
    %442 = vmatpush.bf16.msra.mxu0 %v347
    %443 = vmatpush.bf16.msra.mxu0 %v346
    %444 = vmatpush.bf16.msra.mxu0 %v345
    %445 = vmatpush.bf16.msra.mxu0 %v344
    %446 = vmatpush.bf16.msra.mxu0 %v343
    %447 = vmatmul.bf16.gmra.mxu0 %v45
    %v448 = vpop.f32.mrf.mxu0
    %v449 = vadd.f32 %v149, %v448
    %v450 = vpop.f32.mrf.mxu0
    %v451 = vadd.f32 %v149, %v450
    %452 = vdwg.mxu0
    %453 = vmatpush.bf16.msra.mxu0 %v358
    %454 = vmatpush.bf16.msra.mxu0 %v357
    %455 = vmatpush.bf16.msra.mxu0 %v356
    %456 = vmatpush.bf16.msra.mxu0 %v355
    %457 = vmatpush.bf16.msra.mxu0 %v354
    %458 = vmatpush.bf16.msra.mxu0 %v353
    %459 = vmatpush.bf16.msra.mxu0 %v352
    %460 = vmatpush.bf16.msra.mxu0 %v351
    %461 = vmatmul.bf16.gmra.mxu0 %v46
    %v462 = vpop.f32.mrf.mxu0
    %v463 = vadd.f32 %v449, %v462
    %v464 = vpop.f32.mrf.mxu0
    %v465 = vadd.f32 %v451, %v464
    %466 = vdwg.mxu0
    %467 = vmatpush.bf16.msra.mxu0 %v366
    %468 = vmatpush.bf16.msra.mxu0 %v365
    %469 = vmatpush.bf16.msra.mxu0 %v364
    %470 = vmatpush.bf16.msra.mxu0 %v363
    %471 = vmatpush.bf16.msra.mxu0 %v362
    %472 = vmatpush.bf16.msra.mxu0 %v361
    %473 = vmatpush.bf16.msra.mxu0 %v360
    %474 = vmatpush.bf16.msra.mxu0 %v359
    %475 = vmatmul.bf16.gmra.mxu0 %v47
    %v476 = vpop.f32.mrf.mxu0
    %v477 = vadd.f32 %v463, %v476
    %v478 = vpop.f32.mrf.mxu0
    %v479 = vadd.f32 %v465, %v478
    %480 = vdwg.mxu0
    %481 = vmatpush.bf16.msra.mxu0 %v374
    %482 = vmatpush.bf16.msra.mxu0 %v373
    %483 = vmatpush.bf16.msra.mxu0 %v372
    %484 = vmatpush.bf16.msra.mxu0 %v371
    %485 = vmatpush.bf16.msra.mxu0 %v370
    %486 = vmatpush.bf16.msra.mxu0 %v369
    %487 = vmatpush.bf16.msra.mxu0 %v368
    %488 = vmatpush.bf16.msra.mxu0 %v367
    %489 = vmatmul.bf16.gmra.mxu0 %v48
    %v490 = vpop.f32.mrf.mxu0
    %v491 = vadd.f32 %v477, %v490
    %v492 = vpop.f32.mrf.mxu0
    %v493 = vadd.f32 %v479, %v492
    %494 = vdwg.mxu0
    %495 = vmatpush.bf16.msra.mxu0 %v382
    %496 = vmatpush.bf16.msra.mxu0 %v381
    %497 = vmatpush.bf16.msra.mxu0 %v380
    %498 = vmatpush.bf16.msra.mxu0 %v379
    %499 = vmatpush.bf16.msra.mxu0 %v378
    %500 = vmatpush.bf16.msra.mxu0 %v377
    %501 = vmatpush.bf16.msra.mxu0 %v376
    %502 = vmatpush.bf16.msra.mxu0 %v375
    %503 = vmatmul.bf16.gmra.mxu0 %v49
    %v504 = vpop.f32.mrf.mxu0
    %v505 = vadd.f32 %v491, %v504
    %v506 = vpop.f32.mrf.mxu0
    %v507 = vadd.f32 %v493, %v506
    %508 = vdwg.mxu0
    %509 = vmatpush.bf16.msra.mxu0 %v390
    %510 = vmatpush.bf16.msra.mxu0 %v389
    %511 = vmatpush.bf16.msra.mxu0 %v388
    %512 = vmatpush.bf16.msra.mxu0 %v387
    %513 = vmatpush.bf16.msra.mxu0 %v386
    %514 = vmatpush.bf16.msra.mxu0 %v385
    %515 = vmatpush.bf16.msra.mxu0 %v384
    %516 = vmatpush.bf16.msra.mxu0 %v383
    %517 = vmatmul.bf16.gmra.mxu0 %v50
    %v518 = vpop.f32.mrf.mxu0
    %v519 = vadd.f32 %v505, %v518
    %v520 = vpop.f32.mrf.mxu0
    %v521 = vadd.f32 %v507, %v520
    %522 = vdwg.mxu0
    %v523 = vmul.f32 %v519, 0.5
    %v524 = vmul.f32 %v521, 0.5
    %v525 = vmul.f32 %v519, 0.044715
    %v526 = vmul.f32 %v521, 0.044715
    %v527 = vmul.f32 %v525, %v519
    %v528 = vmul.f32 %v526, %v521
    %v529 = vmul.f32 %v527, %v519
    %v530 = vmul.f32 %v528, %v521
    %v531 = vadd.f32 %v519, %v529
    %v532 = vadd.f32 %v521, %v530
    %v533 = vmul.f32 %v531, 0.7978846
    %v534 = vmul.f32 %v532, 0.7978846
    %v535 = vtanh.pop %v533
    %v536 = vtanh.pop %v534
    %v537 = vadd.f32 %v535, 1.0
    %v538 = vadd.f32 %v536, 1.0
    %v539 = vmul.f32 %v523, %v537
    %v540 = vmul.f32 %v524, %v538
    %v542 = vrot.slane %v539, 2
    %v544 = vadd.f32 %v539, %v542
    %v545 = vrot.slane %v539, 4
    %v547 = vadd.f32 %v544, %v545
    %v548 = vrot.slane %v539, 6
    %v550 = vadd.f32 %v547, %v548
    %v551 = vadd.f32 %v550, %v540
    %v553 = vrot.slane %v540, 2
    %v555 = vadd.f32 %v551, %v553
    %v556 = vrot.slane %v540, 4
    %v558 = vadd.f32 %v555, %v556
    %v559 = vrot.slane %v540, 6
    %v561 = vadd.f32 %v558, %v559
    %v562 = vmul.f32 %v561, 0.125
    %v563 = vld [vmem:[%s1] sm:$0x3]
    %v564 = vadd.f32 %v563, %v562
    %v565 = vld [vmem:[%s2] sm:$0x3]
    %v566 = vadd.f32 %v564, %v565
    %v567 = vpack.c.bf16 %v566, %v566
    %v568 = vld [vmem:[%s5] sm:$0xff]
    %v569 = vld [vmem:[%s5 + $0x8] sm:$0xff]
    %v570 = vld [vmem:[%s5 + $0x10] sm:$0xff]
    %v571 = vld [vmem:[%s5 + $0x18] sm:$0xff]
    %v572 = vld [vmem:[%s5 + $0x20] sm:$0xff]
    %v573 = vld [vmem:[%s5 + $0x28] sm:$0xff]
    %v574 = vld [vmem:[%s5 + $0x30] sm:$0xff]
    %v575 = vld [vmem:[%s5 + $0x38] sm:$0xff]
    %v576 = vld [vmem:[%s5 + $0x40] sm:$0xff]
    %v577 = vld [vmem:[%s5 + $0x48] sm:$0xff]
    %v578 = vld [vmem:[%s5 + $0x50] sm:$0xff]
    %v579 = vld [vmem:[%s5 + $0x58] sm:$0xff]
    %v580 = vld [vmem:[%s5 + $0x60] sm:$0xff]
    %v581 = vld [vmem:[%s5 + $0x68] sm:$0xff]
    %v582 = vld [vmem:[%s5 + $0x70] sm:$0xff]
    %v583 = vld [vmem:[%s5 + $0x78] sm:$0xff]
    %v584 = vld [vmem:[%s6] sm:$0x3]
    %v586 = vperm.slane %v584, 0
    %v587 = vperm.slane %v584, 1
    %v606 = vunpack.c.l.b16 %v568
    %v607 = vunpack.c.h.b16 %v568
    %v608 = vunpack.c.l.b16 %v569
    %v609 = vunpack.c.h.b16 %v569
    %v610 = vunpack.c.l.b16 %v570
    %v611 = vunpack.c.h.b16 %v570
    %v612 = vunpack.c.l.b16 %v571
    %v613 = vunpack.c.h.b16 %v571
    %v614 = vunpack.c.l.b16 %v572
    %v615 = vunpack.c.h.b16 %v572
    %v616 = vunpack.c.l.b16 %v573
    %v617 = vunpack.c.h.b16 %v573
    %v618 = vunpack.c.l.b16 %v574
    %v619 = vunpack.c.h.b16 %v574
    %v620 = vunpack.c.l.b16 %v575
    %v621 = vunpack.c.h.b16 %v575
    %v622 = vunpack.c.l.b16 %v576
    %v623 = vunpack.c.h.b16 %v576
    %v624 = vunpack.c.l.b16 %v577
    %v625 = vunpack.c.h.b16 %v577
    %v626 = vunpack.c.l.b16 %v578
    %v627 = vunpack.c.h.b16 %v578
    %v628 = vunpack.c.l.b16 %v579
    %v629 = vunpack.c.h.b16 %v579
    %v630 = vunpack.c.l.b16 %v580
    %v631 = vunpack.c.h.b16 %v580
    %v632 = vunpack.c.l.b16 %v581
    %v633 = vunpack.c.h.b16 %v581
    %v634 = vunpack.c.l.b16 %v582
    %v635 = vunpack.c.h.b16 %v582
    %v636 = vunpack.c.l.b16 %v583
    %v637 = vunpack.c.h.b16 %v583
    %v638 = vpack.c.b16 %v608, %v606
    %v639 = vpack.c.b16 %v609, %v607
    %v640 = vpack.c.b16 %v612, %v610
    %v641 = vpack.c.b16 %v613, %v611
    %v642 = vpack.c.b16 %v616, %v614
    %v643 = vpack.c.b16 %v617, %v615
    %v644 = vpack.c.b16 %v620, %v618
    %v645 = vpack.c.b16 %v621, %v619
    %v646 = vpack.c.b16 %v624, %v622
    %v647 = vpack.c.b16 %v625, %v623
    %v648 = vpack.c.b16 %v628, %v626
    %v649 = vpack.c.b16 %v629, %v627
    %v650 = vpack.c.b16 %v632, %v630
    %v651 = vpack.c.b16 %v633, %v631
    %v652 = vpack.c.b16 %v636, %v634
    %v653 = vpack.c.b16 %v637, %v635
    %670 = vmatpush.bf16.msra.mxu0 %v652
    %671 = vmatpush.bf16.msra.mxu0 %v650
    %672 = vmatpush.bf16.msra.mxu0 %v648
    %673 = vmatpush.bf16.msra.mxu0 %v646
    %674 = vmatpush.bf16.msra.mxu0 %v644
    %675 = vmatpush.bf16.msra.mxu0 %v642
    %676 = vmatpush.bf16.msra.mxu0 %v640
    %677 = vmatpush.bf16.msra.mxu0 %v638
    %678 = vmatmul.bf16.gmra.mxu0 %v567
    %v679 = vpop.f32.mrf.mxu0
    %v680 = vadd.f32 %v586, %v679
    %v681 = vpop.f32.mrf.mxu0
    %682 = vdwg.mxu0
    %683 = vmatpush.bf16.msra.mxu0 %v653
    %684 = vmatpush.bf16.msra.mxu0 %v651
    %685 = vmatpush.bf16.msra.mxu0 %v649
    %686 = vmatpush.bf16.msra.mxu0 %v647
    %687 = vmatpush.bf16.msra.mxu0 %v645
    %688 = vmatpush.bf16.msra.mxu0 %v643
    %689 = vmatpush.bf16.msra.mxu0 %v641
    %690 = vmatpush.bf16.msra.mxu0 %v639
    %691 = vmatmul.bf16.gmra.mxu0 %v567
    %v692 = vpop.f32.mrf.mxu0
    %v693 = vadd.f32 %v587, %v692
    %v694 = vpop.f32.mrf.mxu0
    %695 = vdwg.mxu0
    %v696 = vmul.f32 %v680, 0.5
    %v697 = vmul.f32 %v693, 0.5
    %v698 = vmul.f32 %v680, 0.044715
    %v699 = vmul.f32 %v693, 0.044715
    %v700 = vmul.f32 %v698, %v680
    %v701 = vmul.f32 %v699, %v693
    %v702 = vmul.f32 %v700, %v680
    %v703 = vmul.f32 %v701, %v693
    %v704 = vadd.f32 %v680, %v702
    %v705 = vadd.f32 %v693, %v703
    %v706 = vmul.f32 %v704, 0.7978846
    %v707 = vmul.f32 %v705, 0.7978846
    %v708 = vtanh.pop %v706
    %v709 = vtanh.pop %v707
    %v710 = vadd.f32 %v708, 1.0
    %v711 = vadd.f32 %v709, 1.0
    %v712 = vmul.f32 %v696, %v710
    %v713 = vmul.f32 %v697, %v711
    %v714 = vpack.c.bf16 %v712, %v712
    %v715 = vpack.c.bf16 %v713, %v713
    %v716 = vld [vmem:[%s7] sm:$0xf]
    %v717 = vld [vmem:[%s7 + $0x4] sm:$0xf]
    %v718 = vld [vmem:[%s7 + $0x8] sm:$0xf]
    %v719 = vld [vmem:[%s7 + $0xc] sm:$0xf]
    %v720 = vld [vmem:[%s7 + $0x10] sm:$0xf]
    %v721 = vld [vmem:[%s7 + $0x14] sm:$0xf]
    %v722 = vld [vmem:[%s7 + $0x18] sm:$0xf]
    %v723 = vld [vmem:[%s7 + $0x1c] sm:$0xf]
    %v724 = vld [vmem:[%s7 + $0x20] sm:$0xf]
    %v725 = vld [vmem:[%s7 + $0x24] sm:$0xf]
    %v726 = vld [vmem:[%s7 + $0x28] sm:$0xf]
    %v727 = vld [vmem:[%s7 + $0x2c] sm:$0xf]
    %v728 = vld [vmem:[%s7 + $0x30] sm:$0xf]
    %v729 = vld [vmem:[%s7 + $0x34] sm:$0xf]
    %v730 = vld [vmem:[%s7 + $0x38] sm:$0xf]
    %v731 = vld [vmem:[%s7 + $0x3c] sm:$0xf]
    %v732 = vld [vmem:[%s7 + $0x40] sm:$0xf]
    %v733 = vld [vmem:[%s7 + $0x44] sm:$0xf]
    %v734 = vld [vmem:[%s7 + $0x48] sm:$0xf]
    %v735 = vld [vmem:[%s7 + $0x4c] sm:$0xf]
    %v736 = vld [vmem:[%s7 + $0x50] sm:$0xf]
    %v737 = vld [vmem:[%s7 + $0x54] sm:$0xf]
    %v738 = vld [vmem:[%s7 + $0x58] sm:$0xf]
    %v739 = vld [vmem:[%s7 + $0x5c] sm:$0xf]
    %v740 = vld [vmem:[%s7 + $0x60] sm:$0xf]
    %v741 = vld [vmem:[%s7 + $0x64] sm:$0xf]
    %v742 = vld [vmem:[%s7 + $0x68] sm:$0xf]
    %v743 = vld [vmem:[%s7 + $0x6c] sm:$0xf]
    %v744 = vld [vmem:[%s7 + $0x70] sm:$0xf]
    %v745 = vld [vmem:[%s7 + $0x74] sm:$0xf]
    %v746 = vld [vmem:[%s7 + $0x78] sm:$0xf]
    %v747 = vld [vmem:[%s7 + $0x7c] sm:$0xf]
    %v748 = vld [vmem:[%s8] sm:$0x1]
    %v750 = vperm.slane %v748, 0
    %v784 = vunpack.c.l.b16 %v716
    %v785 = vunpack.c.l.b16 %v717
    %v786 = vunpack.c.l.b16 %v718
    %v787 = vunpack.c.l.b16 %v719
    %v788 = vunpack.c.l.b16 %v720
    %v789 = vunpack.c.l.b16 %v721
    %v790 = vunpack.c.l.b16 %v722
    %v791 = vunpack.c.l.b16 %v723
    %v792 = vunpack.c.l.b16 %v724
    %v793 = vunpack.c.l.b16 %v725
    %v794 = vunpack.c.l.b16 %v726
    %v795 = vunpack.c.l.b16 %v727
    %v796 = vunpack.c.l.b16 %v728
    %v797 = vunpack.c.l.b16 %v729
    %v798 = vunpack.c.l.b16 %v730
    %v799 = vunpack.c.l.b16 %v731
    %v800 = vunpack.c.l.b16 %v732
    %v801 = vunpack.c.l.b16 %v733
    %v802 = vunpack.c.l.b16 %v734
    %v803 = vunpack.c.l.b16 %v735
    %v804 = vunpack.c.l.b16 %v736
    %v805 = vunpack.c.l.b16 %v737
    %v806 = vunpack.c.l.b16 %v738
    %v807 = vunpack.c.l.b16 %v739
    %v808 = vunpack.c.l.b16 %v740
    %v809 = vunpack.c.l.b16 %v741
    %v810 = vunpack.c.l.b16 %v742
    %v811 = vunpack.c.l.b16 %v743
    %v812 = vunpack.c.l.b16 %v744
    %v813 = vunpack.c.l.b16 %v745
    %v814 = vunpack.c.l.b16 %v746
    %v815 = vunpack.c.l.b16 %v747
    %v816 = vpack.c.b16 %v785, %v784
    %v817 = vpack.c.b16 %v787, %v786
    %v818 = vpack.c.b16 %v789, %v788
    %v819 = vpack.c.b16 %v791, %v790
    %v820 = vpack.c.b16 %v793, %v792
    %v821 = vpack.c.b16 %v795, %v794
    %v822 = vpack.c.b16 %v797, %v796
    %v823 = vpack.c.b16 %v799, %v798
    %v824 = vpack.c.b16 %v801, %v800
    %v825 = vpack.c.b16 %v803, %v802
    %v826 = vpack.c.b16 %v805, %v804
    %v827 = vpack.c.b16 %v807, %v806
    %v828 = vpack.c.b16 %v809, %v808
    %v829 = vpack.c.b16 %v811, %v810
    %v830 = vpack.c.b16 %v813, %v812
    %v831 = vpack.c.b16 %v815, %v814
    %848 = vmatpush.bf16.msra.mxu0 %v823
    %849 = vmatpush.bf16.msra.mxu0 %v822
    %850 = vmatpush.bf16.msra.mxu0 %v821
    %851 = vmatpush.bf16.msra.mxu0 %v820
    %852 = vmatpush.bf16.msra.mxu0 %v819
    %853 = vmatpush.bf16.msra.mxu0 %v818
    %854 = vmatpush.bf16.msra.mxu0 %v817
    %855 = vmatpush.bf16.msra.mxu0 %v816
    %856 = vmatmul.bf16.gmra.mxu0 %v714
    %v857 = vpop.f32.mrf.mxu0
    %v858 = vadd.f32 %v750, %v857
    %v859 = vpop.f32.mrf.mxu0
    %860 = vdwg.mxu0
    %861 = vmatpush.bf16.msra.mxu0 %v831
    %862 = vmatpush.bf16.msra.mxu0 %v830
    %863 = vmatpush.bf16.msra.mxu0 %v829
    %864 = vmatpush.bf16.msra.mxu0 %v828
    %865 = vmatpush.bf16.msra.mxu0 %v827
    %866 = vmatpush.bf16.msra.mxu0 %v826
    %867 = vmatpush.bf16.msra.mxu0 %v825
    %868 = vmatpush.bf16.msra.mxu0 %v824
    %869 = vmatmul.bf16.gmra.mxu0 %v715
    %v870 = vpop.f32.mrf.mxu0
    %v871 = vadd.f32 %v858, %v870
    %v872 = vpop.f32.mrf.mxu0
    %873 = vdwg.mxu0
    %v874 = vsub.f32 0.0, %v871
    %v875 = vmul.f32 %v874, 1.442695
    %v876 = vpow.pop %v875
    %v877 = vadd.f32 %v876, 1.0
    %v878 = vrcp.pop %v877
    %v879 = vmul.f32 %v877, %v878
    %v880 = vsub.f32 1.0, %v879
    %v881 = vmul.f32 %v878, %v880
    %v882 = vadd.f32 %v878, %v881
    %vm883 = vweird.f32 %v877
    %vm884 = vweird.f32 %v878
    %vm885 = vmor %vm883, %vm884
    %v886 = vsel %vm885, %v878, %v882
    %v887 = vand.u32 2147483647, %v877
    %vm888 = vcmp.eq.f32.partialorder %v887, 8.507059e+37
    %v889 = vand.u32 %v877, 2147483648
    %v890 = vor.u32 1.1754944e-38, %v889
    %v891 = vsel %vm888, %v890, %v886
    %v892 = vmul.f32 1.0, %v891
    %893 = vst [vmem:[#allocation2] sm:$0x3] %v892
    // Predicated region
    $region38: #{avg_modal_model.5} parent=1 // pred_check
      _
    $region39: #{avg_modal_model.5} parent=1 // pred_check_branch
      %895 = sbr.rel (0) target = $region41
    $region40: #{avg_modal_model.5} parent=1 // pred_region
      %897 = vsyncadd [#allocation3], 0
      %s899 = sshll.u32 [#allocation2], 4
      %s900 = int_to_ptr.vmem [resolvable:$true] %s899
      %s901 = sshll.u32 %s9, 4
      %s902 = int_to_ptr.hbm [resolvable:$true] %s901
      %904 = dma.vmem_to_hbm [thread:$0]  %s900, 32, %s902, [#allocation3]
    $region41: #{avg_modal_model.5} parent=1 // pred_fallthru
      _
    // Predicated region
    $region42: #{avg_modal_model.5} parent=1 // pred_check
      _
    $region43: #{avg_modal_model.5} parent=1 // pred_check_branch
      %906 = sbr.rel (0) target = $region45
    $region44: #{avg_modal_model.5} parent=1 // pred_region
      %908 = dma.done [#allocation3], 32
    $region45: #{avg_modal_model.5} parent=1 // pred_fallthru
      _
    %909 = vsyncpa [#allocation3], 1

// kernel: avg_modal_model.4
$region0: #{avg_modal_model.4}
  #allocation0 [shape = 'u32[]', space=smem, size = 0x4, offset = 0x4, fixed_abs, tag = 'smem constant byte address 0x4 - core index']
  #allocation1 [shape = 'u32[72,128]{1,0:T(1,128)}', space=vmem, size = 0x9000, scoped, tag = 'internal scratch']
  #allocation2 [shape = 'f32[8,32]{1,0:T(8,128)}', space=vmem, size = 0x1000, scoped, tag = 'scratch operand']
  #allocation3 [shape = 'f32[8,32]{1,0:T(8,128)}', space=vmem, size = 0x1000, scoped, tag = 'scratch operand']
  %s0 = inlined_call_operand.vmem [shape: f32[8,256], index: 0, kind: input, shape index: {}]
  %s1 = inlined_call_operand.vmem [shape: bf16[256,256], index: 1, kind: input, shape index: {}]
  %s2 = inlined_call_operand.vmem [shape: f32[1,256], index: 2, kind: input, shape index: {}]
  %s3 = inlined_call_operand.vmem [shape: bf16[32,128], index: 3, kind: input, shape index: {}]
  %s4 = inlined_call_operand.vmem [shape: f32[1,128], index: 4, kind: input, shape index: {}]
  %s5 = inlined_call_operand.vmem [shape: bf16[32,128], index: 5, kind: input, shape index: {}]
  %s6 = inlined_call_operand.vmem [shape: f32[1,128], index: 6, kind: input, shape index: {}]
  %s7 = inlined_call_operand.vmem [shape: bf16[32,128], index: 7, kind: input, shape index: {}]
  %s8 = inlined_call_operand.vmem [shape: bf16[32,128], index: 8, kind: input, shape index: {}]
  %s9 = inlined_call_operand.vmem [shape: f32[1,128], index: 9, kind: input, shape index: {}]
  %s10 = inlined_call_operand.vmem [shape: f32[2,128], index: 10, kind: output, shape index: {}]
  %s11 = sld [smem:[#allocation0]]
  $region50: #{avg_modal_model.4} parent=0
    _
  %s13 = ssub.s32 1, %s11
  %s14 = scalar_select 0, %s13, %s11
  // Predicated region
  $region2: #{avg_modal_model.4} parent=0 // pred_check
    _
  $region3: #{avg_modal_model.4} parent=0 // pred_check_branch
    %16 = sbr.rel (0) target = $region5
  $region4: #{avg_modal_model.4} parent=0 // pred_region
    _
  $region5: #{avg_modal_model.4} parent=0 // pred_fallthru
    _
  // Predicated region
  $region6: #{avg_modal_model.4} parent=0 // pred_check
    _
  $region7: #{avg_modal_model.4} parent=0 // pred_check_branch
    %18 = sbr.rel (0) target = $region9
  $region8: #{avg_modal_model.4} parent=0 // pred_region
    _
  $region9: #{avg_modal_model.4} parent=0 // pred_fallthru
    _
  // Predicated region
  $region10: #{avg_modal_model.4} parent=0 // pred_check
    _
  $region11: #{avg_modal_model.4} parent=0 // pred_check_branch
    %20 = sbr.rel (0) target = $region13
  $region12: #{avg_modal_model.4} parent=0 // pred_region
    _
  $region13: #{avg_modal_model.4} parent=0 // pred_fallthru
    _
  // Predicated region
  $region14: #{avg_modal_model.4} parent=0 // pred_check
    _
  $region15: #{avg_modal_model.4} parent=0 // pred_check_branch
    %22 = sbr.rel (0) target = $region17
  $region16: #{avg_modal_model.4} parent=0 // pred_region
    _
  $region17: #{avg_modal_model.4} parent=0 // pred_fallthru
    _
  // Predicated region
  $region18: #{avg_modal_model.4} parent=0 // pred_check
    _
  $region19: #{avg_modal_model.4} parent=0 // pred_check_branch
    %24 = sbr.rel (0) target = $region21
  $region20: #{avg_modal_model.4} parent=0 // pred_region
    _
  $region21: #{avg_modal_model.4} parent=0 // pred_fallthru
    _
  // Predicated region
  $region22: #{avg_modal_model.4} parent=0 // pred_check
    _
  $region23: #{avg_modal_model.4} parent=0 // pred_check_branch
    %26 = sbr.rel (0) target = $region25
  $region24: #{avg_modal_model.4} parent=0 // pred_region
    _
  $region25: #{avg_modal_model.4} parent=0 // pred_fallthru
    _
  // Predicated region
  $region26: #{avg_modal_model.4} parent=0 // pred_check
    _
  $region27: #{avg_modal_model.4} parent=0 // pred_check_branch
    %28 = sbr.rel (0) target = $region29
  $region28: #{avg_modal_model.4} parent=0 // pred_region
    _
  $region29: #{avg_modal_model.4} parent=0 // pred_fallthru
    _
  // Predicated region
  $region30: #{avg_modal_model.4} parent=0 // pred_check
    _
  $region31: #{avg_modal_model.4} parent=0 // pred_check_branch
    %30 = sbr.rel (0) target = $region33
  $region32: #{avg_modal_model.4} parent=0 // pred_region
    _
  $region33: #{avg_modal_model.4} parent=0 // pred_fallthru
    _
  // Predicated region
  $region34: #{avg_modal_model.4} parent=0 // pred_check
    _
  $region35: #{avg_modal_model.4} parent=0 // pred_check_branch
    %32 = sbr.rel (0) target = $region37
  $region36: #{avg_modal_model.4} parent=0 // pred_region
    _
  $region37: #{avg_modal_model.4} parent=0 // pred_fallthru
    _
  // Predicated region
  $region38: #{avg_modal_model.4} parent=0 // pred_check
    _
  $region39: #{avg_modal_model.4} parent=0 // pred_check_branch
    %34 = sbr.rel (0) target = $region41
  $region40: #{avg_modal_model.4} parent=0 // pred_region
    _
  $region41: #{avg_modal_model.4} parent=0 // pred_fallthru
    _
  %v36 = vld [vmem:[%s0] sm:$0xff]
  %v37 = vld [vmem:[%s0 + $0x8] sm:$0xff]
  %v38 = vpack.c.bf16 %v36, %v36
  %v39 = vpack.c.bf16 %v37, %v37
  %v40 = vld [vmem:[%s1] sm:$0xff]
  %v41 = vld [vmem:[%s1 + $0x8] sm:$0xff]
  %v42 = vld [vmem:[%s1 + $0x10] sm:$0xff]
  %v43 = vld [vmem:[%s1 + $0x18] sm:$0xff]
  %v44 = vld [vmem:[%s1 + $0x20] sm:$0xff]
  %v45 = vld [vmem:[%s1 + $0x28] sm:$0xff]
  %v46 = vld [vmem:[%s1 + $0x30] sm:$0xff]
  %v47 = vld [vmem:[%s1 + $0x38] sm:$0xff]
  %v48 = vld [vmem:[%s1 + $0x40] sm:$0xff]
  %v49 = vld [vmem:[%s1 + $0x48] sm:$0xff]
  %v50 = vld [vmem:[%s1 + $0x50] sm:$0xff]
  %v51 = vld [vmem:[%s1 + $0x58] sm:$0xff]
  %v52 = vld [vmem:[%s1 + $0x60] sm:$0xff]
  %v53 = vld [vmem:[%s1 + $0x68] sm:$0xff]
  %v54 = vld [vmem:[%s1 + $0x70] sm:$0xff]
  %v55 = vld [vmem:[%s1 + $0x78] sm:$0xff]
  %v56 = vld [vmem:[%s1 + $0x80] sm:$0xff]
  %v57 = vld [vmem:[%s1 + $0x88] sm:$0xff]
  %v58 = vld [vmem:[%s1 + $0x90] sm:$0xff]
  %v59 = vld [vmem:[%s1 + $0x98] sm:$0xff]
  %v60 = vld [vmem:[%s1 + $0xa0] sm:$0xff]
  %v61 = vld [vmem:[%s1 + $0xa8] sm:$0xff]
  %v62 = vld [vmem:[%s1 + $0xb0] sm:$0xff]
  %v63 = vld [vmem:[%s1 + $0xb8] sm:$0xff]
  %v64 = vld [vmem:[%s1 + $0xc0] sm:$0xff]
  %v65 = vld [vmem:[%s1 + $0xc8] sm:$0xff]
  %v66 = vld [vmem:[%s1 + $0xd0] sm:$0xff]
  %v67 = vld [vmem:[%s1 + $0xd8] sm:$0xff]
  %v68 = vld [vmem:[%s1 + $0xe0] sm:$0xff]
  %v69 = vld [vmem:[%s1 + $0xe8] sm:$0xff]
  %v70 = vld [vmem:[%s1 + $0xf0] sm:$0xff]
  %v71 = vld [vmem:[%s1 + $0xf8] sm:$0xff]
  %v72 = vld [vmem:[%s2] sm:$0x3]
  %v74 = vperm.slane %v72, 0
  %v75 = vperm.slane %v72, 1
  %v110 = vunpack.c.l.b16 %v40
  %v111 = vunpack.c.h.b16 %v40
  %v112 = vunpack.c.l.b16 %v41
  %v113 = vunpack.c.h.b16 %v41
  %v114 = vunpack.c.l.b16 %v42
  %v115 = vunpack.c.h.b16 %v42
  %v116 = vunpack.c.l.b16 %v43
  %v117 = vunpack.c.h.b16 %v43
  %v118 = vunpack.c.l.b16 %v44
  %v119 = vunpack.c.h.b16 %v44
  %v120 = vunpack.c.l.b16 %v45
  %v121 = vunpack.c.h.b16 %v45
  %v122 = vunpack.c.l.b16 %v46
  %v123 = vunpack.c.h.b16 %v46
  %v124 = vunpack.c.l.b16 %v47
  %v125 = vunpack.c.h.b16 %v47
  %v126 = vunpack.c.l.b16 %v48
  %v127 = vunpack.c.h.b16 %v48
  %v128 = vunpack.c.l.b16 %v49
  %v129 = vunpack.c.h.b16 %v49
  %v130 = vunpack.c.l.b16 %v50
  %v131 = vunpack.c.h.b16 %v50
  %v132 = vunpack.c.l.b16 %v51
  %v133 = vunpack.c.h.b16 %v51
  %v134 = vunpack.c.l.b16 %v52
  %v135 = vunpack.c.h.b16 %v52
  %v136 = vunpack.c.l.b16 %v53
  %v137 = vunpack.c.h.b16 %v53
  %v138 = vunpack.c.l.b16 %v54
  %v139 = vunpack.c.h.b16 %v54
  %v140 = vunpack.c.l.b16 %v55
  %v141 = vunpack.c.h.b16 %v55
  %v142 = vunpack.c.l.b16 %v56
  %v143 = vunpack.c.h.b16 %v56
  %v144 = vunpack.c.l.b16 %v57
  %v145 = vunpack.c.h.b16 %v57
  %v146 = vunpack.c.l.b16 %v58
  %v147 = vunpack.c.h.b16 %v58
  %v148 = vunpack.c.l.b16 %v59
  %v149 = vunpack.c.h.b16 %v59
  %v150 = vunpack.c.l.b16 %v60
  %v151 = vunpack.c.h.b16 %v60
  %v152 = vunpack.c.l.b16 %v61
  %v153 = vunpack.c.h.b16 %v61
  %v154 = vunpack.c.l.b16 %v62
  %v155 = vunpack.c.h.b16 %v62
  %v156 = vunpack.c.l.b16 %v63
  %v157 = vunpack.c.h.b16 %v63
  %v158 = vunpack.c.l.b16 %v64
  %v159 = vunpack.c.h.b16 %v64
  %v160 = vunpack.c.l.b16 %v65
  %v161 = vunpack.c.h.b16 %v65
  %v162 = vunpack.c.l.b16 %v66
  %v163 = vunpack.c.h.b16 %v66
  %v164 = vunpack.c.l.b16 %v67
  %v165 = vunpack.c.h.b16 %v67
  %v166 = vunpack.c.l.b16 %v68
  %v167 = vunpack.c.h.b16 %v68
  %v168 = vunpack.c.l.b16 %v69
  %v169 = vunpack.c.h.b16 %v69
  %v170 = vunpack.c.l.b16 %v70
  %v171 = vunpack.c.h.b16 %v70
  %v172 = vunpack.c.l.b16 %v71
  %v173 = vunpack.c.h.b16 %v71
  %v174 = vpack.c.b16 %v112, %v110
  %v175 = vpack.c.b16 %v113, %v111
  %v176 = vpack.c.b16 %v116, %v114
  %v177 = vpack.c.b16 %v117, %v115
  %v178 = vpack.c.b16 %v120, %v118
  %v179 = vpack.c.b16 %v121, %v119
  %v180 = vpack.c.b16 %v124, %v122
  %v181 = vpack.c.b16 %v125, %v123
  %v182 = vpack.c.b16 %v128, %v126
  %v183 = vpack.c.b16 %v129, %v127
  %v184 = vpack.c.b16 %v132, %v130
  %v185 = vpack.c.b16 %v133, %v131
  %v186 = vpack.c.b16 %v136, %v134
  %v187 = vpack.c.b16 %v137, %v135
  %v188 = vpack.c.b16 %v140, %v138
  %v189 = vpack.c.b16 %v141, %v139
  %v190 = vpack.c.b16 %v144, %v142
  %v191 = vpack.c.b16 %v145, %v143
  %v192 = vpack.c.b16 %v148, %v146
  %v193 = vpack.c.b16 %v149, %v147
  %v194 = vpack.c.b16 %v152, %v150
  %v195 = vpack.c.b16 %v153, %v151
  %v196 = vpack.c.b16 %v156, %v154
  %v197 = vpack.c.b16 %v157, %v155
  %v198 = vpack.c.b16 %v160, %v158
  %v199 = vpack.c.b16 %v161, %v159
  %v200 = vpack.c.b16 %v164, %v162
  %v201 = vpack.c.b16 %v165, %v163
  %v202 = vpack.c.b16 %v168, %v166
  %v203 = vpack.c.b16 %v169, %v167
  %v204 = vpack.c.b16 %v172, %v170
  %v205 = vpack.c.b16 %v173, %v171
  %238 = vmatpush.bf16.msra.mxu0 %v188
  %239 = vmatpush.bf16.msra.mxu0 %v186
  %240 = vmatpush.bf16.msra.mxu0 %v184
  %241 = vmatpush.bf16.msra.mxu0 %v182
  %242 = vmatpush.bf16.msra.mxu0 %v180
  %243 = vmatpush.bf16.msra.mxu0 %v178
  %244 = vmatpush.bf16.msra.mxu0 %v176
  %245 = vmatpush.bf16.msra.mxu0 %v174
  %246 = vmatmul.bf16.gmra.mxu0 %v38
  %v247 = vpop.f32.mrf.mxu0
  %v248 = vadd.f32 %v74, %v247
  %v249 = vpop.f32.mrf.mxu0
  %250 = vdwg.mxu0
  %251 = vmatpush.bf16.msra.mxu0 %v204
  %252 = vmatpush.bf16.msra.mxu0 %v202
  %253 = vmatpush.bf16.msra.mxu0 %v200
  %254 = vmatpush.bf16.msra.mxu0 %v198
  %255 = vmatpush.bf16.msra.mxu0 %v196
  %256 = vmatpush.bf16.msra.mxu0 %v194
  %257 = vmatpush.bf16.msra.mxu0 %v192
  %258 = vmatpush.bf16.msra.mxu0 %v190
  %259 = vmatmul.bf16.gmra.mxu0 %v39
  %v260 = vpop.f32.mrf.mxu0
  %v261 = vadd.f32 %v248, %v260
  %v262 = vpop.f32.mrf.mxu0
  %263 = vdwg.mxu0
  %264 = vmatpush.bf16.msra.mxu0 %v189
  %265 = vmatpush.bf16.msra.mxu0 %v187
  %266 = vmatpush.bf16.msra.mxu0 %v185
  %267 = vmatpush.bf16.msra.mxu0 %v183
  %268 = vmatpush.bf16.msra.mxu0 %v181
  %269 = vmatpush.bf16.msra.mxu0 %v179
  %270 = vmatpush.bf16.msra.mxu0 %v177
  %271 = vmatpush.bf16.msra.mxu0 %v175
  %272 = vmatmul.bf16.gmra.mxu0 %v38
  %v273 = vpop.f32.mrf.mxu0
  %v274 = vadd.f32 %v75, %v273
  %v275 = vpop.f32.mrf.mxu0
  %276 = vdwg.mxu0
  %277 = vmatpush.bf16.msra.mxu0 %v205
  %278 = vmatpush.bf16.msra.mxu0 %v203
  %279 = vmatpush.bf16.msra.mxu0 %v201
  %280 = vmatpush.bf16.msra.mxu0 %v199
  %281 = vmatpush.bf16.msra.mxu0 %v197
  %282 = vmatpush.bf16.msra.mxu0 %v195
  %283 = vmatpush.bf16.msra.mxu0 %v193
  %284 = vmatpush.bf16.msra.mxu0 %v191
  %285 = vmatmul.bf16.gmra.mxu0 %v39
  %v286 = vpop.f32.mrf.mxu0
  %v287 = vadd.f32 %v274, %v286
  %v288 = vpop.f32.mrf.mxu0
  %289 = vdwg.mxu0
  %v290 = vld [vmem:[%s4] sm:$0x1]
  %v291 = vld [vmem:[%s6] sm:$0x1]
  %v293 = vperm.slane %v290, 0
  %v295 = vadd.f32 %v261, %v293
  %v296 = vsub.f32 0.0, %v295
  %v297 = vmul.f32 %v296, 1.442695
  %v298 = vpow.pop %v297
  %v299 = vadd.f32 %v298, 1.0
  %v300 = vrcp.pop %v299
  %301 = vrot.lane.b32.xlu0 %v293, 64
  %v302 = vpop.permute.xlu0 %301
  %v304 = vmul.f32 %v300, %v302
  %306 = vrot.lane.b32.xlu0 %v304, 64
  %v307 = vpop.permute.xlu0 %306
  %v309 = vadd.f32 %v261, %v307
  %v310 = vtanh.pop %v309
  %v311 = vsub.f32 1.0, %v300
  %313 = vrot.lane.b32.xlu0 %v310, 96
  %v314 = vpop.permute.xlu0 %313
  %v316 = vmul.f32 %v311, %v314
  %v317 = vmul.f32 %v300, 0.0
  %v318 = vadd.f32 %v316, %v317
  %v320 = vperm.slane %v291, 0
  %v322 = vadd.f32 %v287, %v320
  %v323 = vsub.f32 0.0, %v322
  %v324 = vmul.f32 %v323, 1.442695
  %v325 = vpow.pop %v324
  %v326 = vadd.f32 %v325, 1.0
  %v327 = vrcp.pop %v326
  %328 = vrot.lane.b32.xlu0 %v320, 64
  %v329 = vpop.permute.xlu0 %328
  %v331 = vmul.f32 %v327, %v329
  %333 = vrot.lane.b32.xlu0 %v331, 64
  %v334 = vpop.permute.xlu0 %333
  %v336 = vadd.f32 %v287, %v334
  %v337 = vtanh.pop %v336
  %v338 = vsub.f32 1.0, %v327
  %340 = vrot.lane.b32.xlu0 %v337, 96
  %v341 = vpop.permute.xlu0 %340
  %v343 = vmul.f32 %v338, %v341
  %v344 = vmul.f32 %v327, 0.0
  %v345 = vadd.f32 %v343, %v344
  %347 = vrot.lane.b32.xlu0 %v318, 96
  %v348 = vpop.permute.xlu0 %347
  %vm350 = vcmask 254976
  %351 = vst.msk [vmem:[#allocation2] sm:$0x3] %vm350, %v348
  %353 = vrot.lane.b32.xlu0 %v345, 96
  %v354 = vpop.permute.xlu0 %353
  %vm356 = vcmask 261126
  %357 = vst.msk [vmem:[#allocation3] sm:$0xc0] %vm356, %v354
  %v358 = vpack.c.bf16 %v318, %v318
  %v359 = vld [vmem:[%s3] sm:$0xf]
  %v360 = vld [vmem:[%s3 + $0x4] sm:$0xf]
  %v361 = vld [vmem:[%s3 + $0x8] sm:$0xf]
  %v362 = vld [vmem:[%s3 + $0xc] sm:$0xf]
  %v363 = vld [vmem:[%s4] sm:$0x1]
  %v365 = vperm.slane %v363, 0
  %368 = vrot.lane.b32.xlu0 %v358, 96
  %v369 = vpop.permute.xlu0 %368
  %v374 = vunpack.c.l.b16 %v359
  %v375 = vunpack.c.l.b16 %v360
  %v376 = vunpack.c.l.b16 %v361
  %v377 = vunpack.c.l.b16 %v362
  %v378 = vpack.c.b16 %v375, %v374
  %v379 = vpack.c.b16 %v377, %v376
  %vm382 = vcmask 261120
  %v384 = vsel %vm382, %v369, 0
  %386 = vmatpush.bf16.msra.mxu0 0
  %387 = vmatpush.bf16.msra.mxu0 0
  %388 = vmatpush.bf16.msra.mxu0 0
  %389 = vmatpush.bf16.msra.mxu0 0
  %390 = vmatpush.bf16.msra.mxu0 0
  %391 = vmatpush.bf16.msra.mxu0 0
  %392 = vmatpush.bf16.msra.mxu0 %v379
  %393 = vmatpush.bf16.msra.mxu0 %v378
  %394 = vmatmul.bf16.gmra.mxu0 %v384
  %v395 = vpop.f32.mrf.mxu0
  %v396 = vadd.f32 %v365, %v395
  %v397 = vpop.f32.mrf.mxu0
  %398 = vdwg.mxu0
  %v399 = vpack.c.bf16 %v345, %v345
  %v400 = vld [vmem:[%s5] sm:$0xf]
  %v401 = vld [vmem:[%s5 + $0x4] sm:$0xf]
  %v402 = vld [vmem:[%s5 + $0x8] sm:$0xf]
  %v403 = vld [vmem:[%s5 + $0xc] sm:$0xf]
  %v404 = vld [vmem:[%s6] sm:$0x1]
  %v406 = vperm.slane %v404, 0
  %v409 = vrot.slane %v399, 3
  %410 = vrot.lane.b32.xlu0 %v409, 96
  %v411 = vpop.permute.xlu0 %410
  %v416 = vunpack.c.l.b16 %v400
  %v417 = vunpack.c.l.b16 %v401
  %v418 = vunpack.c.l.b16 %v402
  %v419 = vunpack.c.l.b16 %v403
  %v420 = vpack.c.b16 %v417, %v416
  %v421 = vpack.c.b16 %v419, %v418
  %v425 = vsel %vm382, %v411, 0
  %427 = vmatpush.bf16.msra.mxu0 0
  %428 = vmatpush.bf16.msra.mxu0 0
  %429 = vmatpush.bf16.msra.mxu0 0
  %430 = vmatpush.bf16.msra.mxu0 0
  %431 = vmatpush.bf16.msra.mxu0 0
  %432 = vmatpush.bf16.msra.mxu0 0
  %433 = vmatpush.bf16.msra.mxu0 %v421
  %434 = vmatpush.bf16.msra.mxu0 %v420
  %435 = vmatmul.bf16.gmra.mxu0 %v425
  %v436 = vpop.f32.mrf.mxu0
  %v437 = vadd.f32 %v406, %v436
  %v438 = vpop.f32.mrf.mxu0
  %439 = vdwg.mxu0
  %v441 = vrot.slane %v396, 6
  %v443 = vadd.f32 %v261, %v441
  %v444 = vsub.f32 0.0, %v443
  %v445 = vmul.f32 %v444, 1.442695
  %v446 = vpow.pop %v445
  %v447 = vadd.f32 %v446, 1.0
  %v448 = vrcp.pop %v447
  %449 = vrot.lane.b32.xlu0 %v441, 64
  %v450 = vpop.permute.xlu0 %449
  %v452 = vmul.f32 %v448, %v450
  %454 = vrot.lane.b32.xlu0 %v452, 64
  %v455 = vpop.permute.xlu0 %454
  %v457 = vadd.f32 %v261, %v455
  %v458 = vtanh.pop %v457
  %v459 = vsub.f32 1.0, %v448
  %461 = vrot.lane.b32.xlu0 %v458, 96
  %v462 = vpop.permute.xlu0 %461
  %v464 = vmul.f32 %v459, %v462
  %v465 = vrot.slane %v318, 6
  %v467 = vmul.f32 %v448, %v465
  %v468 = vadd.f32 %v464, %v467
  %v470 = vrot.slane %v437, 4
  %v472 = vadd.f32 %v287, %v470
  %v473 = vsub.f32 0.0, %v472
  %v474 = vmul.f32 %v473, 1.442695
  %v475 = vpow.pop %v474
  %v476 = vadd.f32 %v475, 1.0
  %v477 = vrcp.pop %v476
  %478 = vrot.lane.b32.xlu0 %v470, 64
  %v479 = vpop.permute.xlu0 %478
  %v481 = vmul.f32 %v477, %v479
  %483 = vrot.lane.b32.xlu0 %v481, 64
  %v484 = vpop.permute.xlu0 %483
  %v486 = vadd.f32 %v287, %v484
  %v487 = vtanh.pop %v486
  %v488 = vsub.f32 1.0, %v477
  %490 = vrot.lane.b32.xlu0 %v487, 96
  %v491 = vpop.permute.xlu0 %490
  %v493 = vmul.f32 %v488, %v491
  %v494 = vrot.slane %v345, 2
  %v496 = vmul.f32 %v477, %v494
  %v497 = vadd.f32 %v493, %v496
  %499 = vrot.lane.b32.xlu0 %v468, 96
  %v500 = vpop.permute.xlu0 %499
  %vm502 = vcmask 257026
  %503 = vst.msk [vmem:[#allocation2] sm:$0xc] %vm502, %v500
  %505 = vrot.lane.b32.xlu0 %v497, 96
  %v506 = vpop.permute.xlu0 %505
  %vm508 = vcmask 259076
  %509 = vst.msk [vmem:[#allocation3] sm:$0x30] %vm508, %v506
  %v510 = vpack.c.bf16 %v468, %v468
  %v511 = vld [vmem:[%s3] sm:$0xf]
  %v512 = vld [vmem:[%s3 + $0x4] sm:$0xf]
  %v513 = vld [vmem:[%s3 + $0x8] sm:$0xf]
  %v514 = vld [vmem:[%s3 + $0xc] sm:$0xf]
  %v515 = vld [vmem:[%s4] sm:$0x1]
  %v517 = vperm.slane %v515, 0
  %v520 = vrot.slane %v510, 1
  %521 = vrot.lane.b32.xlu0 %v520, 96
  %v522 = vpop.permute.xlu0 %521
  %v527 = vunpack.c.l.b16 %v511
  %v528 = vunpack.c.l.b16 %v512
  %v529 = vunpack.c.l.b16 %v513
  %v530 = vunpack.c.l.b16 %v514
  %v531 = vpack.c.b16 %v528, %v527
  %v532 = vpack.c.b16 %v530, %v529
  %v536 = vsel %vm382, %v522, 0
  %538 = vmatpush.bf16.msra.mxu0 0
  %539 = vmatpush.bf16.msra.mxu0 0
  %540 = vmatpush.bf16.msra.mxu0 0
  %541 = vmatpush.bf16.msra.mxu0 0
  %542 = vmatpush.bf16.msra.mxu0 0
  %543 = vmatpush.bf16.msra.mxu0 0
  %544 = vmatpush.bf16.msra.mxu0 %v532
  %545 = vmatpush.bf16.msra.mxu0 %v531
  %546 = vmatmul.bf16.gmra.mxu0 %v536
  %v547 = vpop.f32.mrf.mxu0
  %v548 = vadd.f32 %v517, %v547
  %v549 = vpop.f32.mrf.mxu0
  %550 = vdwg.mxu0
  %v551 = vpack.c.bf16 %v497, %v497
  %v552 = vld [vmem:[%s5] sm:$0xf]
  %v553 = vld [vmem:[%s5 + $0x4] sm:$0xf]
  %v554 = vld [vmem:[%s5 + $0x8] sm:$0xf]
  %v555 = vld [vmem:[%s5 + $0xc] sm:$0xf]
  %v556 = vld [vmem:[%s6] sm:$0x1]
  %v558 = vperm.slane %v556, 0
  %v561 = vrot.slane %v551, 2
  %562 = vrot.lane.b32.xlu0 %v561, 96
  %v563 = vpop.permute.xlu0 %562
  %v568 = vunpack.c.l.b16 %v552
  %v569 = vunpack.c.l.b16 %v553
  %v570 = vunpack.c.l.b16 %v554
  %v571 = vunpack.c.l.b16 %v555
  %v572 = vpack.c.b16 %v569, %v568
  %v573 = vpack.c.b16 %v571, %v570
  %v577 = vsel %vm382, %v563, 0
  %579 = vmatpush.bf16.msra.mxu0 0
  %580 = vmatpush.bf16.msra.mxu0 0
  %581 = vmatpush.bf16.msra.mxu0 0
  %582 = vmatpush.bf16.msra.mxu0 0
  %583 = vmatpush.bf16.msra.mxu0 0
  %584 = vmatpush.bf16.msra.mxu0 0
  %585 = vmatpush.bf16.msra.mxu0 %v573
  %586 = vmatpush.bf16.msra.mxu0 %v572
  %587 = vmatmul.bf16.gmra.mxu0 %v577
  %v588 = vpop.f32.mrf.mxu0
  %v589 = vadd.f32 %v558, %v588
  %v590 = vpop.f32.mrf.mxu0
  %591 = vdwg.mxu0
  %v593 = vrot.slane %v548, 4
  %v595 = vadd.f32 %v261, %v593
  %v596 = vsub.f32 0.0, %v595
  %v597 = vmul.f32 %v596, 1.442695
  %v598 = vpow.pop %v597
  %v599 = vadd.f32 %v598, 1.0
  %v600 = vrcp.pop %v599
  %601 = vrot.lane.b32.xlu0 %v593, 64
  %v602 = vpop.permute.xlu0 %601
  %v604 = vmul.f32 %v600, %v602
  %606 = vrot.lane.b32.xlu0 %v604, 64
  %v607 = vpop.permute.xlu0 %606
  %v609 = vadd.f32 %v261, %v607
  %v610 = vtanh.pop %v609
  %v611 = vsub.f32 1.0, %v600
  %613 = vrot.lane.b32.xlu0 %v610, 96
  %v614 = vpop.permute.xlu0 %613
  %v616 = vmul.f32 %v611, %v614
  %v617 = vrot.slane %v468, 6
  %v619 = vmul.f32 %v600, %v617
  %v620 = vadd.f32 %v616, %v619
  %v622 = vrot.slane %v589, 6
  %v624 = vadd.f32 %v287, %v622
  %v625 = vsub.f32 0.0, %v624
  %v626 = vmul.f32 %v625, 1.442695
  %v627 = vpow.pop %v626
  %v628 = vadd.f32 %v627, 1.0
  %v629 = vrcp.pop %v628
  %630 = vrot.lane.b32.xlu0 %v622, 64
  %v631 = vpop.permute.xlu0 %630
  %v633 = vmul.f32 %v629, %v631
  %635 = vrot.lane.b32.xlu0 %v633, 64
  %v636 = vpop.permute.xlu0 %635
  %v638 = vadd.f32 %v287, %v636
  %v639 = vtanh.pop %v638
  %v640 = vsub.f32 1.0, %v629
  %642 = vrot.lane.b32.xlu0 %v639, 96
  %v643 = vpop.permute.xlu0 %642
  %v645 = vmul.f32 %v640, %v643
  %v646 = vrot.slane %v497, 2
  %v648 = vmul.f32 %v629, %v646
  %v649 = vadd.f32 %v645, %v648
  %651 = vrot.lane.b32.xlu0 %v620, 96
  %v652 = vpop.permute.xlu0 %651
  %654 = vst.msk [vmem:[#allocation2] sm:$0x30] %vm508, %v652
  %656 = vrot.lane.b32.xlu0 %v649, 96
  %v657 = vpop.permute.xlu0 %656
  %659 = vst.msk [vmem:[#allocation3] sm:$0xc] %vm502, %v657
  %v660 = vpack.c.bf16 %v620, %v620
  %v661 = vld [vmem:[%s3] sm:$0xf]
  %v662 = vld [vmem:[%s3 + $0x4] sm:$0xf]
  %v663 = vld [vmem:[%s3 + $0x8] sm:$0xf]
  %v664 = vld [vmem:[%s3 + $0xc] sm:$0xf]
  %v665 = vld [vmem:[%s4] sm:$0x1]
  %v667 = vperm.slane %v665, 0
  %v670 = vrot.slane %v660, 2
  %671 = vrot.lane.b32.xlu0 %v670, 96
  %v672 = vpop.permute.xlu0 %671
  %v677 = vunpack.c.l.b16 %v661
  %v678 = vunpack.c.l.b16 %v662
  %v679 = vunpack.c.l.b16 %v663
  %v680 = vunpack.c.l.b16 %v664
  %v681 = vpack.c.b16 %v678, %v677
  %v682 = vpack.c.b16 %v680, %v679
  %v686 = vsel %vm382, %v672, 0
  %688 = vmatpush.bf16.msra.mxu0 0
  %689 = vmatpush.bf16.msra.mxu0 0
  %690 = vmatpush.bf16.msra.mxu0 0
  %691 = vmatpush.bf16.msra.mxu0 0
  %692 = vmatpush.bf16.msra.mxu0 0
  %693 = vmatpush.bf16.msra.mxu0 0
  %694 = vmatpush.bf16.msra.mxu0 %v682
  %695 = vmatpush.bf16.msra.mxu0 %v681
  %696 = vmatmul.bf16.gmra.mxu0 %v686
  %v697 = vpop.f32.mrf.mxu0
  %v698 = vadd.f32 %v667, %v697
  %v699 = vpop.f32.mrf.mxu0
  %700 = vdwg.mxu0
  %v701 = vpack.c.bf16 %v649, %v649
  %v702 = vld [vmem:[%s5] sm:$0xf]
  %v703 = vld [vmem:[%s5 + $0x4] sm:$0xf]
  %v704 = vld [vmem:[%s5 + $0x8] sm:$0xf]
  %v705 = vld [vmem:[%s5 + $0xc] sm:$0xf]
  %v706 = vld [vmem:[%s6] sm:$0x1]
  %v708 = vperm.slane %v706, 0
  %v711 = vrot.slane %v701, 1
  %712 = vrot.lane.b32.xlu0 %v711, 96
  %v713 = vpop.permute.xlu0 %712
  %v718 = vunpack.c.l.b16 %v702
  %v719 = vunpack.c.l.b16 %v703
  %v720 = vunpack.c.l.b16 %v704
  %v721 = vunpack.c.l.b16 %v705
  %v722 = vpack.c.b16 %v719, %v718
  %v723 = vpack.c.b16 %v721, %v720
  %v727 = vsel %vm382, %v713, 0
  %729 = vmatpush.bf16.msra.mxu0 0
  %730 = vmatpush.bf16.msra.mxu0 0
  %731 = vmatpush.bf16.msra.mxu0 0
  %732 = vmatpush.bf16.msra.mxu0 0
  %733 = vmatpush.bf16.msra.mxu0 0
  %734 = vmatpush.bf16.msra.mxu0 0
  %735 = vmatpush.bf16.msra.mxu0 %v723
  %736 = vmatpush.bf16.msra.mxu0 %v722
  %737 = vmatmul.bf16.gmra.mxu0 %v727
  %v738 = vpop.f32.mrf.mxu0
  %v739 = vadd.f32 %v708, %v738
  %v740 = vpop.f32.mrf.mxu0
  %741 = vdwg.mxu0
  %v743 = vrot.slane %v698, 2
  %v745 = vadd.f32 %v261, %v743
  %v746 = vsub.f32 0.0, %v745
  %v747 = vmul.f32 %v746, 1.442695
  %v748 = vpow.pop %v747
  %v749 = vadd.f32 %v748, 1.0
  %v750 = vrcp.pop %v749
  %751 = vrot.lane.b32.xlu0 %v743, 64
  %v752 = vpop.permute.xlu0 %751
  %v754 = vmul.f32 %v750, %v752
  %756 = vrot.lane.b32.xlu0 %v754, 64
  %v757 = vpop.permute.xlu0 %756
  %v759 = vadd.f32 %v261, %v757
  %v760 = vtanh.pop %v759
  %v761 = vsub.f32 1.0, %v750
  %763 = vrot.lane.b32.xlu0 %v760, 96
  %v764 = vpop.permute.xlu0 %763
  %v766 = vmul.f32 %v761, %v764
  %v767 = vrot.slane %v620, 6
  %v769 = vmul.f32 %v750, %v767
  %v770 = vadd.f32 %v766, %v769
  %v771 = vadd.f32 %v287, %v739
  %v772 = vsub.f32 0.0, %v771
  %v773 = vmul.f32 %v772, 1.442695
  %v774 = vpow.pop %v773
  %v775 = vadd.f32 %v774, 1.0
  %v776 = vrcp.pop %v775
  %778 = vrot.lane.b32.xlu0 %v739, 64
  %v779 = vpop.permute.xlu0 %778
  %v781 = vmul.f32 %v776, %v779
  %783 = vrot.lane.b32.xlu0 %v781, 64
  %v784 = vpop.permute.xlu0 %783
  %v786 = vadd.f32 %v287, %v784
  %v787 = vtanh.pop %v786
  %v788 = vsub.f32 1.0, %v776
  %790 = vrot.lane.b32.xlu0 %v787, 96
  %v791 = vpop.permute.xlu0 %790
  %v793 = vmul.f32 %v788, %v791
  %v794 = vrot.slane %v649, 2
  %v796 = vmul.f32 %v776, %v794
  %v797 = vadd.f32 %v793, %v796
  %799 = vrot.lane.b32.xlu0 %v770, 96
  %v800 = vpop.permute.xlu0 %799
  %802 = vst.msk [vmem:[#allocation2] sm:$0xc0] %vm356, %v800
  %804 = vrot.lane.b32.xlu0 %v797, 96
  %v805 = vpop.permute.xlu0 %804
  %807 = vst.msk [vmem:[#allocation3] sm:$0x3] %vm350, %v805
  %v808 = vld [vmem:[#allocation2] sm:$0xff]
  %v809 = vld [vmem:[#allocation3] sm:$0xff]
  %v810 = vpack.c.bf16 %v808, %v808
  %v811 = vld [vmem:[%s7] sm:$0xf]
  %v812 = vld [vmem:[%s7 + $0x4] sm:$0xf]
  %v813 = vld [vmem:[%s7 + $0x8] sm:$0xf]
  %v814 = vld [vmem:[%s7 + $0xc] sm:$0xf]
  %v815 = vpack.c.bf16 %v809, %v809
  %v816 = vld [vmem:[%s8] sm:$0xf]
  %v817 = vld [vmem:[%s8 + $0x4] sm:$0xf]
  %v818 = vld [vmem:[%s8 + $0x8] sm:$0xf]
  %v819 = vld [vmem:[%s8 + $0xc] sm:$0xf]
  %v824 = vunpack.c.l.b16 %v816
  %v825 = vunpack.c.l.b16 %v817
  %v826 = vunpack.c.l.b16 %v818
  %v827 = vunpack.c.l.b16 %v819
  %v828 = vpack.c.b16 %v825, %v824
  %v829 = vpack.c.b16 %v827, %v826
  %v833 = vsel %vm382, %v815, 0
  %835 = vmatpush.bf16.msra.mxu0 0
  %836 = vmatpush.bf16.msra.mxu0 0
  %837 = vmatpush.bf16.msra.mxu0 0
  %838 = vmatpush.bf16.msra.mxu0 0
  %839 = vmatpush.bf16.msra.mxu0 0
  %840 = vmatpush.bf16.msra.mxu0 0
  %841 = vmatpush.bf16.msra.mxu0 %v829
  %842 = vmatpush.bf16.msra.mxu0 %v828
  %843 = vmatmul.bf16.gmra.mxu0 %v833
  %v844 = vpop.f32.mrf.mxu0
  %v845 = vadd.f32 0.0, %v844
  %v846 = vpop.f32.mrf.mxu0
  %847 = vdwg.mxu0
  %v852 = vunpack.c.l.b16 %v811
  %v853 = vunpack.c.l.b16 %v812
  %v854 = vunpack.c.l.b16 %v813
  %v855 = vunpack.c.l.b16 %v814
  %v856 = vpack.c.b16 %v853, %v852
  %v857 = vpack.c.b16 %v855, %v854
  %v861 = vsel %vm382, %v810, 0
  %863 = vmatpush.bf16.msra.mxu0 0
  %864 = vmatpush.bf16.msra.mxu0 0
  %865 = vmatpush.bf16.msra.mxu0 0
  %866 = vmatpush.bf16.msra.mxu0 0
  %867 = vmatpush.bf16.msra.mxu0 0
  %868 = vmatpush.bf16.msra.mxu0 0
  %869 = vmatpush.bf16.msra.mxu0 %v857
  %870 = vmatpush.bf16.msra.mxu0 %v856
  %871 = vmatmul.bf16.gmra.mxu0 %v861
  %v872 = vpop.f32.mrf.mxu0
  %v873 = vadd.f32 %v845, %v872
  %v874 = vpop.f32.mrf.mxu0
  %875 = vdwg.mxu0
  %v876 = vld [vmem:[%s9] sm:$0x1]
  %v878 = vperm.slane %v876, 0
  %v880 = vadd.f32 %v873, %v878
  %v881 = vmul.f32 %v880, 0.5
  %v882 = vmul.f32 %v880, 0.044715
  %v883 = vmul.f32 %v882, %v880
  %v884 = vmul.f32 %v883, %v880
  %v885 = vadd.f32 %v880, %v884
  %v886 = vmul.f32 %v885, 0.7978846
  %v887 = vtanh.pop %v886
  %v888 = vadd.f32 %v887, 1.0
  %v889 = vmul.f32 %v881, %v888
  %v891 = vrot.slane %v889, 2
  %v893 = vadd.f32 %v889, %v891
  %v894 = vrot.slane %v889, 4
  %v896 = vadd.f32 %v893, %v894
  %v897 = vrot.slane %v889, 6
  %v899 = vadd.f32 %v896, %v897
  %v900 = vmul.f32 %v899, 0.25
  %901 = vst [vmem:[%s10] sm:$0x3] %v900
  // Predicated region
  $region42: #{avg_modal_model.4} parent=0 // pred_check
    _
  $region43: #{avg_modal_model.4} parent=0 // pred_check_branch
    %903 = sbr.rel (0) target = $region45
  $region44: #{avg_modal_model.4} parent=0 // pred_region
    _
  $region45: #{avg_modal_model.4} parent=0 // pred_fallthru
    _
  // Predicated region
  $region46: #{avg_modal_model.4} parent=0 // pred_check
    _
  $region47: #{avg_modal_model.4} parent=0 // pred_check_branch
    %905 = sbr.rel (0) target = $region49
  $region48: #{avg_modal_model.4} parent=0 // pred_region
    _
  $region49: #{avg_modal_model.4} parent=0 // pred_fallthru
    _

// kernel: avg_modal_model.3
$region0: #{avg_modal_model.3}
  #allocation0 [shape = 'u32[]', space=smem, size = 0x4, offset = 0x4, fixed_abs, tag = 'smem constant byte address 0x4 - core index']
  #allocation1 [shape = 'u32[72,128]{1,0:T(1,128)}', space=vmem, size = 0x9000, scoped, tag = 'internal scratch']
  #allocation2 [shape = 'bf16[8,384]{1,0:T(8,128)(2,1)}', space=vmem, size = 0x1800, scoped, tag = 'scratch operand']
  #allocation3 [shape = 'f32[8,32]{1,0:T(8,128)}', space=vmem, size = 0x1000, scoped, tag = 'scratch operand']
  #allocation4 [shape = 'f32[8,32]{1,0:T(8,128)}', space=vmem, size = 0x1000, scoped, tag = 'scratch operand']
  %s0 = inlined_call_operand.vmem [shape: f32[16,256], index: 0, kind: input, shape index: {}]
  %s1 = inlined_call_operand.vmem [shape: bf16[256,128], index: 1, kind: input, shape index: {}]
  %s2 = inlined_call_operand.vmem [shape: f32[1,128], index: 2, kind: input, shape index: {}]
  %s3 = inlined_call_operand.vmem [shape: bf16[384,128], index: 3, kind: input, shape index: {}]
  %s4 = inlined_call_operand.vmem [shape: f32[1,128], index: 4, kind: input, shape index: {}]
  %s5 = inlined_call_operand.vmem [shape: bf16[128,256], index: 5, kind: input, shape index: {}]
  %s6 = inlined_call_operand.vmem [shape: f32[1,256], index: 6, kind: input, shape index: {}]
  %s7 = inlined_call_operand.vmem [shape: bf16[32,128], index: 7, kind: input, shape index: {}]
  %s8 = inlined_call_operand.vmem [shape: f32[1,128], index: 8, kind: input, shape index: {}]
  %s9 = inlined_call_operand.vmem [shape: bf16[32,128], index: 9, kind: input, shape index: {}]
  %s10 = inlined_call_operand.vmem [shape: f32[1,128], index: 10, kind: input, shape index: {}]
  %s11 = inlined_call_operand.vmem [shape: bf16[32,128], index: 11, kind: input, shape index: {}]
  %s12 = inlined_call_operand.vmem [shape: bf16[32,128], index: 12, kind: input, shape index: {}]
  %s13 = inlined_call_operand.vmem [shape: f32[1,128], index: 13, kind: input, shape index: {}]
  %s14 = inlined_call_operand.vmem [shape: f32[2,128], index: 14, kind: output, shape index: {}]
  %s15 = sld [smem:[#allocation0]]
  $region66: #{avg_modal_model.3} parent=0
    _
  %s17 = ssub.s32 1, %s15
  %s18 = scalar_select 0, %s17, %s15
  // Predicated region
  $region2: #{avg_modal_model.3} parent=0 // pred_check
    _
  $region3: #{avg_modal_model.3} parent=0 // pred_check_branch
    %20 = sbr.rel (0) target = $region5
  $region4: #{avg_modal_model.3} parent=0 // pred_region
    _
  $region5: #{avg_modal_model.3} parent=0 // pred_fallthru
    _
  // Predicated region
  $region6: #{avg_modal_model.3} parent=0 // pred_check
    _
  $region7: #{avg_modal_model.3} parent=0 // pred_check_branch
    %22 = sbr.rel (0) target = $region9
  $region8: #{avg_modal_model.3} parent=0 // pred_region
    _
  $region9: #{avg_modal_model.3} parent=0 // pred_fallthru
    _
  // Predicated region
  $region10: #{avg_modal_model.3} parent=0 // pred_check
    _
  $region11: #{avg_modal_model.3} parent=0 // pred_check_branch
    %24 = sbr.rel (0) target = $region13
  $region12: #{avg_modal_model.3} parent=0 // pred_region
    _
  $region13: #{avg_modal_model.3} parent=0 // pred_fallthru
    _
  // Predicated region
  $region14: #{avg_modal_model.3} parent=0 // pred_check
    _
  $region15: #{avg_modal_model.3} parent=0 // pred_check_branch
    %26 = sbr.rel (0) target = $region17
  $region16: #{avg_modal_model.3} parent=0 // pred_region
    _
  $region17: #{avg_modal_model.3} parent=0 // pred_fallthru
    _
  // Predicated region
  $region18: #{avg_modal_model.3} parent=0 // pred_check
    _
  $region19: #{avg_modal_model.3} parent=0 // pred_check_branch
    %28 = sbr.rel (0) target = $region21
  $region20: #{avg_modal_model.3} parent=0 // pred_region
    _
  $region21: #{avg_modal_model.3} parent=0 // pred_fallthru
    _
  // Predicated region
  $region22: #{avg_modal_model.3} parent=0 // pred_check
    _
  $region23: #{avg_modal_model.3} parent=0 // pred_check_branch
    %30 = sbr.rel (0) target = $region25
  $region24: #{avg_modal_model.3} parent=0 // pred_region
    _
  $region25: #{avg_modal_model.3} parent=0 // pred_fallthru
    _
  // Predicated region
  $region26: #{avg_modal_model.3} parent=0 // pred_check
    _
  $region27: #{avg_modal_model.3} parent=0 // pred_check_branch
    %32 = sbr.rel (0) target = $region29
  $region28: #{avg_modal_model.3} parent=0 // pred_region
    _
  $region29: #{avg_modal_model.3} parent=0 // pred_fallthru
    _
  // Predicated region
  $region30: #{avg_modal_model.3} parent=0 // pred_check
    _
  $region31: #{avg_modal_model.3} parent=0 // pred_check_branch
    %34 = sbr.rel (0) target = $region33
  $region32: #{avg_modal_model.3} parent=0 // pred_region
    _
  $region33: #{avg_modal_model.3} parent=0 // pred_fallthru
    _
  // Predicated region
  $region34: #{avg_modal_model.3} parent=0 // pred_check
    _
  $region35: #{avg_modal_model.3} parent=0 // pred_check_branch
    %36 = sbr.rel (0) target = $region37
  $region36: #{avg_modal_model.3} parent=0 // pred_region
    _
  $region37: #{avg_modal_model.3} parent=0 // pred_fallthru
    _
  // Predicated region
  $region38: #{avg_modal_model.3} parent=0 // pred_check
    _
  $region39: #{avg_modal_model.3} parent=0 // pred_check_branch
    %38 = sbr.rel (0) target = $region41
  $region40: #{avg_modal_model.3} parent=0 // pred_region
    _
  $region41: #{avg_modal_model.3} parent=0 // pred_fallthru
    _
  // Predicated region
  $region42: #{avg_modal_model.3} parent=0 // pred_check
    _
  $region43: #{avg_modal_model.3} parent=0 // pred_check_branch
    %40 = sbr.rel (0) target = $region45
  $region44: #{avg_modal_model.3} parent=0 // pred_region
    _
  $region45: #{avg_modal_model.3} parent=0 // pred_fallthru
    _
  // Predicated region
  $region46: #{avg_modal_model.3} parent=0 // pred_check
    _
  $region47: #{avg_modal_model.3} parent=0 // pred_check_branch
    %42 = sbr.rel (0) target = $region49
  $region48: #{avg_modal_model.3} parent=0 // pred_region
    _
  $region49: #{avg_modal_model.3} parent=0 // pred_fallthru
    _
  // Predicated region
  $region50: #{avg_modal_model.3} parent=0 // pred_check
    _
  $region51: #{avg_modal_model.3} parent=0 // pred_check_branch
    %44 = sbr.rel (0) target = $region53
  $region52: #{avg_modal_model.3} parent=0 // pred_region
    _
  $region53: #{avg_modal_model.3} parent=0 // pred_fallthru
    _
  // Predicated region
  $region54: #{avg_modal_model.3} parent=0 // pred_check
    _
  $region55: #{avg_modal_model.3} parent=0 // pred_check_branch
    %46 = sbr.rel (0) target = $region57
  $region56: #{avg_modal_model.3} parent=0 // pred_region
    _
  $region57: #{avg_modal_model.3} parent=0 // pred_fallthru
    _
  %v48 = vld [vmem:[%s0] sm:$0xff]
  %v49 = vld [vmem:[%s0 + $0x8] sm:$0xff]
  %v50 = vld [vmem:[%s0 + $0x10] sm:$0xff]
  %v51 = vld [vmem:[%s0 + $0x18] sm:$0xff]
  %v52 = vpack.c.bf16 %v50, %v48
  %v53 = vpack.c.bf16 %v51, %v49
  %v54 = vld [vmem:[%s1] sm:$0xf]
  %v55 = vld [vmem:[%s1 + $0x4] sm:$0xf]
  %v56 = vld [vmem:[%s1 + $0x8] sm:$0xf]
  %v57 = vld [vmem:[%s1 + $0xc] sm:$0xf]
  %v58 = vld [vmem:[%s1 + $0x10] sm:$0xf]
  %v59 = vld [vmem:[%s1 + $0x14] sm:$0xf]
  %v60 = vld [vmem:[%s1 + $0x18] sm:$0xf]
  %v61 = vld [vmem:[%s1 + $0x1c] sm:$0xf]
  %v62 = vld [vmem:[%s1 + $0x20] sm:$0xf]
  %v63 = vld [vmem:[%s1 + $0x24] sm:$0xf]
  %v64 = vld [vmem:[%s1 + $0x28] sm:$0xf]
  %v65 = vld [vmem:[%s1 + $0x2c] sm:$0xf]
  %v66 = vld [vmem:[%s1 + $0x30] sm:$0xf]
  %v67 = vld [vmem:[%s1 + $0x34] sm:$0xf]
  %v68 = vld [vmem:[%s1 + $0x38] sm:$0xf]
  %v69 = vld [vmem:[%s1 + $0x3c] sm:$0xf]
  %v70 = vld [vmem:[%s1 + $0x40] sm:$0xf]
  %v71 = vld [vmem:[%s1 + $0x44] sm:$0xf]
  %v72 = vld [vmem:[%s1 + $0x48] sm:$0xf]
  %v73 = vld [vmem:[%s1 + $0x4c] sm:$0xf]
  %v74 = vld [vmem:[%s1 + $0x50] sm:$0xf]
  %v75 = vld [vmem:[%s1 + $0x54] sm:$0xf]
  %v76 = vld [vmem:[%s1 + $0x58] sm:$0xf]
  %v77 = vld [vmem:[%s1 + $0x5c] sm:$0xf]
  %v78 = vld [vmem:[%s1 + $0x60] sm:$0xf]
  %v79 = vld [vmem:[%s1 + $0x64] sm:$0xf]
  %v80 = vld [vmem:[%s1 + $0x68] sm:$0xf]
  %v81 = vld [vmem:[%s1 + $0x6c] sm:$0xf]
  %v82 = vld [vmem:[%s1 + $0x70] sm:$0xf]
  %v83 = vld [vmem:[%s1 + $0x74] sm:$0xf]
  %v84 = vld [vmem:[%s1 + $0x78] sm:$0xf]
  %v85 = vld [vmem:[%s1 + $0x7c] sm:$0xf]
  %v86 = vld [vmem:[%s2] sm:$0x1]
  %v88 = vperm.slane %v86, 0
  %v122 = vunpack.c.l.b16 %v54
  %v123 = vunpack.c.l.b16 %v55
  %v124 = vunpack.c.l.b16 %v56
  %v125 = vunpack.c.l.b16 %v57
  %v126 = vunpack.c.l.b16 %v58
  %v127 = vunpack.c.l.b16 %v59
  %v128 = vunpack.c.l.b16 %v60
  %v129 = vunpack.c.l.b16 %v61
  %v130 = vunpack.c.l.b16 %v62
  %v131 = vunpack.c.l.b16 %v63
  %v132 = vunpack.c.l.b16 %v64
  %v133 = vunpack.c.l.b16 %v65
  %v134 = vunpack.c.l.b16 %v66
  %v135 = vunpack.c.l.b16 %v67
  %v136 = vunpack.c.l.b16 %v68
  %v137 = vunpack.c.l.b16 %v69
  %v138 = vunpack.c.l.b16 %v70
  %v139 = vunpack.c.l.b16 %v71
  %v140 = vunpack.c.l.b16 %v72
  %v141 = vunpack.c.l.b16 %v73
  %v142 = vunpack.c.l.b16 %v74
  %v143 = vunpack.c.l.b16 %v75
  %v144 = vunpack.c.l.b16 %v76
  %v145 = vunpack.c.l.b16 %v77
  %v146 = vunpack.c.l.b16 %v78
  %v147 = vunpack.c.l.b16 %v79
  %v148 = vunpack.c.l.b16 %v80
  %v149 = vunpack.c.l.b16 %v81
  %v150 = vunpack.c.l.b16 %v82
  %v151 = vunpack.c.l.b16 %v83
  %v152 = vunpack.c.l.b16 %v84
  %v153 = vunpack.c.l.b16 %v85
  %v154 = vpack.c.b16 %v123, %v122
  %v155 = vpack.c.b16 %v125, %v124
  %v156 = vpack.c.b16 %v127, %v126
  %v157 = vpack.c.b16 %v129, %v128
  %v158 = vpack.c.b16 %v131, %v130
  %v159 = vpack.c.b16 %v133, %v132
  %v160 = vpack.c.b16 %v135, %v134
  %v161 = vpack.c.b16 %v137, %v136
  %v162 = vpack.c.b16 %v139, %v138
  %v163 = vpack.c.b16 %v141, %v140
  %v164 = vpack.c.b16 %v143, %v142
  %v165 = vpack.c.b16 %v145, %v144
  %v166 = vpack.c.b16 %v147, %v146
  %v167 = vpack.c.b16 %v149, %v148
  %v168 = vpack.c.b16 %v151, %v150
  %v169 = vpack.c.b16 %v153, %v152
  %186 = vmatpush.bf16.msra.mxu0 %v161
  %187 = vmatpush.bf16.msra.mxu0 %v160
  %188 = vmatpush.bf16.msra.mxu0 %v159
  %189 = vmatpush.bf16.msra.mxu0 %v158
  %190 = vmatpush.bf16.msra.mxu0 %v157
  %191 = vmatpush.bf16.msra.mxu0 %v156
  %192 = vmatpush.bf16.msra.mxu0 %v155
  %193 = vmatpush.bf16.msra.mxu0 %v154
  %194 = vmatmul.bf16.gmra.mxu0 %v52
  %v195 = vpop.f32.mrf.mxu0
  %v196 = vadd.f32 %v88, %v195
  %v197 = vpop.f32.mrf.mxu0
  %v198 = vadd.f32 %v88, %v197
  %199 = vdwg.mxu0
  %200 = vmatpush.bf16.msra.mxu0 %v169
  %201 = vmatpush.bf16.msra.mxu0 %v168
  %202 = vmatpush.bf16.msra.mxu0 %v167
  %203 = vmatpush.bf16.msra.mxu0 %v166
  %204 = vmatpush.bf16.msra.mxu0 %v165
  %205 = vmatpush.bf16.msra.mxu0 %v164
  %206 = vmatpush.bf16.msra.mxu0 %v163
  %207 = vmatpush.bf16.msra.mxu0 %v162
  %208 = vmatmul.bf16.gmra.mxu0 %v53
  %v209 = vpop.f32.mrf.mxu0
  %v210 = vadd.f32 %v196, %v209
  %v211 = vpop.f32.mrf.mxu0
  %v212 = vadd.f32 %v198, %v211
  %213 = vdwg.mxu0
  %v214 = vmul.f32 %v210, 0.5
  %v215 = vmul.f32 %v212, 0.5
  %v216 = vmul.f32 %v210, 0.044715
  %v217 = vmul.f32 %v212, 0.044715
  %v218 = vmul.f32 %v216, %v210
  %v219 = vmul.f32 %v217, %v212
  %v220 = vmul.f32 %v218, %v210
  %v221 = vmul.f32 %v219, %v212
  %v222 = vadd.f32 %v210, %v220
  %v223 = vadd.f32 %v212, %v221
  %v224 = vmul.f32 %v222, 0.7978846
  %v225 = vmul.f32 %v223, 0.7978846
  %v226 = vtanh.pop %v224
  %v227 = vtanh.pop %v225
  %v228 = vadd.f32 %v226, 1.0
  %v229 = vadd.f32 %v227, 1.0
  %v230 = vmul.f32 %v214, %v228
  %v231 = vmul.f32 %v215, %v229
  %v232 = vpack.c.bf16 %v230, %v230
  %v233 = vpack.c.bf16 %v231, %v231
  %234 = vst [vmem:[#allocation2] sm:$0xff] 0
  %235 = vst [vmem:[#allocation2 + $0x8] sm:$0xf] 0
  %236 = vst [vmem:[#allocation2 + $0x4] sm:$0x1] %v232
  %v238 = vrot.slane %v232, 5
  %v239 = vrot.slane %v238, 4
  %241 = vst [vmem:[#allocation2 + $0x8] sm:$0x1] %v239
  %242 = vst [vmem:[#allocation2] sm:$0x2] %v232
  %243 = vst [vmem:[#allocation2 + $0x4] sm:$0x2] %v239
  %v244 = vrot.slane %v232, 6
  %v245 = vrot.slane %v244, 4
  %247 = vst [vmem:[#allocation2 + $0x8] sm:$0x2] %v245
  %248 = vst [vmem:[#allocation2] sm:$0x4] %v239
  %v250 = vrot.slane %v233, 6
  %252 = vst [vmem:[#allocation2 + $0x4] sm:$0x4] %v250
  %v253 = vrot.slane %v233, 7
  %255 = vst [vmem:[#allocation2 + $0x8] sm:$0x4] %v253
  %256 = vst [vmem:[#allocation2] sm:$0x8] %v250
  %257 = vst [vmem:[#allocation2 + $0x4] sm:$0x8] %v253
  %258 = vst [vmem:[#allocation2 + $0x8] sm:$0x8] %v233
  %v259 = vld [vmem:[#allocation2] sm:$0xff]
  %v260 = vld [vmem:[#allocation2 + $0x8] sm:$0xf]
  %v261 = vld [vmem:[%s3] sm:$0xf]
  %v262 = vld [vmem:[%s3 + $0x4] sm:$0xf]
  %v263 = vld [vmem:[%s3 + $0x8] sm:$0xf]
  %v264 = vld [vmem:[%s3 + $0xc] sm:$0xf]
  %v265 = vld [vmem:[%s3 + $0x10] sm:$0xf]
  %v266 = vld [vmem:[%s3 + $0x14] sm:$0xf]
  %v267 = vld [vmem:[%s3 + $0x18] sm:$0xf]
  %v268 = vld [vmem:[%s3 + $0x1c] sm:$0xf]
  %v269 = vld [vmem:[%s3 + $0x20] sm:$0xf]
  %v270 = vld [vmem:[%s3 + $0x24] sm:$0xf]
  %v271 = vld [vmem:[%s3 + $0x28] sm:$0xf]
  %v272 = vld [vmem:[%s3 + $0x2c] sm:$0xf]
  %v273 = vld [vmem:[%s3 + $0x30] sm:$0xf]
  %v274 = vld [vmem:[%s3 + $0x34] sm:$0xf]
  %v275 = vld [vmem:[%s3 + $0x38] sm:$0xf]
  %v276 = vld [vmem:[%s3 + $0x3c] sm:$0xf]
  %v277 = vld [vmem:[%s3 + $0x40] sm:$0xf]
  %v278 = vld [vmem:[%s3 + $0x44] sm:$0xf]
  %v279 = vld [vmem:[%s3 + $0x48] sm:$0xf]
  %v280 = vld [vmem:[%s3 + $0x4c] sm:$0xf]
  %v281 = vld [vmem:[%s3 + $0x50] sm:$0xf]
  %v282 = vld [vmem:[%s3 + $0x54] sm:$0xf]
  %v283 = vld [vmem:[%s3 + $0x58] sm:$0xf]
  %v284 = vld [vmem:[%s3 + $0x5c] sm:$0xf]
  %v285 = vld [vmem:[%s3 + $0x60] sm:$0xf]
  %v286 = vld [vmem:[%s3 + $0x64] sm:$0xf]
  %v287 = vld [vmem:[%s3 + $0x68] sm:$0xf]
  %v288 = vld [vmem:[%s3 + $0x6c] sm:$0xf]
  %v289 = vld [vmem:[%s3 + $0x70] sm:$0xf]
  %v290 = vld [vmem:[%s3 + $0x74] sm:$0xf]
  %v291 = vld [vmem:[%s3 + $0x78] sm:$0xf]
  %v292 = vld [vmem:[%s3 + $0x7c] sm:$0xf]
  %v293 = vld [vmem:[%s3 + $0x80] sm:$0xf]
  %v294 = vld [vmem:[%s3 + $0x84] sm:$0xf]
  %v295 = vld [vmem:[%s3 + $0x88] sm:$0xf]
  %v296 = vld [vmem:[%s3 + $0x8c] sm:$0xf]
  %v297 = vld [vmem:[%s3 + $0x90] sm:$0xf]
  %v298 = vld [vmem:[%s3 + $0x94] sm:$0xf]
  %v299 = vld [vmem:[%s3 + $0x98] sm:$0xf]
  %v300 = vld [vmem:[%s3 + $0x9c] sm:$0xf]
  %v301 = vld [vmem:[%s3 + $0xa0] sm:$0xf]
  %v302 = vld [vmem:[%s3 + $0xa4] sm:$0xf]
  %v303 = vld [vmem:[%s3 + $0xa8] sm:$0xf]
  %v304 = vld [vmem:[%s3 + $0xac] sm:$0xf]
  %v305 = vld [vmem:[%s3 + $0xb0] sm:$0xf]
  %v306 = vld [vmem:[%s3 + $0xb4] sm:$0xf]
  %v307 = vld [vmem:[%s3 + $0xb8] sm:$0xf]
  %v308 = vld [vmem:[%s3 + $0xbc] sm:$0xf]
  %v309 = vld [vmem:[%s4] sm:$0x1]
  %v311 = vperm.slane %v309, 0
  %v315 = vunpack.c.l.b16 %v259
  %v316 = vunpack.c.h.b16 %v259
  %v317 = vunpack.c.l.b16 %v260
  %v318 = vpack.c.b16 %v315, %v315
  %v319 = vpack.c.b16 %v316, %v316
  %v320 = vpack.c.b16 %v317, %v317
  %v372 = vunpack.c.l.b16 %v261
  %v373 = vunpack.c.l.b16 %v262
  %v374 = vunpack.c.l.b16 %v263
  %v375 = vunpack.c.l.b16 %v264
  %v376 = vunpack.c.l.b16 %v265
  %v377 = vunpack.c.l.b16 %v266
  %v378 = vunpack.c.l.b16 %v267
  %v379 = vunpack.c.l.b16 %v268
  %v380 = vunpack.c.l.b16 %v269
  %v381 = vunpack.c.l.b16 %v270
  %v382 = vunpack.c.l.b16 %v271
  %v383 = vunpack.c.l.b16 %v272
  %v384 = vunpack.c.l.b16 %v273
  %v385 = vunpack.c.l.b16 %v274
  %v386 = vunpack.c.l.b16 %v275
  %v387 = vunpack.c.l.b16 %v276
  %v388 = vunpack.c.l.b16 %v277
  %v389 = vunpack.c.l.b16 %v278
  %v390 = vunpack.c.l.b16 %v279
  %v391 = vunpack.c.l.b16 %v280
  %v392 = vunpack.c.l.b16 %v281
  %v393 = vunpack.c.l.b16 %v282
  %v394 = vunpack.c.l.b16 %v283
  %v395 = vunpack.c.l.b16 %v284
  %v396 = vunpack.c.l.b16 %v285
  %v397 = vunpack.c.l.b16 %v286
  %v398 = vunpack.c.l.b16 %v287
  %v399 = vunpack.c.l.b16 %v288
  %v400 = vunpack.c.l.b16 %v289
  %v401 = vunpack.c.l.b16 %v290
  %v402 = vunpack.c.l.b16 %v291
  %v403 = vunpack.c.l.b16 %v292
  %v404 = vunpack.c.l.b16 %v293
  %v405 = vunpack.c.l.b16 %v294
  %v406 = vunpack.c.l.b16 %v295
  %v407 = vunpack.c.l.b16 %v296
  %v408 = vunpack.c.l.b16 %v297
  %v409 = vunpack.c.l.b16 %v298
  %v410 = vunpack.c.l.b16 %v299
  %v411 = vunpack.c.l.b16 %v300
  %v412 = vunpack.c.l.b16 %v301
  %v413 = vunpack.c.l.b16 %v302
  %v414 = vunpack.c.l.b16 %v303
  %v415 = vunpack.c.l.b16 %v304
  %v416 = vunpack.c.l.b16 %v305
  %v417 = vunpack.c.l.b16 %v306
  %v418 = vunpack.c.l.b16 %v307
  %v419 = vunpack.c.l.b16 %v308
  %v420 = vpack.c.b16 %v373, %v372
  %v421 = vpack.c.b16 %v375, %v374
  %v422 = vpack.c.b16 %v377, %v376
  %v423 = vpack.c.b16 %v379, %v378
  %v424 = vpack.c.b16 %v381, %v380
  %v425 = vpack.c.b16 %v383, %v382
  %v426 = vpack.c.b16 %v385, %v384
  %v427 = vpack.c.b16 %v387, %v386
  %v428 = vpack.c.b16 %v389, %v388
  %v429 = vpack.c.b16 %v391, %v390
  %v430 = vpack.c.b16 %v393, %v392
  %v431 = vpack.c.b16 %v395, %v394
  %v432 = vpack.c.b16 %v397, %v396
  %v433 = vpack.c.b16 %v399, %v398
  %v434 = vpack.c.b16 %v401, %v400
  %v435 = vpack.c.b16 %v403, %v402
  %v436 = vpack.c.b16 %v405, %v404
  %v437 = vpack.c.b16 %v407, %v406
  %v438 = vpack.c.b16 %v409, %v408
  %v439 = vpack.c.b16 %v411, %v410
  %v440 = vpack.c.b16 %v413, %v412
  %v441 = vpack.c.b16 %v415, %v414
  %v442 = vpack.c.b16 %v417, %v416
  %v443 = vpack.c.b16 %v419, %v418
  %468 = vmatpush.bf16.msra.mxu0 %v427
  %469 = vmatpush.bf16.msra.mxu0 %v426
  %470 = vmatpush.bf16.msra.mxu0 %v425
  %471 = vmatpush.bf16.msra.mxu0 %v424
  %472 = vmatpush.bf16.msra.mxu0 %v423
  %473 = vmatpush.bf16.msra.mxu0 %v422
  %474 = vmatpush.bf16.msra.mxu0 %v421
  %475 = vmatpush.bf16.msra.mxu0 %v420
  %476 = vmatmul.bf16.gmra.mxu0 %v318
  %v477 = vpop.f32.mrf.mxu0
  %v478 = vadd.f32 %v311, %v477
  %v479 = vpop.f32.mrf.mxu0
  %480 = vdwg.mxu0
  %481 = vmatpush.bf16.msra.mxu0 %v435
  %482 = vmatpush.bf16.msra.mxu0 %v434
  %483 = vmatpush.bf16.msra.mxu0 %v433
  %484 = vmatpush.bf16.msra.mxu0 %v432
  %485 = vmatpush.bf16.msra.mxu0 %v431
  %486 = vmatpush.bf16.msra.mxu0 %v430
  %487 = vmatpush.bf16.msra.mxu0 %v429
  %488 = vmatpush.bf16.msra.mxu0 %v428
  %489 = vmatmul.bf16.gmra.mxu0 %v319
  %v490 = vpop.f32.mrf.mxu0
  %v491 = vadd.f32 %v478, %v490
  %v492 = vpop.f32.mrf.mxu0
  %493 = vdwg.mxu0
  %494 = vmatpush.bf16.msra.mxu0 %v443
  %495 = vmatpush.bf16.msra.mxu0 %v442
  %496 = vmatpush.bf16.msra.mxu0 %v441
  %497 = vmatpush.bf16.msra.mxu0 %v440
  %498 = vmatpush.bf16.msra.mxu0 %v439
  %499 = vmatpush.bf16.msra.mxu0 %v438
  %500 = vmatpush.bf16.msra.mxu0 %v437
  %501 = vmatpush.bf16.msra.mxu0 %v436
  %502 = vmatmul.bf16.gmra.mxu0 %v320
  %v503 = vpop.f32.mrf.mxu0
  %v504 = vadd.f32 %v491, %v503
  %v505 = vpop.f32.mrf.mxu0
  %506 = vdwg.mxu0
  %v507 = vmul.f32 %v504, 0.5
  %v508 = vmul.f32 %v504, 0.044715
  %v509 = vmul.f32 %v508, %v504
  %v510 = vmul.f32 %v509, %v504
  %v511 = vadd.f32 %v504, %v510
  %v512 = vmul.f32 %v511, 0.7978846
  %v513 = vtanh.pop %v512
  %v514 = vadd.f32 %v513, 1.0
  %v515 = vmul.f32 %v507, %v514
  %v516 = vpack.c.bf16 %v515, %v515
  %v517 = vld [vmem:[%s5] sm:$0xff]
  %v518 = vld [vmem:[%s5 + $0x8] sm:$0xff]
  %v519 = vld [vmem:[%s5 + $0x10] sm:$0xff]
  %v520 = vld [vmem:[%s5 + $0x18] sm:$0xff]
  %v521 = vld [vmem:[%s5 + $0x20] sm:$0xff]
  %v522 = vld [vmem:[%s5 + $0x28] sm:$0xff]
  %v523 = vld [vmem:[%s5 + $0x30] sm:$0xff]
  %v524 = vld [vmem:[%s5 + $0x38] sm:$0xff]
  %v525 = vld [vmem:[%s5 + $0x40] sm:$0xff]
  %v526 = vld [vmem:[%s5 + $0x48] sm:$0xff]
  %v527 = vld [vmem:[%s5 + $0x50] sm:$0xff]
  %v528 = vld [vmem:[%s5 + $0x58] sm:$0xff]
  %v529 = vld [vmem:[%s5 + $0x60] sm:$0xff]
  %v530 = vld [vmem:[%s5 + $0x68] sm:$0xff]
  %v531 = vld [vmem:[%s5 + $0x70] sm:$0xff]
  %v532 = vld [vmem:[%s5 + $0x78] sm:$0xff]
  %v533 = vld [vmem:[%s6] sm:$0x3]
  %v535 = vperm.slane %v533, 0
  %v536 = vperm.slane %v533, 1
  %v555 = vunpack.c.l.b16 %v517
  %v556 = vunpack.c.h.b16 %v517
  %v557 = vunpack.c.l.b16 %v518
  %v558 = vunpack.c.h.b16 %v518
  %v559 = vunpack.c.l.b16 %v519
  %v560 = vunpack.c.h.b16 %v519
  %v561 = vunpack.c.l.b16 %v520
  %v562 = vunpack.c.h.b16 %v520
  %v563 = vunpack.c.l.b16 %v521
  %v564 = vunpack.c.h.b16 %v521
  %v565 = vunpack.c.l.b16 %v522
  %v566 = vunpack.c.h.b16 %v522
  %v567 = vunpack.c.l.b16 %v523
  %v568 = vunpack.c.h.b16 %v523
  %v569 = vunpack.c.l.b16 %v524
  %v570 = vunpack.c.h.b16 %v524
  %v571 = vunpack.c.l.b16 %v525
  %v572 = vunpack.c.h.b16 %v525
  %v573 = vunpack.c.l.b16 %v526
  %v574 = vunpack.c.h.b16 %v526
  %v575 = vunpack.c.l.b16 %v527
  %v576 = vunpack.c.h.b16 %v527
  %v577 = vunpack.c.l.b16 %v528
  %v578 = vunpack.c.h.b16 %v528
  %v579 = vunpack.c.l.b16 %v529
  %v580 = vunpack.c.h.b16 %v529
  %v581 = vunpack.c.l.b16 %v530
  %v582 = vunpack.c.h.b16 %v530
  %v583 = vunpack.c.l.b16 %v531
  %v584 = vunpack.c.h.b16 %v531
  %v585 = vunpack.c.l.b16 %v532
  %v586 = vunpack.c.h.b16 %v532
  %v587 = vpack.c.b16 %v557, %v555
  %v588 = vpack.c.b16 %v558, %v556
  %v589 = vpack.c.b16 %v561, %v559
  %v590 = vpack.c.b16 %v562, %v560
  %v591 = vpack.c.b16 %v565, %v563
  %v592 = vpack.c.b16 %v566, %v564
  %v593 = vpack.c.b16 %v569, %v567
  %v594 = vpack.c.b16 %v570, %v568
  %v595 = vpack.c.b16 %v573, %v571
  %v596 = vpack.c.b16 %v574, %v572
  %v597 = vpack.c.b16 %v577, %v575
  %v598 = vpack.c.b16 %v578, %v576
  %v599 = vpack.c.b16 %v581, %v579
  %v600 = vpack.c.b16 %v582, %v580
  %v601 = vpack.c.b16 %v585, %v583
  %v602 = vpack.c.b16 %v586, %v584
  %619 = vmatpush.bf16.msra.mxu0 %v601
  %620 = vmatpush.bf16.msra.mxu0 %v599
  %621 = vmatpush.bf16.msra.mxu0 %v597
  %622 = vmatpush.bf16.msra.mxu0 %v595
  %623 = vmatpush.bf16.msra.mxu0 %v593
  %624 = vmatpush.bf16.msra.mxu0 %v591
  %625 = vmatpush.bf16.msra.mxu0 %v589
  %626 = vmatpush.bf16.msra.mxu0 %v587
  %627 = vmatmul.bf16.gmra.mxu0 %v516
  %v628 = vpop.f32.mrf.mxu0
  %v629 = vadd.f32 %v535, %v628
  %v630 = vpop.f32.mrf.mxu0
  %631 = vdwg.mxu0
  %632 = vmatpush.bf16.msra.mxu0 %v602
  %633 = vmatpush.bf16.msra.mxu0 %v600
  %634 = vmatpush.bf16.msra.mxu0 %v598
  %635 = vmatpush.bf16.msra.mxu0 %v596
  %636 = vmatpush.bf16.msra.mxu0 %v594
  %637 = vmatpush.bf16.msra.mxu0 %v592
  %638 = vmatpush.bf16.msra.mxu0 %v590
  %639 = vmatpush.bf16.msra.mxu0 %v588
  %640 = vmatmul.bf16.gmra.mxu0 %v516
  %v641 = vpop.f32.mrf.mxu0
  %v642 = vadd.f32 %v536, %v641
  %v643 = vpop.f32.mrf.mxu0
  %644 = vdwg.mxu0
  %v645 = vld [vmem:[%s8] sm:$0x1]
  %v646 = vld [vmem:[%s10] sm:$0x1]
  %v648 = vperm.slane %v645, 0
  %v650 = vadd.f32 %v629, %v648
  %v651 = vsub.f32 0.0, %v650
  %v652 = vmul.f32 %v651, 1.442695
  %v653 = vpow.pop %v652
  %v654 = vadd.f32 %v653, 1.0
  %v655 = vrcp.pop %v654
  %656 = vrot.lane.b32.xlu0 %v648, 64
  %v657 = vpop.permute.xlu0 %656
  %v659 = vmul.f32 %v655, %v657
  %661 = vrot.lane.b32.xlu0 %v659, 64
  %v662 = vpop.permute.xlu0 %661
  %v664 = vadd.f32 %v629, %v662
  %v665 = vtanh.pop %v664
  %v666 = vsub.f32 1.0, %v655
  %668 = vrot.lane.b32.xlu0 %v665, 96
  %v669 = vpop.permute.xlu0 %668
  %v671 = vmul.f32 %v666, %v669
  %v672 = vmul.f32 %v655, 0.0
  %v673 = vadd.f32 %v671, %v672
  %v675 = vperm.slane %v646, 0
  %v677 = vadd.f32 %v642, %v675
  %v678 = vsub.f32 0.0, %v677
  %v679 = vmul.f32 %v678, 1.442695
  %v680 = vpow.pop %v679
  %v681 = vadd.f32 %v680, 1.0
  %v682 = vrcp.pop %v681
  %683 = vrot.lane.b32.xlu0 %v675, 64
  %v684 = vpop.permute.xlu0 %683
  %v686 = vmul.f32 %v682, %v684
  %688 = vrot.lane.b32.xlu0 %v686, 64
  %v689 = vpop.permute.xlu0 %688
  %v691 = vadd.f32 %v642, %v689
  %v692 = vtanh.pop %v691
  %v693 = vsub.f32 1.0, %v682
  %695 = vrot.lane.b32.xlu0 %v692, 96
  %v696 = vpop.permute.xlu0 %695
  %v698 = vmul.f32 %v693, %v696
  %v699 = vmul.f32 %v682, 0.0
  %v700 = vadd.f32 %v698, %v699
  %702 = vrot.lane.b32.xlu0 %v673, 96
  %v703 = vpop.permute.xlu0 %702
  %vm705 = vcmask 254976
  %706 = vst.msk [vmem:[#allocation3] sm:$0x3] %vm705, %v703
  %708 = vrot.lane.b32.xlu0 %v700, 96
  %v709 = vpop.permute.xlu0 %708
  %vm711 = vcmask 261126
  %712 = vst.msk [vmem:[#allocation4] sm:$0xc0] %vm711, %v709
  %v713 = vpack.c.bf16 %v673, %v673
  %v714 = vld [vmem:[%s7] sm:$0xf]
  %v715 = vld [vmem:[%s7 + $0x4] sm:$0xf]
  %v716 = vld [vmem:[%s7 + $0x8] sm:$0xf]
  %v717 = vld [vmem:[%s7 + $0xc] sm:$0xf]
  %v718 = vld [vmem:[%s8] sm:$0x1]
  %v720 = vperm.slane %v718, 0
  %723 = vrot.lane.b32.xlu0 %v713, 96
  %v724 = vpop.permute.xlu0 %723
  %v729 = vunpack.c.l.b16 %v714
  %v730 = vunpack.c.l.b16 %v715
  %v731 = vunpack.c.l.b16 %v716
  %v732 = vunpack.c.l.b16 %v717
  %v733 = vpack.c.b16 %v730, %v729
  %v734 = vpack.c.b16 %v732, %v731
  %vm737 = vcmask 261120
  %v739 = vsel %vm737, %v724, 0
  %741 = vmatpush.bf16.msra.mxu0 0
  %742 = vmatpush.bf16.msra.mxu0 0
  %743 = vmatpush.bf16.msra.mxu0 0
  %744 = vmatpush.bf16.msra.mxu0 0
  %745 = vmatpush.bf16.msra.mxu0 0
  %746 = vmatpush.bf16.msra.mxu0 0
  %747 = vmatpush.bf16.msra.mxu0 %v734
  %748 = vmatpush.bf16.msra.mxu0 %v733
  %749 = vmatmul.bf16.gmra.mxu0 %v739
  %v750 = vpop.f32.mrf.mxu0
  %v751 = vadd.f32 %v720, %v750
  %v752 = vpop.f32.mrf.mxu0
  %753 = vdwg.mxu0
  %v754 = vpack.c.bf16 %v700, %v700
  %v755 = vld [vmem:[%s9] sm:$0xf]
  %v756 = vld [vmem:[%s9 + $0x4] sm:$0xf]
  %v757 = vld [vmem:[%s9 + $0x8] sm:$0xf]
  %v758 = vld [vmem:[%s9 + $0xc] sm:$0xf]
  %v759 = vld [vmem:[%s10] sm:$0x1]
  %v761 = vperm.slane %v759, 0
  %v764 = vrot.slane %v754, 3
  %765 = vrot.lane.b32.xlu0 %v764, 96
  %v766 = vpop.permute.xlu0 %765
  %v771 = vunpack.c.l.b16 %v755
  %v772 = vunpack.c.l.b16 %v756
  %v773 = vunpack.c.l.b16 %v757
  %v774 = vunpack.c.l.b16 %v758
  %v775 = vpack.c.b16 %v772, %v771
  %v776 = vpack.c.b16 %v774, %v773
  %v780 = vsel %vm737, %v766, 0
  %782 = vmatpush.bf16.msra.mxu0 0
  %783 = vmatpush.bf16.msra.mxu0 0
  %784 = vmatpush.bf16.msra.mxu0 0
  %785 = vmatpush.bf16.msra.mxu0 0
  %786 = vmatpush.bf16.msra.mxu0 0
  %787 = vmatpush.bf16.msra.mxu0 0
  %788 = vmatpush.bf16.msra.mxu0 %v776
  %789 = vmatpush.bf16.msra.mxu0 %v775
  %790 = vmatmul.bf16.gmra.mxu0 %v780
  %v791 = vpop.f32.mrf.mxu0
  %v792 = vadd.f32 %v761, %v791
  %v793 = vpop.f32.mrf.mxu0
  %794 = vdwg.mxu0
  %v796 = vrot.slane %v751, 6
  %v798 = vadd.f32 %v629, %v796
  %v799 = vsub.f32 0.0, %v798
  %v800 = vmul.f32 %v799, 1.442695
  %v801 = vpow.pop %v800
  %v802 = vadd.f32 %v801, 1.0
  %v803 = vrcp.pop %v802
  %804 = vrot.lane.b32.xlu0 %v796, 64
  %v805 = vpop.permute.xlu0 %804
  %v807 = vmul.f32 %v803, %v805
  %809 = vrot.lane.b32.xlu0 %v807, 64
  %v810 = vpop.permute.xlu0 %809
  %v812 = vadd.f32 %v629, %v810
  %v813 = vtanh.pop %v812
  %v814 = vsub.f32 1.0, %v803
  %816 = vrot.lane.b32.xlu0 %v813, 96
  %v817 = vpop.permute.xlu0 %816
  %v819 = vmul.f32 %v814, %v817
  %v820 = vrot.slane %v673, 6
  %v822 = vmul.f32 %v803, %v820
  %v823 = vadd.f32 %v819, %v822
  %v825 = vrot.slane %v792, 4
  %v827 = vadd.f32 %v642, %v825
  %v828 = vsub.f32 0.0, %v827
  %v829 = vmul.f32 %v828, 1.442695
  %v830 = vpow.pop %v829
  %v831 = vadd.f32 %v830, 1.0
  %v832 = vrcp.pop %v831
  %833 = vrot.lane.b32.xlu0 %v825, 64
  %v834 = vpop.permute.xlu0 %833
  %v836 = vmul.f32 %v832, %v834
  %838 = vrot.lane.b32.xlu0 %v836, 64
  %v839 = vpop.permute.xlu0 %838
  %v841 = vadd.f32 %v642, %v839
  %v842 = vtanh.pop %v841
  %v843 = vsub.f32 1.0, %v832
  %845 = vrot.lane.b32.xlu0 %v842, 96
  %v846 = vpop.permute.xlu0 %845
  %v848 = vmul.f32 %v843, %v846
  %v849 = vrot.slane %v700, 2
  %v851 = vmul.f32 %v832, %v849
  %v852 = vadd.f32 %v848, %v851
  %854 = vrot.lane.b32.xlu0 %v823, 96
  %v855 = vpop.permute.xlu0 %854
  %vm857 = vcmask 257026
  %858 = vst.msk [vmem:[#allocation3] sm:$0xc] %vm857, %v855
  %860 = vrot.lane.b32.xlu0 %v852, 96
  %v861 = vpop.permute.xlu0 %860
  %vm863 = vcmask 259076
  %864 = vst.msk [vmem:[#allocation4] sm:$0x30] %vm863, %v861
  %v865 = vpack.c.bf16 %v823, %v823
  %v866 = vld [vmem:[%s7] sm:$0xf]
  %v867 = vld [vmem:[%s7 + $0x4] sm:$0xf]
  %v868 = vld [vmem:[%s7 + $0x8] sm:$0xf]
  %v869 = vld [vmem:[%s7 + $0xc] sm:$0xf]
  %v870 = vld [vmem:[%s8] sm:$0x1]
  %v872 = vperm.slane %v870, 0
  %v875 = vrot.slane %v865, 1
  %876 = vrot.lane.b32.xlu0 %v875, 96
  %v877 = vpop.permute.xlu0 %876
  %v882 = vunpack.c.l.b16 %v866
  %v883 = vunpack.c.l.b16 %v867
  %v884 = vunpack.c.l.b16 %v868
  %v885 = vunpack.c.l.b16 %v869
  %v886 = vpack.c.b16 %v883, %v882
  %v887 = vpack.c.b16 %v885, %v884
  %v891 = vsel %vm737, %v877, 0
  %893 = vmatpush.bf16.msra.mxu0 0
  %894 = vmatpush.bf16.msra.mxu0 0
  %895 = vmatpush.bf16.msra.mxu0 0
  %896 = vmatpush.bf16.msra.mxu0 0
  %897 = vmatpush.bf16.msra.mxu0 0
  %898 = vmatpush.bf16.msra.mxu0 0
  %899 = vmatpush.bf16.msra.mxu0 %v887
  %900 = vmatpush.bf16.msra.mxu0 %v886
  %901 = vmatmul.bf16.gmra.mxu0 %v891
  %v902 = vpop.f32.mrf.mxu0
  %v903 = vadd.f32 %v872, %v902
  %v904 = vpop.f32.mrf.mxu0
  %905 = vdwg.mxu0
  %v906 = vpack.c.bf16 %v852, %v852
  %v907 = vld [vmem:[%s9] sm:$0xf]
  %v908 = vld [vmem:[%s9 + $0x4] sm:$0xf]
  %v909 = vld [vmem:[%s9 + $0x8] sm:$0xf]
  %v910 = vld [vmem:[%s9 + $0xc] sm:$0xf]
  %v911 = vld [vmem:[%s10] sm:$0x1]
  %v913 = vperm.slane %v911, 0
  %v916 = vrot.slane %v906, 2
  %917 = vrot.lane.b32.xlu0 %v916, 96
  %v918 = vpop.permute.xlu0 %917
  %v923 = vunpack.c.l.b16 %v907
  %v924 = vunpack.c.l.b16 %v908
  %v925 = vunpack.c.l.b16 %v909
  %v926 = vunpack.c.l.b16 %v910
  %v927 = vpack.c.b16 %v924, %v923
  %v928 = vpack.c.b16 %v926, %v925
  %v932 = vsel %vm737, %v918, 0
  %934 = vmatpush.bf16.msra.mxu0 0
  %935 = vmatpush.bf16.msra.mxu0 0
  %936 = vmatpush.bf16.msra.mxu0 0
  %937 = vmatpush.bf16.msra.mxu0 0
  %938 = vmatpush.bf16.msra.mxu0 0
  %939 = vmatpush.bf16.msra.mxu0 0
  %940 = vmatpush.bf16.msra.mxu0 %v928
  %941 = vmatpush.bf16.msra.mxu0 %v927
  %942 = vmatmul.bf16.gmra.mxu0 %v932
  %v943 = vpop.f32.mrf.mxu0
  %v944 = vadd.f32 %v913, %v943
  %v945 = vpop.f32.mrf.mxu0
  %946 = vdwg.mxu0
  %v948 = vrot.slane %v903, 4
  %v950 = vadd.f32 %v629, %v948
  %v951 = vsub.f32 0.0, %v950
  %v952 = vmul.f32 %v951, 1.442695
  %v953 = vpow.pop %v952
  %v954 = vadd.f32 %v953, 1.0
  %v955 = vrcp.pop %v954
  %956 = vrot.lane.b32.xlu0 %v948, 64
  %v957 = vpop.permute.xlu0 %956
  %v959 = vmul.f32 %v955, %v957
  %961 = vrot.lane.b32.xlu0 %v959, 64
  %v962 = vpop.permute.xlu0 %961
  %v964 = vadd.f32 %v629, %v962
  %v965 = vtanh.pop %v964
  %v966 = vsub.f32 1.0, %v955
  %968 = vrot.lane.b32.xlu0 %v965, 96
  %v969 = vpop.permute.xlu0 %968
  %v971 = vmul.f32 %v966, %v969
  %v972 = vrot.slane %v823, 6
  %v974 = vmul.f32 %v955, %v972
  %v975 = vadd.f32 %v971, %v974
  %v977 = vrot.slane %v944, 6
  %v979 = vadd.f32 %v642, %v977
  %v980 = vsub.f32 0.0, %v979
  %v981 = vmul.f32 %v980, 1.442695
  %v982 = vpow.pop %v981
  %v983 = vadd.f32 %v982, 1.0
  %v984 = vrcp.pop %v983
  %985 = vrot.lane.b32.xlu0 %v977, 64
  %v986 = vpop.permute.xlu0 %985
  %v988 = vmul.f32 %v984, %v986
  %990 = vrot.lane.b32.xlu0 %v988, 64
  %v991 = vpop.permute.xlu0 %990
  %v993 = vadd.f32 %v642, %v991
  %v994 = vtanh.pop %v993
  %v995 = vsub.f32 1.0, %v984
  %997 = vrot.lane.b32.xlu0 %v994, 96
  %v998 = vpop.permute.xlu0 %997
  %v1000 = vmul.f32 %v995, %v998
  %v1001 = vrot.slane %v852, 2
  %v1003 = vmul.f32 %v984, %v1001
  %v1004 = vadd.f32 %v1000, %v1003
  %1006 = vrot.lane.b32.xlu0 %v975, 96
  %v1007 = vpop.permute.xlu0 %1006
  %1009 = vst.msk [vmem:[#allocation3] sm:$0x30] %vm863, %v1007
  %1011 = vrot.lane.b32.xlu0 %v1004, 96
  %v1012 = vpop.permute.xlu0 %1011
  %1014 = vst.msk [vmem:[#allocation4] sm:$0xc] %vm857, %v1012
  %v1015 = vpack.c.bf16 %v975, %v975
  %v1016 = vld [vmem:[%s7] sm:$0xf]
  %v1017 = vld [vmem:[%s7 + $0x4] sm:$0xf]
  %v1018 = vld [vmem:[%s7 + $0x8] sm:$0xf]
  %v1019 = vld [vmem:[%s7 + $0xc] sm:$0xf]
  %v1020 = vld [vmem:[%s8] sm:$0x1]
  %v1022 = vperm.slane %v1020, 0
  %v1025 = vrot.slane %v1015, 2
  %1026 = vrot.lane.b32.xlu0 %v1025, 96
  %v1027 = vpop.permute.xlu0 %1026
  %v1032 = vunpack.c.l.b16 %v1016
  %v1033 = vunpack.c.l.b16 %v1017
  %v1034 = vunpack.c.l.b16 %v1018
  %v1035 = vunpack.c.l.b16 %v1019
  %v1036 = vpack.c.b16 %v1033, %v1032
  %v1037 = vpack.c.b16 %v1035, %v1034
  %v1041 = vsel %vm737, %v1027, 0
  %1043 = vmatpush.bf16.msra.mxu0 0
  %1044 = vmatpush.bf16.msra.mxu0 0
  %1045 = vmatpush.bf16.msra.mxu0 0
  %1046 = vmatpush.bf16.msra.mxu0 0
  %1047 = vmatpush.bf16.msra.mxu0 0
  %1048 = vmatpush.bf16.msra.mxu0 0
  %1049 = vmatpush.bf16.msra.mxu0 %v1037
  %1050 = vmatpush.bf16.msra.mxu0 %v1036
  %1051 = vmatmul.bf16.gmra.mxu0 %v1041
  %v1052 = vpop.f32.mrf.mxu0
  %v1053 = vadd.f32 %v1022, %v1052
  %v1054 = vpop.f32.mrf.mxu0
  %1055 = vdwg.mxu0
  %v1056 = vpack.c.bf16 %v1004, %v1004
  %v1057 = vld [vmem:[%s9] sm:$0xf]
  %v1058 = vld [vmem:[%s9 + $0x4] sm:$0xf]
  %v1059 = vld [vmem:[%s9 + $0x8] sm:$0xf]
  %v1060 = vld [vmem:[%s9 + $0xc] sm:$0xf]
  %v1061 = vld [vmem:[%s10] sm:$0x1]
  %v1063 = vperm.slane %v1061, 0
  %v1066 = vrot.slane %v1056, 1
  %1067 = vrot.lane.b32.xlu0 %v1066, 96
  %v1068 = vpop.permute.xlu0 %1067
  %v1073 = vunpack.c.l.b16 %v1057
  %v1074 = vunpack.c.l.b16 %v1058
  %v1075 = vunpack.c.l.b16 %v1059
  %v1076 = vunpack.c.l.b16 %v1060
  %v1077 = vpack.c.b16 %v1074, %v1073
  %v1078 = vpack.c.b16 %v1076, %v1075
  %v1082 = vsel %vm737, %v1068, 0
  %1084 = vmatpush.bf16.msra.mxu0 0
  %1085 = vmatpush.bf16.msra.mxu0 0
  %1086 = vmatpush.bf16.msra.mxu0 0
  %1087 = vmatpush.bf16.msra.mxu0 0
  %1088 = vmatpush.bf16.msra.mxu0 0
  %1089 = vmatpush.bf16.msra.mxu0 0
  %1090 = vmatpush.bf16.msra.mxu0 %v1078
  %1091 = vmatpush.bf16.msra.mxu0 %v1077
  %1092 = vmatmul.bf16.gmra.mxu0 %v1082
  %v1093 = vpop.f32.mrf.mxu0
  %v1094 = vadd.f32 %v1063, %v1093
  %v1095 = vpop.f32.mrf.mxu0
  %1096 = vdwg.mxu0
  %v1098 = vrot.slane %v1053, 2
  %v1100 = vadd.f32 %v629, %v1098
  %v1101 = vsub.f32 0.0, %v1100
  %v1102 = vmul.f32 %v1101, 1.442695
  %v1103 = vpow.pop %v1102
  %v1104 = vadd.f32 %v1103, 1.0
  %v1105 = vrcp.pop %v1104
  %1106 = vrot.lane.b32.xlu0 %v1098, 64
  %v1107 = vpop.permute.xlu0 %1106
  %v1109 = vmul.f32 %v1105, %v1107
  %1111 = vrot.lane.b32.xlu0 %v1109, 64
  %v1112 = vpop.permute.xlu0 %1111
  %v1114 = vadd.f32 %v629, %v1112
  %v1115 = vtanh.pop %v1114
  %v1116 = vsub.f32 1.0, %v1105
  %1118 = vrot.lane.b32.xlu0 %v1115, 96
  %v1119 = vpop.permute.xlu0 %1118
  %v1121 = vmul.f32 %v1116, %v1119
  %v1122 = vrot.slane %v975, 6
  %v1124 = vmul.f32 %v1105, %v1122
  %v1125 = vadd.f32 %v1121, %v1124
  %v1126 = vadd.f32 %v642, %v1094
  %v1127 = vsub.f32 0.0, %v1126
  %v1128 = vmul.f32 %v1127, 1.442695
  %v1129 = vpow.pop %v1128
  %v1130 = vadd.f32 %v1129, 1.0
  %v1131 = vrcp.pop %v1130
  %1133 = vrot.lane.b32.xlu0 %v1094, 64
  %v1134 = vpop.permute.xlu0 %1133
  %v1136 = vmul.f32 %v1131, %v1134
  %1138 = vrot.lane.b32.xlu0 %v1136, 64
  %v1139 = vpop.permute.xlu0 %1138
  %v1141 = vadd.f32 %v642, %v1139
  %v1142 = vtanh.pop %v1141
  %v1143 = vsub.f32 1.0, %v1131
  %1145 = vrot.lane.b32.xlu0 %v1142, 96
  %v1146 = vpop.permute.xlu0 %1145
  %v1148 = vmul.f32 %v1143, %v1146
  %v1149 = vrot.slane %v1004, 2
  %v1151 = vmul.f32 %v1131, %v1149
  %v1152 = vadd.f32 %v1148, %v1151
  %1154 = vrot.lane.b32.xlu0 %v1125, 96
  %v1155 = vpop.permute.xlu0 %1154
  %1157 = vst.msk [vmem:[#allocation3] sm:$0xc0] %vm711, %v1155
  %1159 = vrot.lane.b32.xlu0 %v1152, 96
  %v1160 = vpop.permute.xlu0 %1159
  %1162 = vst.msk [vmem:[#allocation4] sm:$0x3] %vm705, %v1160
  %v1163 = vld [vmem:[#allocation3] sm:$0xff]
  %v1164 = vld [vmem:[#allocation4] sm:$0xff]
  %v1165 = vadd.f32 %v1163, %v515
  %1167 = vrot.lane.b32.xlu0 %v515, 96
  %v1168 = vpop.permute.xlu0 %1167
  %v1170 = vadd.f32 %v1164, %v1168
  %v1171 = vpack.c.bf16 %v1165, %v1165
  %v1172 = vld [vmem:[%s11] sm:$0xf]
  %v1173 = vld [vmem:[%s11 + $0x4] sm:$0xf]
  %v1174 = vld [vmem:[%s11 + $0x8] sm:$0xf]
  %v1175 = vld [vmem:[%s11 + $0xc] sm:$0xf]
  %v1176 = vpack.c.bf16 %v1170, %v1170
  %v1177 = vld [vmem:[%s12] sm:$0xf]
  %v1178 = vld [vmem:[%s12 + $0x4] sm:$0xf]
  %v1179 = vld [vmem:[%s12 + $0x8] sm:$0xf]
  %v1180 = vld [vmem:[%s12 + $0xc] sm:$0xf]
  %v1185 = vunpack.c.l.b16 %v1177
  %v1186 = vunpack.c.l.b16 %v1178
  %v1187 = vunpack.c.l.b16 %v1179
  %v1188 = vunpack.c.l.b16 %v1180
  %v1189 = vpack.c.b16 %v1186, %v1185
  %v1190 = vpack.c.b16 %v1188, %v1187
  %v1194 = vsel %vm737, %v1176, 0
  %1196 = vmatpush.bf16.msra.mxu0 0
  %1197 = vmatpush.bf16.msra.mxu0 0
  %1198 = vmatpush.bf16.msra.mxu0 0
  %1199 = vmatpush.bf16.msra.mxu0 0
  %1200 = vmatpush.bf16.msra.mxu0 0
  %1201 = vmatpush.bf16.msra.mxu0 0
  %1202 = vmatpush.bf16.msra.mxu0 %v1190
  %1203 = vmatpush.bf16.msra.mxu0 %v1189
  %1204 = vmatmul.bf16.gmra.mxu0 %v1194
  %v1205 = vpop.f32.mrf.mxu0
  %v1206 = vadd.f32 0.0, %v1205
  %v1207 = vpop.f32.mrf.mxu0
  %1208 = vdwg.mxu0
  %v1213 = vunpack.c.l.b16 %v1172
  %v1214 = vunpack.c.l.b16 %v1173
  %v1215 = vunpack.c.l.b16 %v1174
  %v1216 = vunpack.c.l.b16 %v1175
  %v1217 = vpack.c.b16 %v1214, %v1213
  %v1218 = vpack.c.b16 %v1216, %v1215
  %v1222 = vsel %vm737, %v1171, 0
  %1224 = vmatpush.bf16.msra.mxu0 0
  %1225 = vmatpush.bf16.msra.mxu0 0
  %1226 = vmatpush.bf16.msra.mxu0 0
  %1227 = vmatpush.bf16.msra.mxu0 0
  %1228 = vmatpush.bf16.msra.mxu0 0
  %1229 = vmatpush.bf16.msra.mxu0 0
  %1230 = vmatpush.bf16.msra.mxu0 %v1218
  %1231 = vmatpush.bf16.msra.mxu0 %v1217
  %1232 = vmatmul.bf16.gmra.mxu0 %v1222
  %v1233 = vpop.f32.mrf.mxu0
  %v1234 = vadd.f32 %v1206, %v1233
  %v1235 = vpop.f32.mrf.mxu0
  %1236 = vdwg.mxu0
  %v1237 = vld [vmem:[%s13] sm:$0x1]
  %v1239 = vperm.slane %v1237, 0
  %v1241 = vadd.f32 %v1234, %v1239
  %v1242 = vmul.f32 %v1241, 0.5
  %v1243 = vmul.f32 %v1241, 0.044715
  %v1244 = vmul.f32 %v1243, %v1241
  %v1245 = vmul.f32 %v1244, %v1241
  %v1246 = vadd.f32 %v1241, %v1245
  %v1247 = vmul.f32 %v1246, 0.7978846
  %v1248 = vtanh.pop %v1247
  %v1249 = vadd.f32 %v1248, 1.0
  %v1250 = vmul.f32 %v1242, %v1249
  %v1252 = vrot.slane %v1250, 2
  %v1254 = vadd.f32 %v1250, %v1252
  %v1255 = vrot.slane %v1250, 4
  %v1257 = vadd.f32 %v1254, %v1255
  %v1258 = vrot.slane %v1250, 6
  %v1260 = vadd.f32 %v1257, %v1258
  %v1261 = vmul.f32 %v1260, 0.25
  %1262 = vst [vmem:[%s14] sm:$0x3] %v1261
  // Predicated region
  $region58: #{avg_modal_model.3} parent=0 // pred_check
    _
  $region59: #{avg_modal_model.3} parent=0 // pred_check_branch
    %1264 = sbr.rel (0) target = $region61
  $region60: #{avg_modal_model.3} parent=0 // pred_region
    _
  $region61: #{avg_modal_model.3} parent=0 // pred_fallthru
    _
  // Predicated region
  $region62: #{avg_modal_model.3} parent=0 // pred_check
    _
  $region63: #{avg_modal_model.3} parent=0 // pred_check_branch
    %1266 = sbr.rel (0) target = $region65
  $region64: #{avg_modal_model.3} parent=0 // pred_region
    _
  $region65: #{avg_modal_model.3} parent=0 // pred_fallthru
    _

</llo_original>
